<compile_context>
chip_gen: v6e
topology: v6e:2x2x1
jax: 0.10.0
libtpu: 0.0.40
codegen_flags: <defaults>
</compile_context>

<pallas_src>
import math
from functools import partial

import jax
import jax.numpy as jnp
import numpy as np
from jax.experimental import pallas as pl
from jax.experimental.pallas import tpu as pltpu

HID_DIM = 256
N_HEADS = 8
PF_DIM = 1024
DEPTH = HID_DIM // N_HEADS
LN_EPS = 1e-5
VMEM_LIMIT = 32 * 1024 * 1024  # safe scoped-VMEM budget on v5e / v6e / v7x


def _pick_row_tile(n_rows: int, max_tile: int = 512) -> int:
    """Largest row tile <= max_tile that divides n_rows (tiles are (tm, H))."""
    if n_rows <= max_tile:
        return n_rows
    for tm in (512, 256, 128, 64, 32, 16, 8):
        if n_rows % tm == 0:
            return tm
    return n_rows  # full extent fallback (always legal)


def _layernorm(x, gamma, beta):
    mean = jnp.mean(x, axis=-1, keepdims=True)
    xc = x - mean
    var = jnp.mean(xc * xc, axis=-1, keepdims=True)
    inv = jax.lax.rsqrt(var + LN_EPS)
    return xc * inv * gamma + beta


# -----------------------------------------------------------------------------
# Kernel 1: fused Q/K/V projections on the flattened (B*S, H) activations.
# -----------------------------------------------------------------------------
def _qkv_kernel(x_ref, wq_ref, wk_ref, wv_ref, bq_ref, bk_ref, bv_ref,
                q_ref, k_ref, v_ref):
    x = x_ref[...]
    q_ref[...] = jnp.dot(x, wq_ref[...], preferred_element_type=jnp.float32) + bq_ref[...]
    k_ref[...] = jnp.dot(x, wk_ref[...], preferred_element_type=jnp.float32) + bk_ref[...]
    v_ref[...] = jnp.dot(x, wv_ref[...], preferred_element_type=jnp.float32) + bv_ref[...]


def _qkv_proj(x2d, p):
    n, h = x2d.shape
    tm = _pick_row_tile(n)
    row_spec = pl.BlockSpec((tm, h), lambda i: (i, 0))
    w_spec = pl.BlockSpec((h, h), lambda i: (0, 0))   # constant block index -> no re-DMA per step
    b_spec = pl.BlockSpec((1, h), lambda i: (0, 0))
    return pl.pallas_call(
        _qkv_kernel,
        out_shape=tuple(jax.ShapeDtypeStruct((n, h), jnp.float32) for _ in range(3)),
        grid_spec=pltpu.PrefetchScalarGridSpec(
            num_scalar_prefetch=0,
            grid=(n // tm,),
            in_specs=[row_spec, w_spec, w_spec, w_spec, b_spec, b_spec, b_spec],
            out_specs=[row_spec, row_spec, row_spec],
        ),
        compiler_params=pltpu.CompilerParams(
            dimension_semantics=("parallel",),
            vmem_limit_bytes=VMEM_LIMIT,
        ),
    )(x2d, p["wq"], p["wk"], p["wv"], p["bq"], p["bk"], p["bv"])


# -----------------------------------------------------------------------------
# Kernel 2: scaled dot-product attention, one (batch, head) pair per grid step.
# -----------------------------------------------------------------------------
def _attn_kernel(q_ref, k_ref, v_ref, m_ref, o_ref, *, scale):
    q = q_ref[0, 0]      # (S, depth)
    k = k_ref[0, 0]      # (S, depth)
    v = v_ref[0, 0]      # (S, depth)
    mask = m_ref[0, 0]   # (1, S)  -- broadcast over query rows, matches PyTorch padding mask

    logits = jnp.einsum("qd,kd->qk", q, k, preferred_element_type=jnp.float32) * scale
    logits = logits + mask * (-1e9)
    logits = logits - jnp.max(logits, axis=-1, keepdims=True)   # stable softmax
    p = jnp.exp(logits)
    p = p / jnp.sum(p, axis=-1, keepdims=True)
    o_ref[0, 0] = jnp.dot(p, v, preferred_element_type=jnp.float32)


def _attention(qh, kh, vh, mask):
    b, nh, s, dp = qh.shape
    scale = 1.0 / math.sqrt(dp)
    head_spec = pl.BlockSpec((1, 1, s, dp), lambda bi, hi: (bi, hi, 0, 0))
    mask_spec = pl.BlockSpec((1, 1, 1, s), lambda bi, hi: (bi, 0, 0, 0))
    return pl.pallas_call(
        partial(_attn_kernel, scale=scale),
        out_shape=jax.ShapeDtypeStruct((b, nh, s, dp), jnp.float32),
        grid_spec=pltpu.PrefetchScalarGridSpec(
            num_scalar_prefetch=0,
            grid=(b, nh),
            in_specs=[head_spec, head_spec, head_spec, mask_spec],
            out_specs=head_spec,
        ),
        compiler_params=pltpu.CompilerParams(
            dimension_semantics=("parallel", "parallel"),
            vmem_limit_bytes=VMEM_LIMIT,
        ),
    )(qh, kh, vh, mask)


# -----------------------------------------------------------------------------
# Kernel 3: out-projection + residual + LayerNorm1 + FFN + residual + LayerNorm2
#           fused into one pass over row tiles (no intermediate HBM traffic).
# -----------------------------------------------------------------------------
def _post_attn_kernel(x_ref, a_ref, wo_ref, bo_ref, g1_ref, be1_ref,
                      w1_ref, b1_ref, w2_ref, b2_ref, g2_ref, be2_ref, o_ref):
    x = x_ref[...]
    attn = a_ref[...]
    proj = jnp.dot(attn, wo_ref[...], preferred_element_type=jnp.float32) + bo_ref[...]
    h = _layernorm(x + proj, g1_ref[...], be1_ref[...])                 # layernorm1(inputs + attn)
    ff = jnp.dot(h, w1_ref[...], preferred_element_type=jnp.float32) + b1_ref[...]
    ff = jnp.maximum(ff, 0.0)                                           # ReLU
    ff = jnp.dot(ff, w2_ref[...], preferred_element_type=jnp.float32) + b2_ref[...]
    o_ref[...] = _layernorm(h + ff, g2_ref[...], be2_ref[...])          # layernorm2(attn + ffn)


def _post_attention(x2d, attn2d, p):
    n, h = x2d.shape
    pf = p["w1"].shape[1]
    tm = _pick_row_tile(n)
    row_spec = pl.BlockSpec((tm, h), lambda i: (i, 0))

    def const(shape):
        return pl.BlockSpec(shape, lambda i: tuple(0 for _ in shape))

    return pl.pallas_call(
        _post_attn_kernel,
        out_shape=jax.ShapeDtypeStruct((n, h), jnp.float32),
        grid_spec=pltpu.PrefetchScalarGridSpec(
            num_scalar_prefetch=0,
            grid=(n // tm,),
            in_specs=[
                row_spec, row_spec,
                const((h, h)), const((1, h)),     # Wo, bo
                const((1, h)), const((1, h)),     # gamma1, beta1
                const((h, pf)), const((1, pf)),   # W1, b1
                const((pf, h)), const((1, h)),    # W2, b2
                const((1, h)), const((1, h)),     # gamma2, beta2
            ],
            out_specs=row_spec,
        ),
        compiler_params=pltpu.CompilerParams(
            dimension_semantics=("parallel",),
            vmem_limit_bytes=VMEM_LIMIT,
        ),
    )(x2d, attn2d, p["wo"], p["bo"], p["g1"], p["be1"],
      p["w1"], p["b1"], p["w2"], p["b2"], p["g2"], p["be2"])


# -----------------------------------------------------------------------------
# Wrapper: full EncoderLayer forward.
# -----------------------------------------------------------------------------
def encoder_layer_forward(x, padding_mask, params):
    b, s, h = x.shape
    nh, dp = N_HEADS, h // N_HEADS
    n = b * s
    x2d = x.reshape(n, h)                                  # lane-dense (rows, 256)

    q2d, k2d, v2d = _qkv_proj(x2d, params)

    def split_heads(t):                                    # layout plumbing (XLA)
        return t.reshape(b, s, nh, dp).transpose(0, 2, 1, 3)

    ctx = _attention(split_heads(q2d), split_heads(k2d), split_heads(v2d), padding_mask)
    ctx2d = ctx.transpose(0, 2, 1, 3).reshape(n, h)        # merge heads

    out2d = _post_attention(x2d, ctx2d, params)
    return out2d.reshape(b, s, h)


def init_params(key, hid_dim=HID_DIM, pf_dim=PF_DIM):
    ks = jax.random.split(key, 16)

    def rnd(k, shape, scale=0.05):
        return scale * jax.random.normal(k, shape, dtype=jnp.float32)

    return {
        "wq": rnd(ks[0], (hid_dim, hid_dim)), "bq": rnd(ks[1], (1, hid_dim)),
        "wk": rnd(ks[2], (hid_dim, hid_dim)), "bk": rnd(ks[3], (1, hid_dim)),
        "wv": rnd(ks[4], (hid_dim, hid_dim)), "bv": rnd(ks[5], (1, hid_dim)),
        "wo": rnd(ks[6], (hid_dim, hid_dim)), "bo": rnd(ks[7], (1, hid_dim)),
        "w1": rnd(ks[8], (hid_dim, pf_dim)),  "b1": rnd(ks[9], (1, pf_dim)),
        "w2": rnd(ks[10], (pf_dim, hid_dim)), "b2": rnd(ks[11], (1, hid_dim)),
        "g1": 1.0 + rnd(ks[12], (1, hid_dim), 0.1), "be1": rnd(ks[13], (1, hid_dim), 0.1),
        "g2": 1.0 + rnd(ks[14], (1, hid_dim), 0.1), "be2": rnd(ks[15], (1, hid_dim), 0.1),
    }


# -----------------------------------------------------------------------------
# Plain numpy (float64) reference of the PyTorch module (eval mode).
# -----------------------------------------------------------------------------
def ref_encoder_layer(x, mask, params):
    f64 = np.float64
    x = np.asarray(x, f64)
    mask = np.asarray(mask, f64)
    p = {k: np.asarray(v, f64) for k, v in params.items()}
    b, s, h = x.shape
    nh, dp = N_HEADS, h // N_HEADS

    def lin(t, w, bias):
        return t @ w + bias

    def ln(t, g, beta):
        mu = t.mean(-1, keepdims=True)
        var = ((t - mu) ** 2).mean(-1, keepdims=True)
        return (t - mu) / np.sqrt(var + LN_EPS) * g + beta

    q, k, v = lin(x, p["wq"], p["bq"]), lin(x, p["wk"], p["bk"]), lin(x, p["wv"], p["bv"])

    def split(t):
        return t.reshape(b, s, nh, dp).transpose(0, 2, 1, 3)

    qh, kh, vh = split(q), split(k), split(v)
    logits = qh @ kh.transpose(0, 1, 3, 2) / math.sqrt(dp)
    logits = logits + mask * (-1e9)
    logits = logits - logits.max(-1, keepdims=True)
    w = np.exp(logits)
    w = w / w.sum(-1, keepdims=True)
    ctx = (w @ vh).transpose(0, 2, 1, 3).reshape(b, s, h)

    attn_out = lin(ctx, p["wo"], p["bo"])
    h1 = ln(x + attn_out, p["g1"], p["be1"])
    ff = np.maximum(lin(h1, p["w1"], p["b1"]), 0.0)
    ff = lin(ff, p["w2"], p["b2"])
    return ln(h1 + ff, p["g2"], p["be2"])


if __name__ == "__main__":
    batch, seq = 2, 8

    key = jax.random.PRNGKey(0)
    k_x, k_p = jax.random.split(key)
    x = jax.random.normal(k_x, (batch, seq, HID_DIM), dtype=jnp.float32)
    params = init_params(k_p)

    # Padding mask broadcastable to (B, n_heads, S_q, S_k); 1.0 marks padded keys.
    valid_lens = jnp.array([seq, seq - 3], dtype=jnp.int32)
    pad = (jnp.arange(seq)[None, :] >= valid_lens[:, None]).astype(jnp.float32)
    padding_mask = pad[:, None, None, :]  # (B, 1, 1, S)

    fwd = jax.jit(encoder_layer_forward)
    out = jax.block_until_ready(fwd(x, padding_mask, params))

    ref = ref_encoder_layer(x, padding_mask, params)
    np.testing.assert_allclose(np.asarray(out), ref, rtol=2e-3, atol=2e-3)

    print("KERNEL_OK")
</pallas_src>

<mosaic_0001>
module attributes {stable_mosaic.version = 11 : i64} {
  func.func @_qkv_kernel(%arg0: i32, %arg1: memref<16x256xf32, #tpu.memory_space<vmem>>, %arg2: memref<256x256xf32, #tpu.memory_space<vmem>>, %arg3: memref<256x256xf32, #tpu.memory_space<vmem>>, %arg4: memref<256x256xf32, #tpu.memory_space<vmem>>, %arg5: memref<1x256xf32, #tpu.memory_space<vmem>>, %arg6: memref<1x256xf32, #tpu.memory_space<vmem>>, %arg7: memref<1x256xf32, #tpu.memory_space<vmem>>, %arg8: memref<16x256xf32, #tpu.memory_space<vmem>>, %arg9: memref<16x256xf32, #tpu.memory_space<vmem>>, %arg10: memref<16x256xf32, #tpu.memory_space<vmem>>) attributes {dimension_semantics = [#tpu.dimension_semantics<parallel>], iteration_bounds = array<i64: 1>, scalar_prefetch = 0 : i64, scratch_operands = 0 : i64, tpu.core_type = #tpu.core_type<tc>, window_params = [{transform_indices = @transform_0, window_bounds = array<i64: 16, 256>}, {pipeline_mode = #tpu.pipeline_mode<synchronous>, transform_indices = @transform_1, window_bounds = array<i64: 256, 256>}, {pipeline_mode = #tpu.pipeline_mode<synchronous>, transform_indices = @transform_2, window_bounds = array<i64: 256, 256>}, {pipeline_mode = #tpu.pipeline_mode<synchronous>, transform_indices = @transform_3, window_bounds = array<i64: 256, 256>}, {pipeline_mode = #tpu.pipeline_mode<synchronous>, transform_indices = @transform_4, window_bounds = array<i64: 1, 256>}, {pipeline_mode = #tpu.pipeline_mode<synchronous>, transform_indices = @transform_5, window_bounds = array<i64: 1, 256>}, {pipeline_mode = #tpu.pipeline_mode<synchronous>, transform_indices = @transform_6, window_bounds = array<i64: 1, 256>}, {transform_indices = @transform_7, window_bounds = array<i64: 16, 256>}, {transform_indices = @transform_8, window_bounds = array<i64: 16, 256>}, {transform_indices = @transform_9, window_bounds = array<i64: 16, 256>}]} {
    %c0 = arith.constant 0 : index
    %c0_0 = arith.constant 0 : index
    %0 = vector.load %arg1[%c0, %c0_0] : memref<16x256xf32, #tpu.memory_space<vmem>>, vector<16x256xf32>
    %c0_1 = arith.constant 0 : index
    %c0_2 = arith.constant 0 : index
    %1 = vector.load %arg2[%c0_1, %c0_2] : memref<256x256xf32, #tpu.memory_space<vmem>>, vector<256x256xf32>
    %cst = arith.constant dense<0.000000e+00> : vector<16x256xf32>
    %2 = tpu.matmul %0, %1, %cst {dimension_numbers = #tpu.dot_dimension_numbers<[1], [0], [0], [1], [0, 0, 1, 1], [], []>} : vector<16x256xf32>, vector<256x256xf32>, vector<16x256xf32> -> vector<16x256xf32>
    %c0_3 = arith.constant 0 : index
    %c0_4 = arith.constant 0 : index
    %3 = vector.load %arg5[%c0_3, %c0_4] : memref<1x256xf32, #tpu.memory_space<vmem>>, vector<1x256xf32>
    %4 = vector.broadcast %3 : vector<1x256xf32> to vector<16x256xf32>
    %5 = arith.addf %2, %4 : vector<16x256xf32>
    %c0_5 = arith.constant 0 : index
    %c0_6 = arith.constant 0 : index
    %6 = vector.load %arg8[%c0_5, %c0_6] : memref<16x256xf32, #tpu.memory_space<vmem>>, vector<16x256xf32>
    tpu.vector_store %arg8[%c0_5, %c0_6], %5 {strides = array<i32>} : memref<16x256xf32, #tpu.memory_space<vmem>>, vector<16x256xf32>,
    %c0_7 = arith.constant 0 : index
    %c0_8 = arith.constant 0 : index
    %7 = vector.load %arg3[%c0_7, %c0_8] : memref<256x256xf32, #tpu.memory_space<vmem>>, vector<256x256xf32>
    %cst_9 = arith.constant dense<0.000000e+00> : vector<16x256xf32>
    %8 = tpu.matmul %0, %7, %cst_9 {dimension_numbers = #tpu.dot_dimension_numbers<[1], [0], [0], [1], [0, 0, 1, 1], [], []>} : vector<16x256xf32>, vector<256x256xf32>, vector<16x256xf32> -> vector<16x256xf32>
    %c0_10 = arith.constant 0 : index
    %c0_11 = arith.constant 0 : index
    %9 = vector.load %arg6[%c0_10, %c0_11] : memref<1x256xf32, #tpu.memory_space<vmem>>, vector<1x256xf32>
    %10 = vector.broadcast %9 : vector<1x256xf32> to vector<16x256xf32>
    %11 = arith.addf %8, %10 : vector<16x256xf32>
    %c0_12 = arith.constant 0 : index
    %c0_13 = arith.constant 0 : index
    %12 = vector.load %arg9[%c0_12, %c0_13] : memref<16x256xf32, #tpu.memory_space<vmem>>, vector<16x256xf32>
    tpu.vector_store %arg9[%c0_12, %c0_13], %11 {strides = array<i32>} : memref<16x256xf32, #tpu.memory_space<vmem>>, vector<16x256xf32>,
    %c0_14 = arith.constant 0 : index
    %c0_15 = arith.constant 0 : index
    %13 = vector.load %arg4[%c0_14, %c0_15] : memref<256x256xf32, #tpu.memory_space<vmem>>, vector<256x256xf32>
    %cst_16 = arith.constant dense<0.000000e+00> : vector<16x256xf32>
    %14 = tpu.matmul %0, %13, %cst_16 {dimension_numbers = #tpu.dot_dimension_numbers<[1], [0], [0], [1], [0, 0, 1, 1], [], []>} : vector<16x256xf32>, vector<256x256xf32>, vector<16x256xf32> -> vector<16x256xf32>
    %c0_17 = arith.constant 0 : index
    %c0_18 = arith.constant 0 : index
    %15 = vector.load %arg7[%c0_17, %c0_18] : memref<1x256xf32, #tpu.memory_space<vmem>>, vector<1x256xf32>
    %16 = vector.broadcast %15 : vector<1x256xf32> to vector<16x256xf32>
    %17 = arith.addf %14, %16 : vector<16x256xf32>
    %c0_19 = arith.constant 0 : index
    %c0_20 = arith.constant 0 : index
    %18 = vector.load %arg10[%c0_19, %c0_20] : memref<16x256xf32, #tpu.memory_space<vmem>>, vector<16x256xf32>
    tpu.vector_store %arg10[%c0_19, %c0_20], %17 {strides = array<i32>} : memref<16x256xf32, #tpu.memory_space<vmem>>, vector<16x256xf32>,
    return
  }
  func.func @transform_0(%arg0: i32) -> (i32, i32) {
    %c0_i32 = arith.constant 0 : i32
    %c0_i32_0 = arith.constant 0 : i32
    return %arg0, %c0_i32 : i32, i32
  }
  func.func @transform_1(%arg0: i32) -> (i32, i32) {
    %c0_i32 = arith.constant 0 : i32
    %c0_i32_0 = arith.constant 0 : i32
    %c0_i32_1 = arith.constant 0 : i32
    return %c0_i32, %c0_i32_0 : i32, i32
  }
  func.func @transform_2(%arg0: i32) -> (i32, i32) {
    %c0_i32 = arith.constant 0 : i32
    %c0_i32_0 = arith.constant 0 : i32
    %c0_i32_1 = arith.constant 0 : i32
    return %c0_i32, %c0_i32_0 : i32, i32
  }
  func.func @transform_3(%arg0: i32) -> (i32, i32) {
    %c0_i32 = arith.constant 0 : i32
    %c0_i32_0 = arith.constant 0 : i32
    %c0_i32_1 = arith.constant 0 : i32
    return %c0_i32, %c0_i32_0 : i32, i32
  }
  func.func @transform_4(%arg0: i32) -> (i32, i32) {
    %c0_i32 = arith.constant 0 : i32
    %c0_i32_0 = arith.constant 0 : i32
    %c0_i32_1 = arith.constant 0 : i32
    return %c0_i32, %c0_i32_0 : i32, i32
  }
  func.func @transform_5(%arg0: i32) -> (i32, i32) {
    %c0_i32 = arith.constant 0 : i32
    %c0_i32_0 = arith.constant 0 : i32
    %c0_i32_1 = arith.constant 0 : i32
    return %c0_i32, %c0_i32_0 : i32, i32
  }
  func.func @transform_6(%arg0: i32) -> (i32, i32) {
    %c0_i32 = arith.constant 0 : i32
    %c0_i32_0 = arith.constant 0 : i32
    %c0_i32_1 = arith.constant 0 : i32
    return %c0_i32, %c0_i32_0 : i32, i32
  }
  func.func @transform_7(%arg0: i32) -> (i32, i32) {
    %c0_i32 = arith.constant 0 : i32
    %c0_i32_0 = arith.constant 0 : i32
    return %arg0, %c0_i32 : i32, i32
  }
  func.func @transform_8(%arg0: i32) -> (i32, i32) {
    %c0_i32 = arith.constant 0 : i32
    %c0_i32_0 = arith.constant 0 : i32
    return %arg0, %c0_i32 : i32, i32
  }
  func.func @transform_9(%arg0: i32) -> (i32, i32) {
    %c0_i32 = arith.constant 0 : i32
    %c0_i32_0 = arith.constant 0 : i32
    return %arg0, %c0_i32 : i32, i32
  }
}

module attributes {stable_mosaic.version = 11 : i64} {
  func.func @_attn_kernel(%arg0: i32, %arg1: i32, %arg2: memref<1x1x8x32xf32, #tpu.memory_space<vmem>>, %arg3: memref<1x1x8x32xf32, #tpu.memory_space<vmem>>, %arg4: memref<1x1x8x32xf32, #tpu.memory_space<vmem>>, %arg5: memref<1x1x1x8xf32, #tpu.memory_space<vmem>>, %arg6: memref<1x1x8x32xf32, #tpu.memory_space<vmem>>) attributes {dimension_semantics = [#tpu.dimension_semantics<parallel>, #tpu.dimension_semantics<parallel>], iteration_bounds = array<i64: 2, 8>, scalar_prefetch = 0 : i64, scratch_operands = 0 : i64, tpu.core_type = #tpu.core_type<tc>, window_params = [{transform_indices = @transform_0, window_bounds = array<i64: 1, 1, 8, 32>}, {transform_indices = @transform_1, window_bounds = array<i64: 1, 1, 8, 32>}, {transform_indices = @transform_2, window_bounds = array<i64: 1, 1, 8, 32>}, {transform_indices = @transform_3, window_bounds = array<i64: 1, 1, 1, 8>}, {transform_indices = @transform_4, window_bounds = array<i64: 1, 1, 8, 32>}]} {
    %c0 = arith.constant 0 : index
    %c0_0 = arith.constant 0 : index
    %c0_1 = arith.constant 0 : index
    %c0_2 = arith.constant 0 : index
    %0 = vector.load %arg2[%c0, %c0_0, %c0_1, %c0_2] : memref<1x1x8x32xf32, #tpu.memory_space<vmem>>, vector<1x1x8x32xf32>
    %1 = vector.shape_cast %0 : vector<1x1x8x32xf32> to vector<8x32xf32>
    %c0_3 = arith.constant 0 : index
    %c0_4 = arith.constant 0 : index
    %c0_5 = arith.constant 0 : index
    %c0_6 = arith.constant 0 : index
    %2 = vector.load %arg3[%c0_3, %c0_4, %c0_5, %c0_6] : memref<1x1x8x32xf32, #tpu.memory_space<vmem>>, vector<1x1x8x32xf32>
    %3 = vector.shape_cast %2 : vector<1x1x8x32xf32> to vector<8x32xf32>
    %c0_7 = arith.constant 0 : index
    %c0_8 = arith.constant 0 : index
    %c0_9 = arith.constant 0 : index
    %c0_10 = arith.constant 0 : index
    %4 = vector.load %arg4[%c0_7, %c0_8, %c0_9, %c0_10] : memref<1x1x8x32xf32, #tpu.memory_space<vmem>>, vector<1x1x8x32xf32>
    %5 = vector.shape_cast %4 : vector<1x1x8x32xf32> to vector<8x32xf32>
    %c0_11 = arith.constant 0 : index
    %c0_12 = arith.constant 0 : index
    %c0_13 = arith.constant 0 : index
    %c0_14 = arith.constant 0 : index
    %6 = vector.load %arg5[%c0_11, %c0_12, %c0_13, %c0_14] : memref<1x1x1x8xf32, #tpu.memory_space<vmem>>, vector<1x1x1x8xf32>
    %7 = vector.shape_cast %6 : vector<1x1x1x8xf32> to vector<1x8xf32>
    "tpu.trace_start"() <{level = 10 : i32, message = "qd,kd->qk"}> : () -> ()
    %cst = arith.constant dense<0.000000e+00> : vector<8x8xf32>
    %8 = tpu.matmul %1, %3, %cst {dimension_numbers = #tpu.dot_dimension_numbers<[1], [1], [0], [0], [0, 0, 1, 0], [], []>} : vector<8x32xf32>, vector<8x32xf32>, vector<8x8xf32> -> vector<8x8xf32>
    "tpu.trace_stop"() : () -> ()
    %cst_15 = arith.constant 0.176776692 : f32
    %9 = vector.broadcast %cst_15 : f32 to vector<8x8xf32>
    %10 = arith.mulf %8, %9 : vector<8x8xf32>
    %cst_16 = arith.constant -1.000000e+09 : f32
    %11 = vector.broadcast %cst_16 : f32 to vector<1x8xf32>
    %12 = arith.mulf %7, %11 : vector<1x8xf32>
    %13 = vector.broadcast %12 : vector<1x8xf32> to vector<8x8xf32>
    %14 = arith.addf %10, %13 : vector<8x8xf32>
    %cst_17 = arith.constant dense<0xFF800000> : vector<8xf32>
    %15 = vector.multi_reduction <maximumf>, %14, %cst_17 [1] : vector<8x8xf32> to vector<8xf32>
    %16 = vector.shape_cast %15 : vector<8xf32> to vector<8x1xf32>
    %17 = vector.broadcast %16 : vector<8x1xf32> to vector<8x8xf32>
    %18 = arith.subf %14, %17 : vector<8x8xf32>
    %19 = math.exp %18 : vector<8x8xf32>
    %cst_18 = arith.constant dense<0.000000e+00> : vector<8xf32>
    %20 = vector.multi_reduction <add>, %19, %cst_18 [1] : vector<8x8xf32> to vector<8xf32>
    %21 = vector.shape_cast %20 : vector<8xf32> to vector<8x1xf32>
    %22 = vector.broadcast %21 : vector<8x1xf32> to vector<8x8xf32>
    %23 = arith.divf %19, %22 : vector<8x8xf32>
    %cst_19 = arith.constant dense<0.000000e+00> : vector<8x32xf32>
    %24 = tpu.matmul %23, %5, %cst_19 {dimension_numbers = #tpu.dot_dimension_numbers<[1], [0], [0], [1], [0, 0, 1, 1], [], []>} : vector<8x8xf32>, vector<8x32xf32>, vector<8x32xf32> -> vector<8x32xf32>
    %c0_20 = arith.constant 0 : index
    %c0_21 = arith.constant 0 : index
    %c0_22 = arith.constant 0 : index
    %c0_23 = arith.constant 0 : index
    %25 = vector.load %arg6[%c0_20, %c0_21, %c0_22, %c0_23] : memref<1x1x8x32xf32, #tpu.memory_space<vmem>>, vector<1x1x8x32xf32>
    %26 = vector.shape_cast %25 : vector<1x1x8x32xf32> to vector<8x32xf32>
    %27 = vector.shape_cast %24 : vector<8x32xf32> to vector<1x1x8x32xf32>
    tpu.vector_store %arg6[%c0_20, %c0_21, %c0_22, %c0_23], %27 {strides = array<i32>} : memref<1x1x8x32xf32, #tpu.memory_space<vmem>>, vector<1x1x8x32xf32>,
    return
  }
  func.func @transform_0(%arg0: i32, %arg1: i32) -> (i32, i32, i32, i32) {
    %c0_i32 = arith.constant 0 : i32
    %c0_i32_0 = arith.constant 0 : i32
    %c0_i32_1 = arith.constant 0 : i32
    return %arg0, %arg1, %c0_i32, %c0_i32_0 : i32, i32, i32, i32
  }
  func.func @transform_1(%arg0: i32, %arg1: i32) -> (i32, i32, i32, i32) {
    %c0_i32 = arith.constant 0 : i32
    %c0_i32_0 = arith.constant 0 : i32
    %c0_i32_1 = arith.constant 0 : i32
    return %arg0, %arg1, %c0_i32, %c0_i32_0 : i32, i32, i32, i32
  }
  func.func @transform_2(%arg0: i32, %arg1: i32) -> (i32, i32, i32, i32) {
    %c0_i32 = arith.constant 0 : i32
    %c0_i32_0 = arith.constant 0 : i32
    %c0_i32_1 = arith.constant 0 : i32
    return %arg0, %arg1, %c0_i32, %c0_i32_0 : i32, i32, i32, i32
  }
  func.func @transform_3(%arg0: i32, %arg1: i32) -> (i32, i32, i32, i32) {
    %c0_i32 = arith.constant 0 : i32
    %c0_i32_0 = arith.constant 0 : i32
    %c0_i32_1 = arith.constant 0 : i32
    %c0_i32_2 = arith.constant 0 : i32
    return %arg0, %c0_i32, %c0_i32_0, %c0_i32_1 : i32, i32, i32, i32
  }
  func.func @transform_4(%arg0: i32, %arg1: i32) -> (i32, i32, i32, i32) {
    %c0_i32 = arith.constant 0 : i32
    %c0_i32_0 = arith.constant 0 : i32
    %c0_i32_1 = arith.constant 0 : i32
    return %arg0, %arg1, %c0_i32, %c0_i32_0 : i32, i32, i32, i32
  }
}

module attributes {stable_mosaic.version = 11 : i64} {
  func.func @_post_attn_kernel(%arg0: i32, %arg1: memref<16x256xf32, #tpu.memory_space<vmem>>, %arg2: memref<16x256xf32, #tpu.memory_space<vmem>>, %arg3: memref<256x256xf32, #tpu.memory_space<vmem>>, %arg4: memref<1x256xf32, #tpu.memory_space<vmem>>, %arg5: memref<1x256xf32, #tpu.memory_space<vmem>>, %arg6: memref<1x256xf32, #tpu.memory_space<vmem>>, %arg7: memref<256x1024xf32, #tpu.memory_space<vmem>>, %arg8: memref<1x1024xf32, #tpu.memory_space<vmem>>, %arg9: memref<1024x256xf32, #tpu.memory_space<vmem>>, %arg10: memref<1x256xf32, #tpu.memory_space<vmem>>, %arg11: memref<1x256xf32, #tpu.memory_space<vmem>>, %arg12: memref<1x256xf32, #tpu.memory_space<vmem>>, %arg13: memref<16x256xf32, #tpu.memory_space<vmem>>) attributes {dimension_semantics = [#tpu.dimension_semantics<parallel>], iteration_bounds = array<i64: 1>, scalar_prefetch = 0 : i64, scratch_operands = 0 : i64, tpu.core_type = #tpu.core_type<tc>, window_params = [{transform_indices = @transform_0, window_bounds = array<i64: 16, 256>}, {transform_indices = @transform_1, window_bounds = array<i64: 16, 256>}, {pipeline_mode = #tpu.pipeline_mode<synchronous>, transform_indices = @transform_2, window_bounds = array<i64: 256, 256>}, {pipeline_mode = #tpu.pipeline_mode<synchronous>, transform_indices = @transform_3, window_bounds = array<i64: 1, 256>}, {pipeline_mode = #tpu.pipeline_mode<synchronous>, transform_indices = @transform_4, window_bounds = array<i64: 1, 256>}, {pipeline_mode = #tpu.pipeline_mode<synchronous>, transform_indices = @transform_5, window_bounds = array<i64: 1, 256>}, {pipeline_mode = #tpu.pipeline_mode<synchronous>, transform_indices = @transform_6, window_bounds = array<i64: 256, 1024>}, {pipeline_mode = #tpu.pipeline_mode<synchronous>, transform_indices = @transform_7, window_bounds = array<i64: 1, 1024>}, {pipeline_mode = #tpu.pipeline_mode<synchronous>, transform_indices = @transform_8, window_bounds = array<i64: 1024, 256>}, {pipeline_mode = #tpu.pipeline_mode<synchronous>, transform_indices = @transform_9, window_bounds = array<i64: 1, 256>}, {pipeline_mode = #tpu.pipeline_mode<synchronous>, transform_indices = @transform_10, window_bounds = array<i64: 1, 256>}, {pipeline_mode = #tpu.pipeline_mode<synchronous>, transform_indices = @transform_11, window_bounds = array<i64: 1, 256>}, {transform_indices = @transform_12, window_bounds = array<i64: 16, 256>}]} {
    %c0 = arith.constant 0 : index
    %c0_0 = arith.constant 0 : index
    %0 = vector.load %arg1[%c0, %c0_0] : memref<16x256xf32, #tpu.memory_space<vmem>>, vector<16x256xf32>
    %c0_1 = arith.constant 0 : index
    %c0_2 = arith.constant 0 : index
    %1 = vector.load %arg2[%c0_1, %c0_2] : memref<16x256xf32, #tpu.memory_space<vmem>>, vector<16x256xf32>
    %c0_3 = arith.constant 0 : index
    %c0_4 = arith.constant 0 : index
    %2 = vector.load %arg3[%c0_3, %c0_4] : memref<256x256xf32, #tpu.memory_space<vmem>>, vector<256x256xf32>
    %cst = arith.constant dense<0.000000e+00> : vector<16x256xf32>
    %3 = tpu.matmul %1, %2, %cst {dimension_numbers = #tpu.dot_dimension_numbers<[1], [0], [0], [1], [0, 0, 1, 1], [], []>} : vector<16x256xf32>, vector<256x256xf32>, vector<16x256xf32> -> vector<16x256xf32>
    %c0_5 = arith.constant 0 : index
    %c0_6 = arith.constant 0 : index
    %4 = vector.load %arg4[%c0_5, %c0_6] : memref<1x256xf32, #tpu.memory_space<vmem>>, vector<1x256xf32>
    %5 = vector.broadcast %4 : vector<1x256xf32> to vector<16x256xf32>
    %6 = arith.addf %3, %5 : vector<16x256xf32>
    %7 = arith.addf %0, %6 : vector<16x256xf32>
    %c0_7 = arith.constant 0 : index
    %c0_8 = arith.constant 0 : index
    %8 = vector.load %arg5[%c0_7, %c0_8] : memref<1x256xf32, #tpu.memory_space<vmem>>, vector<1x256xf32>
    %c0_9 = arith.constant 0 : index
    %c0_10 = arith.constant 0 : index
    %9 = vector.load %arg6[%c0_9, %c0_10] : memref<1x256xf32, #tpu.memory_space<vmem>>, vector<1x256xf32>
    %cst_11 = arith.constant dense<0.000000e+00> : vector<16xf32>
    %10 = vector.multi_reduction <add>, %7, %cst_11 [1] : vector<16x256xf32> to vector<16xf32>
    %11 = vector.shape_cast %10 : vector<16xf32> to vector<16x1xf32>
    %cst_12 = arith.constant 2.560000e+02 : f32
    %12 = vector.broadcast %cst_12 : f32 to vector<16x1xf32>
    %13 = arith.divf %11, %12 : vector<16x1xf32>
    %14 = vector.broadcast %13 : vector<16x1xf32> to vector<16x256xf32>
    %15 = arith.subf %7, %14 : vector<16x256xf32>
    %16 = arith.mulf %15, %15 : vector<16x256xf32>
    %cst_13 = arith.constant dense<0.000000e+00> : vector<16xf32>
    %17 = vector.multi_reduction <add>, %16, %cst_13 [1] : vector<16x256xf32> to vector<16xf32>
    %18 = vector.shape_cast %17 : vector<16xf32> to vector<16x1xf32>
    %cst_14 = arith.constant 2.560000e+02 : f32
    %19 = vector.broadcast %cst_14 : f32 to vector<16x1xf32>
    %20 = arith.divf %18, %19 : vector<16x1xf32>
    %cst_15 = arith.constant 9.99999974E-6 : f32
    %21 = vector.broadcast %cst_15 : f32 to vector<16x1xf32>
    %22 = arith.addf %20, %21 : vector<16x1xf32>
    %23 = math.rsqrt %22 : vector<16x1xf32>
    %24 = vector.broadcast %23 : vector<16x1xf32> to vector<16x256xf32>
    %25 = arith.mulf %15, %24 : vector<16x256xf32>
    %26 = vector.broadcast %8 : vector<1x256xf32> to vector<16x256xf32>
    %27 = arith.mulf %25, %26 : vector<16x256xf32>
    %28 = vector.broadcast %9 : vector<1x256xf32> to vector<16x256xf32>
    %29 = arith.addf %27, %28 : vector<16x256xf32>
    %c0_16 = arith.constant 0 : index
    %c0_17 = arith.constant 0 : index
    %30 = vector.load %arg7[%c0_16, %c0_17] : memref<256x1024xf32, #tpu.memory_space<vmem>>, vector<256x1024xf32>
    %cst_18 = arith.constant dense<0.000000e+00> : vector<16x1024xf32>
    %31 = tpu.matmul %29, %30, %cst_18 {dimension_numbers = #tpu.dot_dimension_numbers<[1], [0], [0], [1], [0, 0, 1, 1], [], []>} : vector<16x256xf32>, vector<256x1024xf32>, vector<16x1024xf32> -> vector<16x1024xf32>
    %c0_19 = arith.constant 0 : index
    %c0_20 = arith.constant 0 : index
    %32 = vector.load %arg8[%c0_19, %c0_20] : memref<1x1024xf32, #tpu.memory_space<vmem>>, vector<1x1024xf32>
    %33 = vector.broadcast %32 : vector<1x1024xf32> to vector<16x1024xf32>
    %34 = arith.addf %31, %33 : vector<16x1024xf32>
    %cst_21 = arith.constant 0.000000e+00 : f32
    %35 = vector.broadcast %cst_21 : f32 to vector<16x1024xf32>
    %36 = arith.maximumf %34, %35 : vector<16x1024xf32>
    %c0_22 = arith.constant 0 : index
    %c0_23 = arith.constant 0 : index
    %37 = vector.load %arg9[%c0_22, %c0_23] : memref<1024x256xf32, #tpu.memory_space<vmem>>, vector<1024x256xf32>
    %cst_24 = arith.constant dense<0.000000e+00> : vector<16x256xf32>
    %38 = tpu.matmul %36, %37, %cst_24 {dimension_numbers = #tpu.dot_dimension_numbers<[1], [0], [0], [1], [0, 0, 1, 1], [], []>} : vector<16x1024xf32>, vector<1024x256xf32>, vector<16x256xf32> -> vector<16x256xf32>
    %c0_25 = arith.constant 0 : index
    %c0_26 = arith.constant 0 : index
    %39 = vector.load %arg10[%c0_25, %c0_26] : memref<1x256xf32, #tpu.memory_space<vmem>>, vector<1x256xf32>
    %40 = vector.broadcast %39 : vector<1x256xf32> to vector<16x256xf32>
    %41 = arith.addf %38, %40 : vector<16x256xf32>
    %42 = arith.addf %29, %41 : vector<16x256xf32>
    %c0_27 = arith.constant 0 : index
    %c0_28 = arith.constant 0 : index
    %43 = vector.load %arg11[%c0_27, %c0_28] : memref<1x256xf32, #tpu.memory_space<vmem>>, vector<1x256xf32>
    %c0_29 = arith.constant 0 : index
    %c0_30 = arith.constant 0 : index
    %44 = vector.load %arg12[%c0_29, %c0_30] : memref<1x256xf32, #tpu.memory_space<vmem>>, vector<1x256xf32>
    %cst_31 = arith.constant dense<0.000000e+00> : vector<16xf32>
    %45 = vector.multi_reduction <add>, %42, %cst_31 [1] : vector<16x256xf32> to vector<16xf32>
    %46 = vector.shape_cast %45 : vector<16xf32> to vector<16x1xf32>
    %cst_32 = arith.constant 2.560000e+02 : f32
    %47 = vector.broadcast %cst_32 : f32 to vector<16x1xf32>
    %48 = arith.divf %46, %47 : vector<16x1xf32>
    %49 = vector.broadcast %48 : vector<16x1xf32> to vector<16x256xf32>
    %50 = arith.subf %42, %49 : vector<16x256xf32>
    %51 = arith.mulf %50, %50 : vector<16x256xf32>
    %cst_33 = arith.constant dense<0.000000e+00> : vector<16xf32>
    %52 = vector.multi_reduction <add>, %51, %cst_33 [1] : vector<16x256xf32> to vector<16xf32>
    %53 = vector.shape_cast %52 : vector<16xf32> to vector<16x1xf32>
    %cst_34 = arith.constant 2.560000e+02 : f32
    %54 = vector.broadcast %cst_34 : f32 to vector<16x1xf32>
    %55 = arith.divf %53, %54 : vector<16x1xf32>
    %cst_35 = arith.constant 9.99999974E-6 : f32
    %56 = vector.broadcast %cst_35 : f32 to vector<16x1xf32>
    %57 = arith.addf %55, %56 : vector<16x1xf32>
    %58 = math.rsqrt %57 : vector<16x1xf32>
    %59 = vector.broadcast %58 : vector<16x1xf32> to vector<16x256xf32>
    %60 = arith.mulf %50, %59 : vector<16x256xf32>
    %61 = vector.broadcast %43 : vector<1x256xf32> to vector<16x256xf32>
    %62 = arith.mulf %60, %61 : vector<16x256xf32>
    %63 = vector.broadcast %44 : vector<1x256xf32> to vector<16x256xf32>
    %64 = arith.addf %62, %63 : vector<16x256xf32>
    %c0_36 = arith.constant 0 : index
    %c0_37 = arith.constant 0 : index
    %65 = vector.load %arg13[%c0_36, %c0_37] : memref<16x256xf32, #tpu.memory_space<vmem>>, vector<16x256xf32>
    tpu.vector_store %arg13[%c0_36, %c0_37], %64 {strides = array<i32>} : memref<16x256xf32, #tpu.memory_space<vmem>>, vector<16x256xf32>,
    return
  }
  func.func @transform_0(%arg0: i32) -> (i32, i32) {
    %c0_i32 = arith.constant 0 : i32
    %c0_i32_0 = arith.constant 0 : i32
    return %arg0, %c0_i32 : i32, i32
  }
  func.func @transform_1(%arg0: i32) -> (i32, i32) {
    %c0_i32 = arith.constant 0 : i32
    %c0_i32_0 = arith.constant 0 : i32
    return %arg0, %c0_i32 : i32, i32
  }
  func.func @transform_2(%arg0: i32) -> (i32, i32) {
    %c0_i32 = arith.constant 0 : i32
    %c0_i32_0 = arith.constant 0 : i32
    %c0_i32_1 = arith.constant 0 : i32
    return %c0_i32, %c0_i32_0 : i32, i32
  }
  func.func @transform_3(%arg0: i32) -> (i32, i32) {
    %c0_i32 = arith.constant 0 : i32
    %c0_i32_0 = arith.constant 0 : i32
    %c0_i32_1 = arith.constant 0 : i32
    return %c0_i32, %c0_i32_0 : i32, i32
  }
  func.func @transform_4(%arg0: i32) -> (i32, i32) {
    %c0_i32 = arith.constant 0 : i32
    %c0_i32_0 = arith.constant 0 : i32
    %c0_i32_1 = arith.constant 0 : i32
    return %c0_i32, %c0_i32_0 : i32, i32
  }
  func.func @transform_5(%arg0: i32) -> (i32, i32) {
    %c0_i32 = arith.constant 0 : i32
    %c0_i32_0 = arith.constant 0 : i32
    %c0_i32_1 = arith.constant 0 : i32
    return %c0_i32, %c0_i32_0 : i32, i32
  }
  func.func @transform_6(%arg0: i32) -> (i32, i32) {
    %c0_i32 = arith.constant 0 : i32
    %c0_i32_0 = arith.constant 0 : i32
    %c0_i32_1 = arith.constant 0 : i32
    return %c0_i32, %c0_i32_0 : i32, i32
  }
  func.func @transform_7(%arg0: i32) -> (i32, i32) {
    %c0_i32 = arith.constant 0 : i32
    %c0_i32_0 = arith.constant 0 : i32
    %c0_i32_1 = arith.constant 0 : i32
    return %c0_i32, %c0_i32_0 : i32, i32
  }
  func.func @transform_8(%arg0: i32) -> (i32, i32) {
    %c0_i32 = arith.constant 0 : i32
    %c0_i32_0 = arith.constant 0 : i32
    %c0_i32_1 = arith.constant 0 : i32
    return %c0_i32, %c0_i32_0 : i32, i32
  }
  func.func @transform_9(%arg0: i32) -> (i32, i32) {
    %c0_i32 = arith.constant 0 : i32
    %c0_i32_0 = arith.constant 0 : i32
    %c0_i32_1 = arith.constant 0 : i32
    return %c0_i32, %c0_i32_0 : i32, i32
  }
  func.func @transform_10(%arg0: i32) -> (i32, i32) {
    %c0_i32 = arith.constant 0 : i32
    %c0_i32_0 = arith.constant 0 : i32
    %c0_i32_1 = arith.constant 0 : i32
    return %c0_i32, %c0_i32_0 : i32, i32
  }
  func.func @transform_11(%arg0: i32) -> (i32, i32) {
    %c0_i32 = arith.constant 0 : i32
    %c0_i32_0 = arith.constant 0 : i32
    %c0_i32_1 = arith.constant 0 : i32
    return %c0_i32, %c0_i32_0 : i32, i32
  }
  func.func @transform_12(%arg0: i32) -> (i32, i32) {
    %c0_i32 = arith.constant 0 : i32
    %c0_i32_0 = arith.constant 0 : i32
    return %arg0, %c0_i32 : i32, i32
  }
}

</mosaic_0001>

<llo_original>
// kernel: encoder_layer_forward.4
$region0: #{encoder_layer_forward.4}
  #allocation0 [shape = 'u32[]', space=smem, size = 0x4, offset = 0x4, fixed_abs, tag = 'smem constant byte address 0x4 - core index']
  #allocation1 [shape = 'u32[144,128]{1,0:T(1,128)}', space=vmem, size = 0x12000, scoped, tag = 'internal scratch']
  %s0 = inlined_call_operand.vmem [shape: f32[2,8,8,32], index: 0, kind: input, shape index: {}]
  %s1 = inlined_call_operand.vmem [shape: f32[2,8,8,32], index: 1, kind: input, shape index: {}]
  %s2 = inlined_call_operand.vmem [shape: f32[2,8,8,32], index: 2, kind: input, shape index: {}]
  %s3 = inlined_call_operand.vmem [shape: f32[2,1,1,8], index: 3, kind: input, shape index: {}]
  %s4 = inlined_call_operand.vmem [shape: f32[2,8,8,32], index: 4, kind: output, shape index: {}]
  %s5 = sld [smem:[#allocation0]]
  $region49: #{encoder_layer_forward.4} parent=0
    _
  %s7 = ssub.s32 1, %s5
  %s8 = scalar_select 0, %s7, %s5
  loop: start=0, step=1, limit=18
  $region2: #{encoder_layer_forward.4} parent=0 // loop_pre_header
    _
  $region3: #{encoder_layer_forward.4} parent=0 // loop_header
    %s10 = sphi 0, %s14
    %p11 = scmp.ge.s32.totalorder %s10, 18
    %s17 = sphi 0, %s29
    %s18 = sphi 0, %s25
    %s19 = sphi 0, %s17
    %s20 = sphi 0, %s18
    %s21 = sphi 0, %s19
    %s22 = sphi 0, %s20
    %s34 = sphi 0, %s36
    %s37 = sphi 0, %s34
    %s38 = sphi 0, %s37
    %s54 = sphi 0, %s38
    %s62 = sphi 0, %s64
    %s65 = sphi 0, %s62
    %s66 = sphi 0, %s65
    %s82 = sphi 0, %s66
    %s90 = sphi 0, %s92
    %s93 = sphi 0, %s90
    %s94 = sphi 0, %s93
    %s110 = sphi 0, %s94
    %s116 = sphi 0, %s118
    %s119 = sphi 0, %s116
    %s120 = sphi 0, %s119
    %s136 = sphi 0, %s120
    %s144 = sphi 0, %s146
    %s147 = sphi 0, %s144
    %s148 = sphi 0, %s147
    %s164 = sphi 0, %s148
  $region4: #{encoder_layer_forward.4} parent=0 // loop_header_branch
    %13 = sbr.rel (%p11) target = $region8
  $region5: #{encoder_layer_forward.4} parent=0 // loop_body
    %s15 = ssub.s32 %s10, 1
    %s16 = ssub.s32 %s10, 2
    %s23 = sadd.s32 1, %s18
    %p24 = scmp.ge.s32.totalorder %s23, 8
    %s25 = scalar_select %p24, 0, %s23
    %s26 = sadd.s32 1, %s17
    %s27 = scalar_select %p24, %s26, %s17
    %p28 = scmp.ge.s32.totalorder %s27, 2
    %s29 = scalar_select %p28, 0, %s27
    %s30 = ssub.s32 %s17, %s29
    %s31 = ssub.s32 %s18, %s25
    %s32 = sor.u32 %s30, %s31
    %p33 = scmp.eq.s32.totalorder %s32, 0
    %s35 = sadd.s32 %s34, 1
    %s36 = scalar_select %p33, %s34, %s35
    %p39 = pneg %p33
    %p40 = scmp.eq.s32.totalorder %s10, 15
    %p41 = por %p39, %p40
    %p42 = scmp.ne.s32.totalorder %s34, %s37
    %p43 = scmp.eq.s32.totalorder %s10, 0
    %p44 = por %p42, %p43
    %p45 = scmp.ne.s32.totalorder %s34, %s37
    %p46 = scmp.eq.s32.totalorder %s15, 15
    %p47 = por %p45, %p46
    %p48 = scmp.ne.s32.totalorder %s37, %s38
    %p49 = scmp.eq.s32.totalorder %s15, 0
    %p50 = por %p48, %p49
    %p51 = scmp.ne.s32.totalorder %s37, %s38
    %p52 = scmp.eq.s32.totalorder %s16, 15
    %p53 = por %p51, %p52
    %p55 = scmp.ne.s32.totalorder %s38, %s54
    %p56 = scmp.eq.s32.totalorder %s16, 0
    %p57 = por %p55, %p56
    %s58 = ssub.s32 %s17, %s29
    %s59 = ssub.s32 %s18, %s25
    %s60 = sor.u32 %s58, %s59
    %p61 = scmp.eq.s32.totalorder %s60, 0
    %s63 = sadd.s32 %s62, 1
    %s64 = scalar_select %p61, %s62, %s63
    %p67 = pneg %p61
    %p68 = scmp.eq.s32.totalorder %s10, 15
    %p69 = por %p67, %p68
    %p70 = scmp.ne.s32.totalorder %s62, %s65
    %p71 = scmp.eq.s32.totalorder %s10, 0
    %p72 = por %p70, %p71
    %p73 = scmp.ne.s32.totalorder %s62, %s65
    %p74 = scmp.eq.s32.totalorder %s15, 15
    %p75 = por %p73, %p74
    %p76 = scmp.ne.s32.totalorder %s65, %s66
    %p77 = scmp.eq.s32.totalorder %s15, 0
    %p78 = por %p76, %p77
    %p79 = scmp.ne.s32.totalorder %s65, %s66
    %p80 = scmp.eq.s32.totalorder %s16, 15
    %p81 = por %p79, %p80
    %p83 = scmp.ne.s32.totalorder %s66, %s82
    %p84 = scmp.eq.s32.totalorder %s16, 0
    %p85 = por %p83, %p84
    %s86 = ssub.s32 %s17, %s29
    %s87 = ssub.s32 %s18, %s25
    %s88 = sor.u32 %s86, %s87
    %p89 = scmp.eq.s32.totalorder %s88, 0
    %s91 = sadd.s32 %s90, 1
    %s92 = scalar_select %p89, %s90, %s91
    %p95 = pneg %p89
    %p96 = scmp.eq.s32.totalorder %s10, 15
    %p97 = por %p95, %p96
    %p98 = scmp.ne.s32.totalorder %s90, %s93
    %p99 = scmp.eq.s32.totalorder %s10, 0
    %p100 = por %p98, %p99
    %p101 = scmp.ne.s32.totalorder %s90, %s93
    %p102 = scmp.eq.s32.totalorder %s15, 15
    %p103 = por %p101, %p102
    %p104 = scmp.ne.s32.totalorder %s93, %s94
    %p105 = scmp.eq.s32.totalorder %s15, 0
    %p106 = por %p104, %p105
    %p107 = scmp.ne.s32.totalorder %s93, %s94
    %p108 = scmp.eq.s32.totalorder %s16, 15
    %p109 = por %p107, %p108
    %p111 = scmp.ne.s32.totalorder %s94, %s110
    %p112 = scmp.eq.s32.totalorder %s16, 0
    %p113 = por %p111, %p112
    %s114 = ssub.s32 %s17, %s29
    %p115 = scmp.eq.s32.totalorder %s114, 0
    %s117 = sadd.s32 %s116, 1
    %s118 = scalar_select %p115, %s116, %s117
    %p121 = pneg %p115
    %p122 = scmp.eq.s32.totalorder %s10, 15
    %p123 = por %p121, %p122
    %p124 = scmp.ne.s32.totalorder %s116, %s119
    %p125 = scmp.eq.s32.totalorder %s10, 0
    %p126 = por %p124, %p125
    %p127 = scmp.ne.s32.totalorder %s116, %s119
    %p128 = scmp.eq.s32.totalorder %s15, 15
    %p129 = por %p127, %p128
    %p130 = scmp.ne.s32.totalorder %s119, %s120
    %p131 = scmp.eq.s32.totalorder %s15, 0
    %p132 = por %p130, %p131
    %p133 = scmp.ne.s32.totalorder %s119, %s120
    %p134 = scmp.eq.s32.totalorder %s16, 15
    %p135 = por %p133, %p134
    %p137 = scmp.ne.s32.totalorder %s120, %s136
    %p138 = scmp.eq.s32.totalorder %s16, 0
    %p139 = por %p137, %p138
    %s140 = ssub.s32 %s17, %s29
    %s141 = ssub.s32 %s18, %s25
    %s142 = sor.u32 %s140, %s141
    %p143 = scmp.eq.s32.totalorder %s142, 0
    %s145 = sadd.s32 %s144, 1
    %s146 = scalar_select %p143, %s144, %s145
    %p149 = pneg %p143
    %p150 = scmp.eq.s32.totalorder %s10, 15
    %p151 = por %p149, %p150
    %p152 = scmp.ne.s32.totalorder %s144, %s147
    %p153 = scmp.eq.s32.totalorder %s10, 0
    %p154 = por %p152, %p153
    %p155 = scmp.ne.s32.totalorder %s144, %s147
    %p156 = scmp.eq.s32.totalorder %s15, 15
    %p157 = por %p155, %p156
    %p158 = scmp.ne.s32.totalorder %s147, %s148
    %p159 = scmp.eq.s32.totalorder %s15, 0
    %p160 = por %p158, %p159
    %p161 = scmp.ne.s32.totalorder %s147, %s148
    %p162 = scmp.eq.s32.totalorder %s16, 15
    %p163 = por %p161, %p162
    %p165 = scmp.ne.s32.totalorder %s148, %s164
    %p166 = scmp.eq.s32.totalorder %s16, 0
    %p167 = por %p165, %p166
    %p168 = scmp.le.s32.totalorder 1, %s10
    %p169 = scmp.lt.s32.totalorder %s10, 17
    %p170 = pnand %p168, %p169
    %p171 = pneg %p170
    // Predicated region
    $region9: #{encoder_layer_forward.4} parent=5 // pred_check
      _
    $region10: #{encoder_layer_forward.4} parent=5 // pred_check_branch
      %173 = sbr.rel (%p170) target = $region12
    $region11: #{encoder_layer_forward.4} parent=5 // pred_region
      %s174 = ssub.s32 %s10, 1
    $region12: #{encoder_layer_forward.4} parent=5 // pred_fallthru
      _
    %p175 = scmp.lt.s32.totalorder %s10, 16
    // Predicated region
    $region13: #{encoder_layer_forward.4} parent=5 // pred_check
      %p176 = pneg %p175
    $region14: #{encoder_layer_forward.4} parent=5 // pred_check_branch
      %178 = sbr.rel (%p176) target = $region16
    $region15: #{encoder_layer_forward.4} parent=5 // pred_region
      // Predicated region
      $region17: #{encoder_layer_forward.4} parent=15 // pred_check
        %p179 = pneg %p44
      $region18: #{encoder_layer_forward.4} parent=15 // pred_check_branch
        %181 = sbr.rel (%p179) target = $region20
      $region19: #{encoder_layer_forward.4} parent=15 // pred_region
        %p182 = scmp.lt.s32.totalorder %s17, 1
        %s183 = scalar_select %p182, %s17, 1
        %p184 = scmp.lt.s32.totalorder %s18, 7
        %s185 = scalar_select %p184, %s18, 7
        %s186 = smul.addr %s183, 8
        %s187 = sadd.s32 %s185, %s186
        %s188 = smul.addr %s187, 8
        %s189 = scalar_lea.vmem %s0, %s188
      $region20: #{encoder_layer_forward.4} parent=15 // pred_fallthru
        _
      // Predicated region
      $region21: #{encoder_layer_forward.4} parent=15 // pred_check
        %p190 = pneg %p72
      $region22: #{encoder_layer_forward.4} parent=15 // pred_check_branch
        %192 = sbr.rel (%p190) target = $region24
      $region23: #{encoder_layer_forward.4} parent=15 // pred_region
        %p193 = scmp.lt.s32.totalorder %s17, 1
        %s194 = scalar_select %p193, %s17, 1
        %p195 = scmp.lt.s32.totalorder %s18, 7
        %s196 = scalar_select %p195, %s18, 7
        %s197 = smul.addr %s194, 8
        %s198 = sadd.s32 %s196, %s197
        %s199 = smul.addr %s198, 8
        %s200 = scalar_lea.vmem %s1, %s199
      $region24: #{encoder_layer_forward.4} parent=15 // pred_fallthru
        _
      // Predicated region
      $region25: #{encoder_layer_forward.4} parent=15 // pred_check
        %p201 = pneg %p100
      $region26: #{encoder_layer_forward.4} parent=15 // pred_check_branch
        %203 = sbr.rel (%p201) target = $region28
      $region27: #{encoder_layer_forward.4} parent=15 // pred_region
        %p204 = scmp.lt.s32.totalorder %s17, 1
        %s205 = scalar_select %p204, %s17, 1
        %p206 = scmp.lt.s32.totalorder %s18, 7
        %s207 = scalar_select %p206, %s18, 7
        %s208 = smul.addr %s205, 8
        %s209 = sadd.s32 %s207, %s208
        %s210 = smul.addr %s209, 8
        %s211 = scalar_lea.vmem %s2, %s210
      $region28: #{encoder_layer_forward.4} parent=15 // pred_fallthru
        _
      // Predicated region
      $region29: #{encoder_layer_forward.4} parent=15 // pred_check
        %p212 = pneg %p126
      $region30: #{encoder_layer_forward.4} parent=15 // pred_check_branch
        %214 = sbr.rel (%p212) target = $region32
      $region31: #{encoder_layer_forward.4} parent=15 // pred_region
        %p215 = scmp.lt.s32.totalorder %s17, 1
        %s216 = scalar_select %p215, %s17, 1
        %s217 = scalar_lea.vmem %s3, %s216
      $region32: #{encoder_layer_forward.4} parent=15 // pred_fallthru
        _
    $region16: #{encoder_layer_forward.4} parent=5 // pred_fallthru
      _
    %p218 = scmp.le.s32.totalorder 1, %s10
    %p219 = scmp.lt.s32.totalorder %s10, 17
    %p220 = pnand %p218, %p219
    %p221 = pneg %p220
    // Predicated region
    $region33: #{encoder_layer_forward.4} parent=5 // pred_check
      _
    $region34: #{encoder_layer_forward.4} parent=5 // pred_check_branch
      %223 = sbr.rel (%p220) target = $region36
    $region35: #{encoder_layer_forward.4} parent=5 // pred_region
      %s224 = ssub.s32 %s10, 1
      %p225 = scmp.lt.s32.totalorder %s19, 1
      %s226 = scalar_select %p225, %s19, 1
      %p227 = scmp.lt.s32.totalorder %s20, 7
      %s228 = scalar_select %p227, %s20, 7
      %s229 = smul.addr %s226, 8
      %s230 = sadd.s32 %s228, %s229
      %s231 = smul.addr %s230, 8
      %s232 = scalar_lea.vmem %s0, %s231
      %p233 = pneg %p50
      %p234 = pneg %p47
      %p235 = scmp.lt.s32.totalorder %s19, 1
      %s236 = scalar_select %p235, %s19, 1
      %p237 = scmp.lt.s32.totalorder %s20, 7
      %s238 = scalar_select %p237, %s20, 7
      %s239 = smul.addr %s236, 8
      %s240 = sadd.s32 %s238, %s239
      %s241 = smul.addr %s240, 8
      %s242 = scalar_lea.vmem %s1, %s241
      %p243 = pneg %p78
      %p244 = pneg %p75
      %p245 = scmp.lt.s32.totalorder %s19, 1
      %s246 = scalar_select %p245, %s19, 1
      %p247 = scmp.lt.s32.totalorder %s20, 7
      %s248 = scalar_select %p247, %s20, 7
      %s249 = smul.addr %s246, 8
      %s250 = sadd.s32 %s248, %s249
      %s251 = smul.addr %s250, 8
      %s252 = scalar_lea.vmem %s2, %s251
      %p253 = pneg %p106
      %p254 = pneg %p103
      %p255 = scmp.lt.s32.totalorder %s19, 1
      %s256 = scalar_select %p255, %s19, 1
      %s257 = scalar_lea.vmem %s3, %s256
      %p258 = pneg %p132
      %p259 = pneg %p129
      %p260 = pneg %p160
      %p261 = pneg %p157
      %p262 = scmp.lt.s32.totalorder %s19, 1
      %s263 = scalar_select %p262, %s19, 1
      %p264 = scmp.lt.s32.totalorder %s20, 7
      %s265 = scalar_select %p264, %s20, 7
      %s266 = smul.addr %s263, 8
      %s267 = sadd.s32 %s265, %s266
      %s268 = smul.addr %s267, 8
      %s269 = scalar_lea.vmem %s4, %s268
      %p270 = scmp.lt.s32.totalorder %s19, 1
      %s271 = scalar_select %p270, %s19, 1
      %p272 = scmp.lt.s32.totalorder %s20, 7
      %s273 = scalar_select %p272, %s20, 7
      %s274 = smul.addr %s271, 8
      %s275 = sadd.s32 %s273, %s274
      %s276 = smul.addr %s275, 8
      %s277 = scalar_lea.vmem %s0, %s276
      %p278 = scmp.lt.s32.totalorder %s19, 1
      %s279 = scalar_select %p278, %s19, 1
      %p280 = scmp.lt.s32.totalorder %s20, 7
      %s281 = scalar_select %p280, %s20, 7
      %s282 = smul.addr %s279, 8
      %s283 = sadd.s32 %s281, %s282
      %s284 = smul.addr %s283, 8
      %s285 = scalar_lea.vmem %s1, %s284
      %p286 = scmp.lt.s32.totalorder %s19, 1
      %s287 = scalar_select %p286, %s19, 1
      %p288 = scmp.lt.s32.totalorder %s20, 7
      %s289 = scalar_select %p288, %s20, 7
      %s290 = smul.addr %s287, 8
      %s291 = sadd.s32 %s289, %s290
      %s292 = smul.addr %s291, 8
      %s293 = scalar_lea.vmem %s2, %s292
      %p294 = scmp.lt.s32.totalorder %s19, 1
      %s295 = scalar_select %p294, %s19, 1
      %s296 = scalar_lea.vmem %s3, %s295
      %p297 = scmp.lt.s32.totalorder %s19, 1
      %s298 = scalar_select %p297, %s19, 1
      %p299 = scmp.lt.s32.totalorder %s20, 7
      %s300 = scalar_select %p299, %s20, 7
      %s301 = smul.addr %s298, 8
      %s302 = sadd.s32 %s300, %s301
      %s303 = smul.addr %s302, 8
      %s304 = scalar_lea.vmem %s4, %s303
      %v305 = vld [vmem:[%s277] sm:$0xff]
      %v306 = vld [vmem:[%s285] sm:$0xff]
      %v307 = vld [vmem:[%s293] sm:$0xff]
      %v308 = vld [vmem:[%s296] sm:$0x1]
      %vm309 = vcmask 261120
      %v311 = vsel %vm309, %v305, 0
      %v314 = vsel %vm309, %v306, 0
      %316 = vmatprep.subr.mxu0 0.0
      %317 = vmatpush1.xpose.msra.mxu0 0.0
      %318 = vmatprep.subr.mxu0 0.0
      %319 = vmatpush1.xpose.msra.mxu0 0.0
      %320 = vmatprep.subr.mxu0 0.0
      %321 = vmatpush1.xpose.msra.mxu0 0.0
      %322 = vmatprep.subr.mxu0 0.0
      %323 = vmatpush1.xpose.msra.mxu0 0.0
      %324 = vmatprep.subr.mxu0 0.0
      %325 = vmatpush1.xpose.msra.mxu0 0.0
      %326 = vmatprep.subr.mxu0 0.0
      %327 = vmatpush1.xpose.msra.mxu0 0.0
      %328 = vmatprep.subr.mxu0 0.0
      %329 = vmatpush1.xpose.msra.mxu0 0.0
      %330 = vmatprep.subr.mxu0 0.0
      %331 = vmatpush1.xpose.msra.mxu0 0.0
      %332 = vmatprep.subr.mxu0 0.0
      %333 = vmatpush1.xpose.msra.mxu0 0.0
      %334 = vmatprep.subr.mxu0 0.0
      %335 = vmatpush1.xpose.msra.mxu0 0.0
      %336 = vmatprep.subr.mxu0 0.0
      %337 = vmatpush1.xpose.msra.mxu0 0.0
      %338 = vmatprep.subr.mxu0 0.0
      %339 = vmatpush1.xpose.msra.mxu0 0.0
      %340 = vmatprep.subr.mxu0 0.0
      %341 = vmatpush1.xpose.msra.mxu0 0.0
      %342 = vmatprep.subr.mxu0 0.0
      %343 = vmatpush1.xpose.msra.mxu0 0.0
      %344 = vmatprep.subr.mxu0 0.0
      %345 = vmatpush1.xpose.msra.mxu0 0.0
      %346 = vmatprep.subr.mxu0 0.0
      %347 = vmatpush1.xpose.msra.mxu0 %v314
      %348 = vmatprep.subr.mxu0 0.0
      %349 = vmatpush2.xpose.msra.mxu0 0.0
      %350 = vmatprep.subr.mxu0 0.0
      %351 = vmatpush2.xpose.msra.mxu0 0.0
      %352 = vmatprep.subr.mxu0 0.0
      %353 = vmatpush2.xpose.msra.mxu0 0.0
      %354 = vmatprep.subr.mxu0 0.0
      %355 = vmatpush2.xpose.msra.mxu0 0.0
      %356 = vmatprep.subr.mxu0 0.0
      %357 = vmatpush2.xpose.msra.mxu0 0.0
      %358 = vmatprep.subr.mxu0 0.0
      %359 = vmatpush2.xpose.msra.mxu0 0.0
      %360 = vmatprep.subr.mxu0 0.0
      %361 = vmatpush2.xpose.msra.mxu0 0.0
      %362 = vmatprep.subr.mxu0 0.0
      %363 = vmatpush2.xpose.msra.mxu0 0.0
      %364 = vmatprep.subr.mxu0 0.0
      %365 = vmatpush2.xpose.msra.mxu0 0.0
      %366 = vmatprep.subr.mxu0 0.0
      %367 = vmatpush2.xpose.msra.mxu0 0.0
      %368 = vmatprep.subr.mxu0 0.0
      %369 = vmatpush2.xpose.msra.mxu0 0.0
      %370 = vmatprep.subr.mxu0 0.0
      %371 = vmatpush2.xpose.msra.mxu0 0.0
      %372 = vmatprep.subr.mxu0 0.0
      %373 = vmatpush2.xpose.msra.mxu0 0.0
      %374 = vmatprep.subr.mxu0 0.0
      %375 = vmatpush2.xpose.msra.mxu0 0.0
      %376 = vmatprep.subr.mxu0 0.0
      %377 = vmatpush2.xpose.msra.mxu0 0.0
      %378 = vmatprep.subr.mxu0 0.0
      %379 = vmatpush2.xpose.msra.mxu0 0.0
      %380 = vmatprep.mubr.f32.mxu0 0.0
      %381 = vmatmul.mubr.f32.gmra.mxu0 %v311
      %v382 = vpop.f32.mrf.mxu0
      %v383 = vadd.f32 0.0, %v382
      %v384 = vpop.f32.mrf.mxu0
      %385 = vdwg.mxu0
      %v386 = vmul.f32 %v383, 0.17677669
      %v387 = vmul.f32 %v308, -1e+09
      %v389 = vlaneseq
      %v390 = vshrl.u32 %v389, 7
      %v391 = vsub.s32 0, %v390
      %v392 = vrot.slane %v387, %v391
      %v394 = vadd.f32 %v386, %v392
      %vm395 = vcmask 64512
      %v396 = vsel %vm395, %v394, -inf
      %397 = vmax.xlane.f32.xlu0 %v396
      %v398 = vpop.xlane.xlu0 %397
      %v399 = vsub.f32 %v394, %v398
      %v400 = vmul.f32 %v399, 1.442695
      %v401 = vpow.pop %v400
      %v402 = vsel %vm395, %v401, 0.0
      %403 = vadd.xlane.f32.xlu0 %v402
      %v404 = vpop.xlane.xlu0 %403
      %v405 = vrcp.pop %v404
      %v406 = vmul.f32 %v401, %v405
      %v408 = vsel %vm395, %v406, 0
      %410 = vmatprep.subr.mxu0 0.0
      %411 = vmatpush1.msra.mxu0 0.0
      %412 = vmatprep.subr.mxu0 0.0
      %413 = vmatpush1.msra.mxu0 0.0
      %414 = vmatprep.subr.mxu0 0.0
      %415 = vmatpush1.msra.mxu0 0.0
      %416 = vmatprep.subr.mxu0 0.0
      %417 = vmatpush1.msra.mxu0 0.0
      %418 = vmatprep.subr.mxu0 0.0
      %419 = vmatpush1.msra.mxu0 0.0
      %420 = vmatprep.subr.mxu0 0.0
      %421 = vmatpush1.msra.mxu0 0.0
      %422 = vmatprep.subr.mxu0 0.0
      %423 = vmatpush1.msra.mxu0 0.0
      %424 = vmatprep.subr.mxu0 0.0
      %425 = vmatpush1.msra.mxu0 0.0
      %426 = vmatprep.subr.mxu0 0.0
      %427 = vmatpush1.msra.mxu0 0.0
      %428 = vmatprep.subr.mxu0 0.0
      %429 = vmatpush1.msra.mxu0 0.0
      %430 = vmatprep.subr.mxu0 0.0
      %431 = vmatpush1.msra.mxu0 0.0
      %432 = vmatprep.subr.mxu0 0.0
      %433 = vmatpush1.msra.mxu0 0.0
      %434 = vmatprep.subr.mxu0 0.0
      %435 = vmatpush1.msra.mxu0 0.0
      %436 = vmatprep.subr.mxu0 0.0
      %437 = vmatpush1.msra.mxu0 0.0
      %438 = vmatprep.subr.mxu0 0.0
      %439 = vmatpush1.msra.mxu0 0.0
      %440 = vmatprep.subr.mxu0 0.0
      %441 = vmatpush1.msra.mxu0 %v307
      %442 = vmatprep.subr.mxu0 0.0
      %443 = vmatpush2.msra.mxu0 0.0
      %444 = vmatprep.subr.mxu0 0.0
      %445 = vmatpush2.msra.mxu0 0.0
      %446 = vmatprep.subr.mxu0 0.0
      %447 = vmatpush2.msra.mxu0 0.0
      %448 = vmatprep.subr.mxu0 0.0
      %449 = vmatpush2.msra.mxu0 0.0
      %450 = vmatprep.subr.mxu0 0.0
      %451 = vmatpush2.msra.mxu0 0.0
      %452 = vmatprep.subr.mxu0 0.0
      %453 = vmatpush2.msra.mxu0 0.0
      %454 = vmatprep.subr.mxu0 0.0
      %455 = vmatpush2.msra.mxu0 0.0
      %456 = vmatprep.subr.mxu0 0.0
      %457 = vmatpush2.msra.mxu0 0.0
      %458 = vmatprep.subr.mxu0 0.0
      %459 = vmatpush2.msra.mxu0 0.0
      %460 = vmatprep.subr.mxu0 0.0
      %461 = vmatpush2.msra.mxu0 0.0
      %462 = vmatprep.subr.mxu0 0.0
      %463 = vmatpush2.msra.mxu0 0.0
      %464 = vmatprep.subr.mxu0 0.0
      %465 = vmatpush2.msra.mxu0 0.0
      %466 = vmatprep.subr.mxu0 0.0
      %467 = vmatpush2.msra.mxu0 0.0
      %468 = vmatprep.subr.mxu0 0.0
      %469 = vmatpush2.msra.mxu0 0.0
      %470 = vmatprep.subr.mxu0 0.0
      %471 = vmatpush2.msra.mxu0 0.0
      %472 = vmatprep.subr.mxu0 0.0
      %473 = vmatpush2.msra.mxu0 0.0
      %474 = vmatprep.mubr.f32.mxu0 0.0
      %475 = vmatmul.mubr.f32.gmra.mxu0 %v408
      %v476 = vpop.f32.mrf.mxu0
      %v477 = vadd.f32 0.0, %v476
      %v478 = vpop.f32.mrf.mxu0
      %479 = vdwg.mxu0
      %480 = vst.msk [vmem:[%s304] sm:$0xff] %vm309, %v477
      %p481 = scmp.lt.s32.totalorder %s19, 1
      %s482 = scalar_select %p481, %s19, 1
      %p483 = scmp.lt.s32.totalorder %s20, 7
      %s484 = scalar_select %p483, %s20, 7
      %s485 = smul.addr %s482, 8
      %s486 = sadd.s32 %s484, %s485
      %s487 = smul.addr %s486, 8
      %s488 = scalar_lea.vmem %s4, %s487
      // Predicated region
      $region37: #{encoder_layer_forward.4} parent=35 // pred_check
        %p489 = pneg %p157
      $region38: #{encoder_layer_forward.4} parent=35 // pred_check_branch
        %491 = sbr.rel (%p489) target = $region40
      $region39: #{encoder_layer_forward.4} parent=35 // pred_region
        _
      $region40: #{encoder_layer_forward.4} parent=35 // pred_fallthru
        _
    $region36: #{encoder_layer_forward.4} parent=5 // pred_fallthru
      _
    %p492 = scmp.le.s32.totalorder 2, %s10
    // Predicated region
    $region41: #{encoder_layer_forward.4} parent=5 // pred_check
      %p493 = pneg %p492
    $region42: #{encoder_layer_forward.4} parent=5 // pred_check_branch
      %495 = sbr.rel (%p493) target = $region44
    $region43: #{encoder_layer_forward.4} parent=5 // pred_region
      %s496 = ssub.s32 %s10, 2
      // Predicated region
      $region45: #{encoder_layer_forward.4} parent=43 // pred_check
        %p497 = pneg %p163
      $region46: #{encoder_layer_forward.4} parent=43 // pred_check_branch
        %499 = sbr.rel (%p497) target = $region48
      $region47: #{encoder_layer_forward.4} parent=43 // pred_region
        %p500 = scmp.lt.s32.totalorder %s21, 1
        %s501 = scalar_select %p500, %s21, 1
        %p502 = scmp.lt.s32.totalorder %s22, 7
        %s503 = scalar_select %p502, %s22, 7
        %s504 = smul.addr %s501, 8
        %s505 = sadd.s32 %s503, %s504
        %s506 = smul.addr %s505, 8
        %s507 = scalar_lea.vmem %s4, %s506
      $region48: #{encoder_layer_forward.4} parent=43 // pred_fallthru
        _
    $region44: #{encoder_layer_forward.4} parent=5 // pred_fallthru
      _
  $region6: #{encoder_layer_forward.4} parent=0 // loop_footer
    %s14 = sadd.s32 1, %s10
  $region7: #{encoder_layer_forward.4} parent=0 // loop_footer_branch
    %9 = sbr.rel target = $region3
  $region8: #{encoder_layer_forward.4} parent=0 // loop_exit
    _

// kernel: encoder_layer_forward.3
$region0: #{encoder_layer_forward.3}
  #allocation0 [shape = 'u32[]', space=smem, size = 0x4, offset = 0x4, fixed_abs, tag = 'smem constant byte address 0x4 - core index']
  #allocation1 [shape = 'u32[144,128]{1,0:T(1,128)}', space=vmem, size = 0x12000, scoped, tag = 'internal scratch']
  %s0 = inlined_call_operand.vmem [shape: f32[16,256], index: 0, kind: input, shape index: {}]
  %s1 = inlined_call_operand.hbm [shape: f32[256,256], index: 1, kind: input, shape index: {}]
  %s2 = inlined_call_operand.hbm [shape: f32[256,256], index: 2, kind: input, shape index: {}]
  %s3 = inlined_call_operand.hbm [shape: f32[256,256], index: 3, kind: input, shape index: {}]
  %s4 = inlined_call_operand.hbm [shape: f32[1,256], index: 4, kind: input, shape index: {}]
  %s5 = inlined_call_operand.hbm [shape: f32[1,256], index: 5, kind: input, shape index: {}]
  %s6 = inlined_call_operand.hbm [shape: f32[1,256], index: 6, kind: input, shape index: {}]
  %s7 = inlined_call_operand.vmem [shape: f32[16,256], index: 7, kind: output, shape index: {0}]
  %s8 = inlined_call_operand.vmem [shape: f32[16,256], index: 8, kind: output, shape index: {1}]
  %s9 = inlined_call_operand.vmem [shape: f32[16,256], index: 9, kind: output, shape index: {2}]
  %10 = xla_tuple %s7, %s8, %s9
  %s11 = sld [smem:[#allocation0]]
  $region78: #{encoder_layer_forward.3} parent=0
    _
  %s13 = ssub.s32 1, %s11
  %s14 = scalar_select 0, %s13, %s11
  $region1: #{encoder_layer_forward.3} parent=0
    #allocation2 [shape = 'u8[262144]{0}', space=vmem, size = 0x40000, scoped, tag = 'input window, operand 1, single buffered']
    #allocation3 [shape = 's32[1]{0}', space=sflag, size = 0x4, scoped, tag = 'scoped memory for encoder_layer_forward.3']
    #allocation4 [shape = 'u8[262144]{0}', space=vmem, size = 0x40000, scoped, tag = 'input window, operand 2, single buffered']
    #allocation5 [shape = 's32[1]{0}', space=sflag, size = 0x4, scoped, tag = 'scoped memory for encoder_layer_forward.3']
    #allocation6 [shape = 'u8[262144]{0}', space=vmem, size = 0x40000, scoped, tag = 'input window, operand 3, single buffered']
    #allocation7 [shape = 'u8[1024]{0}', space=vmem, size = 0x400, scoped, tag = 'input window, operand 4, single buffered']
    #allocation8 [shape = 's32[1]{0}', space=sflag, size = 0x4, scoped, tag = 'scoped memory for encoder_layer_forward.3']
    #allocation9 [shape = 'u8[1024]{0}', space=vmem, size = 0x400, scoped, tag = 'input window, operand 5, single buffered']
    #allocation10 [shape = 'u8[1024]{0}', space=vmem, size = 0x400, scoped, tag = 'input window, operand 6, single buffered']
    #allocation11 [shape = 's32[1]{0}', space=sflag, size = 0x4, scoped, tag = 'scoped memory for encoder_layer_forward.3']
    %15 = vsyncpa [#allocation3], 0
    %16 = vsyncpa [#allocation5], 0
    %17 = vsyncpa [#allocation8], 0
    %18 = vsyncpa [#allocation11], 0
    // Predicated region
    $region2: #{encoder_layer_forward.3} parent=1 // pred_check
      _
    $region3: #{encoder_layer_forward.3} parent=1 // pred_check_branch
      %20 = sbr.rel (0) target = $region5
    $region4: #{encoder_layer_forward.3} parent=1 // pred_region
      _
    $region5: #{encoder_layer_forward.3} parent=1 // pred_fallthru
      _
    // Predicated region
    $region6: #{encoder_layer_forward.3} parent=1 // pred_check
      _
    $region7: #{encoder_layer_forward.3} parent=1 // pred_check_branch
      %22 = sbr.rel (0) target = $region9
    $region8: #{encoder_layer_forward.3} parent=1 // pred_region
      %s24 = ssub.s32 8192, 8192
      %25 = vsyncadd [#allocation3], %s24
      %s26 = sshll.u32 [#allocation2], 4
      %s27 = int_to_ptr.vmem [resolvable:$true] %s26
      %32 = dma.hbm_to_vmem [thread:$0]  %s1, 8192, %s27, [#allocation3], 256, 256, 16
    $region9: #{encoder_layer_forward.3} parent=1 // pred_fallthru
      _
    // Predicated region
    $region10: #{encoder_layer_forward.3} parent=1 // pred_check
      _
    $region11: #{encoder_layer_forward.3} parent=1 // pred_check_branch
      %34 = sbr.rel (0) target = $region13
    $region12: #{encoder_layer_forward.3} parent=1 // pred_region
      %s36 = ssub.s32 8192, 8192
      %37 = vsyncadd [#allocation5], %s36
      %s38 = sshll.u32 [#allocation4], 4
      %s39 = int_to_ptr.vmem [resolvable:$true] %s38
      %44 = dma.hbm_to_vmem [thread:$0]  %s2, 8192, %s39, [#allocation5], 256, 256, 16
    $region13: #{encoder_layer_forward.3} parent=1 // pred_fallthru
      _
    // Predicated region
    $region14: #{encoder_layer_forward.3} parent=1 // pred_check
      _
    $region15: #{encoder_layer_forward.3} parent=1 // pred_check_branch
      %46 = sbr.rel (0) target = $region17
    $region16: #{encoder_layer_forward.3} parent=1 // pred_region
      %s48 = ssub.s32 8192, 8192
      %49 = vsyncadd [#allocation5], %s48
      %s50 = sshll.u32 [#allocation6], 4
      %s51 = int_to_ptr.vmem [resolvable:$true] %s50
      %56 = dma.hbm_to_vmem [thread:$0]  %s3, 8192, %s51, [#allocation5], 256, 256, 16
    $region17: #{encoder_layer_forward.3} parent=1 // pred_fallthru
      _
    // Predicated region
    $region18: #{encoder_layer_forward.3} parent=1 // pred_check
      _
    $region19: #{encoder_layer_forward.3} parent=1 // pred_check_branch
      %58 = sbr.rel (0) target = $region21
    $region20: #{encoder_layer_forward.3} parent=1 // pred_region
      %s60 = ssub.s32 32, 32
      %61 = vsyncadd [#allocation8], %s60
      %s63 = sshll.u32 [#allocation7], 4
      %s64 = int_to_ptr.vmem [resolvable:$true] %s63
      %66 = dma.hbm_to_vmem [thread:$0]  %s4, 32, %s64, [#allocation8]
    $region21: #{encoder_layer_forward.3} parent=1 // pred_fallthru
      _
    // Predicated region
    $region22: #{encoder_layer_forward.3} parent=1 // pred_check
      _
    $region23: #{encoder_layer_forward.3} parent=1 // pred_check_branch
      %68 = sbr.rel (0) target = $region25
    $region24: #{encoder_layer_forward.3} parent=1 // pred_region
      %s70 = ssub.s32 32, 32
      %71 = vsyncadd [#allocation8], %s70
      %s73 = sshll.u32 [#allocation9], 4
      %s74 = int_to_ptr.vmem [resolvable:$true] %s73
      %76 = dma.hbm_to_vmem [thread:$0]  %s5, 32, %s74, [#allocation8]
    $region25: #{encoder_layer_forward.3} parent=1 // pred_fallthru
      _
    // Predicated region
    $region26: #{encoder_layer_forward.3} parent=1 // pred_check
      _
    $region27: #{encoder_layer_forward.3} parent=1 // pred_check_branch
      %78 = sbr.rel (0) target = $region29
    $region28: #{encoder_layer_forward.3} parent=1 // pred_region
      %s80 = ssub.s32 32, 32
      %81 = vsyncadd [#allocation11], %s80
      %s83 = sshll.u32 [#allocation10], 4
      %s84 = int_to_ptr.vmem [resolvable:$true] %s83
      %86 = dma.hbm_to_vmem [thread:$0]  %s6, 32, %s84, [#allocation11]
    $region29: #{encoder_layer_forward.3} parent=1 // pred_fallthru
      _
    // Predicated region
    $region30: #{encoder_layer_forward.3} parent=1 // pred_check
      _
    $region31: #{encoder_layer_forward.3} parent=1 // pred_check_branch
      %88 = sbr.rel (0) target = $region33
    $region32: #{encoder_layer_forward.3} parent=1 // pred_region
      %89 = dma.done [#allocation3], 8192
    $region33: #{encoder_layer_forward.3} parent=1 // pred_fallthru
      _
    // Predicated region
    $region34: #{encoder_layer_forward.3} parent=1 // pred_check
      _
    $region35: #{encoder_layer_forward.3} parent=1 // pred_check_branch
      %91 = sbr.rel (0) target = $region37
    $region36: #{encoder_layer_forward.3} parent=1 // pred_region
      %92 = dma.done [#allocation5], 8192
    $region37: #{encoder_layer_forward.3} parent=1 // pred_fallthru
      _
    // Predicated region
    $region38: #{encoder_layer_forward.3} parent=1 // pred_check
      _
    $region39: #{encoder_layer_forward.3} parent=1 // pred_check_branch
      %94 = sbr.rel (0) target = $region41
    $region40: #{encoder_layer_forward.3} parent=1 // pred_region
      %95 = dma.done [#allocation5], 8192
    $region41: #{encoder_layer_forward.3} parent=1 // pred_fallthru
      _
    // Predicated region
    $region42: #{encoder_layer_forward.3} parent=1 // pred_check
      _
    $region43: #{encoder_layer_forward.3} parent=1 // pred_check_branch
      %97 = sbr.rel (0) target = $region45
    $region44: #{encoder_layer_forward.3} parent=1 // pred_region
      %98 = dma.done [#allocation8], 32
    $region45: #{encoder_layer_forward.3} parent=1 // pred_fallthru
      _
    // Predicated region
    $region46: #{encoder_layer_forward.3} parent=1 // pred_check
      _
    $region47: #{encoder_layer_forward.3} parent=1 // pred_check_branch
      %100 = sbr.rel (0) target = $region49
    $region48: #{encoder_layer_forward.3} parent=1 // pred_region
      %101 = dma.done [#allocation8], 32
    $region49: #{encoder_layer_forward.3} parent=1 // pred_fallthru
      _
    // Predicated region
    $region50: #{encoder_layer_forward.3} parent=1 // pred_check
      _
    $region51: #{encoder_layer_forward.3} parent=1 // pred_check_branch
      %103 = sbr.rel (0) target = $region53
    $region52: #{encoder_layer_forward.3} parent=1 // pred_region
      %104 = dma.done [#allocation11], 32
    $region53: #{encoder_layer_forward.3} parent=1 // pred_fallthru
      _
    %v105 = vld [vmem:[%s0] sm:$0xff]
    %v106 = vld [vmem:[%s0 + $0x8] sm:$0xff]
    %v107 = vld [vmem:[%s0 + $0x10] sm:$0xff]
    %v108 = vld [vmem:[%s0 + $0x18] sm:$0xff]
    %v109 = vld [vmem:[#allocation2] sm:$0xff]
    %v110 = vld [vmem:[#allocation2 + $0x8] sm:$0xff]
    %v111 = vld [vmem:[#allocation2 + $0x10] sm:$0xff]
    %v112 = vld [vmem:[#allocation2 + $0x18] sm:$0xff]
    %v113 = vld [vmem:[#allocation2 + $0x20] sm:$0xff]
    %v114 = vld [vmem:[#allocation2 + $0x28] sm:$0xff]
    %v115 = vld [vmem:[#allocation2 + $0x30] sm:$0xff]
    %v116 = vld [vmem:[#allocation2 + $0x38] sm:$0xff]
    %v117 = vld [vmem:[#allocation2 + $0x40] sm:$0xff]
    %v118 = vld [vmem:[#allocation2 + $0x48] sm:$0xff]
    %v119 = vld [vmem:[#allocation2 + $0x50] sm:$0xff]
    %v120 = vld [vmem:[#allocation2 + $0x58] sm:$0xff]
    %v121 = vld [vmem:[#allocation2 + $0x60] sm:$0xff]
    %v122 = vld [vmem:[#allocation2 + $0x68] sm:$0xff]
    %v123 = vld [vmem:[#allocation2 + $0x70] sm:$0xff]
    %v124 = vld [vmem:[#allocation2 + $0x78] sm:$0xff]
    %v125 = vld [vmem:[#allocation2 + $0x80] sm:$0xff]
    %v126 = vld [vmem:[#allocation2 + $0x88] sm:$0xff]
    %v127 = vld [vmem:[#allocation2 + $0x90] sm:$0xff]
    %v128 = vld [vmem:[#allocation2 + $0x98] sm:$0xff]
    %v129 = vld [vmem:[#allocation2 + $0xa0] sm:$0xff]
    %v130 = vld [vmem:[#allocation2 + $0xa8] sm:$0xff]
    %v131 = vld [vmem:[#allocation2 + $0xb0] sm:$0xff]
    %v132 = vld [vmem:[#allocation2 + $0xb8] sm:$0xff]
    %v133 = vld [vmem:[#allocation2 + $0xc0] sm:$0xff]
    %v134 = vld [vmem:[#allocation2 + $0xc8] sm:$0xff]
    %v135 = vld [vmem:[#allocation2 + $0xd0] sm:$0xff]
    %v136 = vld [vmem:[#allocation2 + $0xd8] sm:$0xff]
    %v137 = vld [vmem:[#allocation2 + $0xe0] sm:$0xff]
    %v138 = vld [vmem:[#allocation2 + $0xe8] sm:$0xff]
    %v139 = vld [vmem:[#allocation2 + $0xf0] sm:$0xff]
    %v140 = vld [vmem:[#allocation2 + $0xf8] sm:$0xff]
    %v141 = vld [vmem:[#allocation2 + $0x100] sm:$0xff]
    %v142 = vld [vmem:[#allocation2 + $0x108] sm:$0xff]
    %v143 = vld [vmem:[#allocation2 + $0x110] sm:$0xff]
    %v144 = vld [vmem:[#allocation2 + $0x118] sm:$0xff]
    %v145 = vld [vmem:[#allocation2 + $0x120] sm:$0xff]
    %v146 = vld [vmem:[#allocation2 + $0x128] sm:$0xff]
    %v147 = vld [vmem:[#allocation2 + $0x130] sm:$0xff]
    %v148 = vld [vmem:[#allocation2 + $0x138] sm:$0xff]
    %v149 = vld [vmem:[#allocation2 + $0x140] sm:$0xff]
    %v150 = vld [vmem:[#allocation2 + $0x148] sm:$0xff]
    %v151 = vld [vmem:[#allocation2 + $0x150] sm:$0xff]
    %v152 = vld [vmem:[#allocation2 + $0x158] sm:$0xff]
    %v153 = vld [vmem:[#allocation2 + $0x160] sm:$0xff]
    %v154 = vld [vmem:[#allocation2 + $0x168] sm:$0xff]
    %v155 = vld [vmem:[#allocation2 + $0x170] sm:$0xff]
    %v156 = vld [vmem:[#allocation2 + $0x178] sm:$0xff]
    %v157 = vld [vmem:[#allocation2 + $0x180] sm:$0xff]
    %v158 = vld [vmem:[#allocation2 + $0x188] sm:$0xff]
    %v159 = vld [vmem:[#allocation2 + $0x190] sm:$0xff]
    %v160 = vld [vmem:[#allocation2 + $0x198] sm:$0xff]
    %v161 = vld [vmem:[#allocation2 + $0x1a0] sm:$0xff]
    %v162 = vld [vmem:[#allocation2 + $0x1a8] sm:$0xff]
    %v163 = vld [vmem:[#allocation2 + $0x1b0] sm:$0xff]
    %v164 = vld [vmem:[#allocation2 + $0x1b8] sm:$0xff]
    %v165 = vld [vmem:[#allocation2 + $0x1c0] sm:$0xff]
    %v166 = vld [vmem:[#allocation2 + $0x1c8] sm:$0xff]
    %v167 = vld [vmem:[#allocation2 + $0x1d0] sm:$0xff]
    %v168 = vld [vmem:[#allocation2 + $0x1d8] sm:$0xff]
    %v169 = vld [vmem:[#allocation2 + $0x1e0] sm:$0xff]
    %v170 = vld [vmem:[#allocation2 + $0x1e8] sm:$0xff]
    %v171 = vld [vmem:[#allocation2 + $0x1f0] sm:$0xff]
    %v172 = vld [vmem:[#allocation2 + $0x1f8] sm:$0xff]
    %v173 = vld [vmem:[#allocation7] sm:$0x3]
    %v175 = vlaneseq
    %v176 = vshrl.u32 %v175, 7
    %v177 = vsub.s32 0, %v176
    %v178 = vrot.slane %v173, %v177
    %v179 = vlaneseq
    %v180 = vshrl.u32 %v179, 7
    %v181 = vsub.s32 1, %v180
    %v182 = vrot.slane %v173, %v181
    %185 = vmatprep.subr.mxu0 %v140
    %186 = vmatpush1.msra.mxu0 %v139
    %187 = vmatprep.subr.mxu0 %v138
    %188 = vmatpush1.msra.mxu0 %v137
    %189 = vmatprep.subr.mxu0 %v136
    %190 = vmatpush1.msra.mxu0 %v135
    %191 = vmatprep.subr.mxu0 %v134
    %192 = vmatpush1.msra.mxu0 %v133
    %193 = vmatprep.subr.mxu0 %v132
    %194 = vmatpush1.msra.mxu0 %v131
    %195 = vmatprep.subr.mxu0 %v130
    %196 = vmatpush1.msra.mxu0 %v129
    %197 = vmatprep.subr.mxu0 %v128
    %198 = vmatpush1.msra.mxu0 %v127
    %199 = vmatprep.subr.mxu0 %v126
    %200 = vmatpush1.msra.mxu0 %v125
    %201 = vmatprep.subr.mxu0 %v124
    %202 = vmatpush1.msra.mxu0 %v123
    %203 = vmatprep.subr.mxu0 %v122
    %204 = vmatpush1.msra.mxu0 %v121
    %205 = vmatprep.subr.mxu0 %v120
    %206 = vmatpush1.msra.mxu0 %v119
    %207 = vmatprep.subr.mxu0 %v118
    %208 = vmatpush1.msra.mxu0 %v117
    %209 = vmatprep.subr.mxu0 %v116
    %210 = vmatpush1.msra.mxu0 %v115
    %211 = vmatprep.subr.mxu0 %v114
    %212 = vmatpush1.msra.mxu0 %v113
    %213 = vmatprep.subr.mxu0 %v112
    %214 = vmatpush1.msra.mxu0 %v111
    %215 = vmatprep.subr.mxu0 %v110
    %216 = vmatpush1.msra.mxu0 %v109
    %217 = vmatprep.subr.mxu0 %v172
    %218 = vmatpush2.msra.mxu0 %v171
    %219 = vmatprep.subr.mxu0 %v170
    %220 = vmatpush2.msra.mxu0 %v169
    %221 = vmatprep.subr.mxu0 %v168
    %222 = vmatpush2.msra.mxu0 %v167
    %223 = vmatprep.subr.mxu0 %v166
    %224 = vmatpush2.msra.mxu0 %v165
    %225 = vmatprep.subr.mxu0 %v164
    %226 = vmatpush2.msra.mxu0 %v163
    %227 = vmatprep.subr.mxu0 %v162
    %228 = vmatpush2.msra.mxu0 %v161
    %229 = vmatprep.subr.mxu0 %v160
    %230 = vmatpush2.msra.mxu0 %v159
    %231 = vmatprep.subr.mxu0 %v158
    %232 = vmatpush2.msra.mxu0 %v157
    %233 = vmatprep.subr.mxu0 %v156
    %234 = vmatpush2.msra.mxu0 %v155
    %235 = vmatprep.subr.mxu0 %v154
    %236 = vmatpush2.msra.mxu0 %v153
    %237 = vmatprep.subr.mxu0 %v152
    %238 = vmatpush2.msra.mxu0 %v151
    %239 = vmatprep.subr.mxu0 %v150
    %240 = vmatpush2.msra.mxu0 %v149
    %241 = vmatprep.subr.mxu0 %v148
    %242 = vmatpush2.msra.mxu0 %v147
    %243 = vmatprep.subr.mxu0 %v146
    %244 = vmatpush2.msra.mxu0 %v145
    %245 = vmatprep.subr.mxu0 %v144
    %246 = vmatpush2.msra.mxu0 %v143
    %247 = vmatprep.subr.mxu0 %v142
    %248 = vmatpush2.msra.mxu0 %v141
    %249 = vmatprep.mubr.f32.mxu0 %v106
    %250 = vmatmul.mubr.f32.gmra.mxu0 %v105
    %v251 = vpop.f32.mrf.mxu0
    %v252 = vadd.f32 %v178, %v251
    %v253 = vpop.f32.mrf.mxu0
    %v254 = vadd.f32 %v182, %v253
    %255 = vmatprep.mubr.f32.mxu0 %v108
    %256 = vmatmul.mubr.f32.gmra.mxu0 %v107
    %v257 = vpop.f32.mrf.mxu0
    %v258 = vadd.f32 %v178, %v257
    %v259 = vpop.f32.mrf.mxu0
    %v260 = vadd.f32 %v182, %v259
    %261 = vdwg.mxu0
    %262 = vst [vmem:[%s7] sm:$0xff] %v252
    %263 = vst [vmem:[%s7 + $0x8] sm:$0xff] %v254
    %264 = vst [vmem:[%s7 + $0x10] sm:$0xff] %v258
    %265 = vst [vmem:[%s7 + $0x18] sm:$0xff] %v260
    %v266 = vld [vmem:[#allocation4] sm:$0xff]
    %v267 = vld [vmem:[#allocation4 + $0x8] sm:$0xff]
    %v268 = vld [vmem:[#allocation4 + $0x10] sm:$0xff]
    %v269 = vld [vmem:[#allocation4 + $0x18] sm:$0xff]
    %v270 = vld [vmem:[#allocation4 + $0x20] sm:$0xff]
    %v271 = vld [vmem:[#allocation4 + $0x28] sm:$0xff]
    %v272 = vld [vmem:[#allocation4 + $0x30] sm:$0xff]
    %v273 = vld [vmem:[#allocation4 + $0x38] sm:$0xff]
    %v274 = vld [vmem:[#allocation4 + $0x40] sm:$0xff]
    %v275 = vld [vmem:[#allocation4 + $0x48] sm:$0xff]
    %v276 = vld [vmem:[#allocation4 + $0x50] sm:$0xff]
    %v277 = vld [vmem:[#allocation4 + $0x58] sm:$0xff]
    %v278 = vld [vmem:[#allocation4 + $0x60] sm:$0xff]
    %v279 = vld [vmem:[#allocation4 + $0x68] sm:$0xff]
    %v280 = vld [vmem:[#allocation4 + $0x70] sm:$0xff]
    %v281 = vld [vmem:[#allocation4 + $0x78] sm:$0xff]
    %v282 = vld [vmem:[#allocation4 + $0x80] sm:$0xff]
    %v283 = vld [vmem:[#allocation4 + $0x88] sm:$0xff]
    %v284 = vld [vmem:[#allocation4 + $0x90] sm:$0xff]
    %v285 = vld [vmem:[#allocation4 + $0x98] sm:$0xff]
    %v286 = vld [vmem:[#allocation4 + $0xa0] sm:$0xff]
    %v287 = vld [vmem:[#allocation4 + $0xa8] sm:$0xff]
    %v288 = vld [vmem:[#allocation4 + $0xb0] sm:$0xff]
    %v289 = vld [vmem:[#allocation4 + $0xb8] sm:$0xff]
    %v290 = vld [vmem:[#allocation4 + $0xc0] sm:$0xff]
    %v291 = vld [vmem:[#allocation4 + $0xc8] sm:$0xff]
    %v292 = vld [vmem:[#allocation4 + $0xd0] sm:$0xff]
    %v293 = vld [vmem:[#allocation4 + $0xd8] sm:$0xff]
    %v294 = vld [vmem:[#allocation4 + $0xe0] sm:$0xff]
    %v295 = vld [vmem:[#allocation4 + $0xe8] sm:$0xff]
    %v296 = vld [vmem:[#allocation4 + $0xf0] sm:$0xff]
    %v297 = vld [vmem:[#allocation4 + $0xf8] sm:$0xff]
    %v298 = vld [vmem:[#allocation4 + $0x100] sm:$0xff]
    %v299 = vld [vmem:[#allocation4 + $0x108] sm:$0xff]
    %v300 = vld [vmem:[#allocation4 + $0x110] sm:$0xff]
    %v301 = vld [vmem:[#allocation4 + $0x118] sm:$0xff]
    %v302 = vld [vmem:[#allocation4 + $0x120] sm:$0xff]
    %v303 = vld [vmem:[#allocation4 + $0x128] sm:$0xff]
    %v304 = vld [vmem:[#allocation4 + $0x130] sm:$0xff]
    %v305 = vld [vmem:[#allocation4 + $0x138] sm:$0xff]
    %v306 = vld [vmem:[#allocation4 + $0x140] sm:$0xff]
    %v307 = vld [vmem:[#allocation4 + $0x148] sm:$0xff]
    %v308 = vld [vmem:[#allocation4 + $0x150] sm:$0xff]
    %v309 = vld [vmem:[#allocation4 + $0x158] sm:$0xff]
    %v310 = vld [vmem:[#allocation4 + $0x160] sm:$0xff]
    %v311 = vld [vmem:[#allocation4 + $0x168] sm:$0xff]
    %v312 = vld [vmem:[#allocation4 + $0x170] sm:$0xff]
    %v313 = vld [vmem:[#allocation4 + $0x178] sm:$0xff]
    %v314 = vld [vmem:[#allocation4 + $0x180] sm:$0xff]
    %v315 = vld [vmem:[#allocation4 + $0x188] sm:$0xff]
    %v316 = vld [vmem:[#allocation4 + $0x190] sm:$0xff]
    %v317 = vld [vmem:[#allocation4 + $0x198] sm:$0xff]
    %v318 = vld [vmem:[#allocation4 + $0x1a0] sm:$0xff]
    %v319 = vld [vmem:[#allocation4 + $0x1a8] sm:$0xff]
    %v320 = vld [vmem:[#allocation4 + $0x1b0] sm:$0xff]
    %v321 = vld [vmem:[#allocation4 + $0x1b8] sm:$0xff]
    %v322 = vld [vmem:[#allocation4 + $0x1c0] sm:$0xff]
    %v323 = vld [vmem:[#allocation4 + $0x1c8] sm:$0xff]
    %v324 = vld [vmem:[#allocation4 + $0x1d0] sm:$0xff]
    %v325 = vld [vmem:[#allocation4 + $0x1d8] sm:$0xff]
    %v326 = vld [vmem:[#allocation4 + $0x1e0] sm:$0xff]
    %v327 = vld [vmem:[#allocation4 + $0x1e8] sm:$0xff]
    %v328 = vld [vmem:[#allocation4 + $0x1f0] sm:$0xff]
    %v329 = vld [vmem:[#allocation4 + $0x1f8] sm:$0xff]
    %v330 = vld [vmem:[#allocation9] sm:$0x3]
    %v332 = vlaneseq
    %v333 = vshrl.u32 %v332, 7
    %v334 = vsub.s32 0, %v333
    %v335 = vrot.slane %v330, %v334
    %v336 = vlaneseq
    %v337 = vshrl.u32 %v336, 7
    %v338 = vsub.s32 1, %v337
    %v339 = vrot.slane %v330, %v338
    %342 = vmatprep.subr.mxu0 %v297
    %343 = vmatpush1.msra.mxu0 %v296
    %344 = vmatprep.subr.mxu0 %v295
    %345 = vmatpush1.msra.mxu0 %v294
    %346 = vmatprep.subr.mxu0 %v293
    %347 = vmatpush1.msra.mxu0 %v292
    %348 = vmatprep.subr.mxu0 %v291
    %349 = vmatpush1.msra.mxu0 %v290
    %350 = vmatprep.subr.mxu0 %v289
    %351 = vmatpush1.msra.mxu0 %v288
    %352 = vmatprep.subr.mxu0 %v287
    %353 = vmatpush1.msra.mxu0 %v286
    %354 = vmatprep.subr.mxu0 %v285
    %355 = vmatpush1.msra.mxu0 %v284
    %356 = vmatprep.subr.mxu0 %v283
    %357 = vmatpush1.msra.mxu0 %v282
    %358 = vmatprep.subr.mxu0 %v281
    %359 = vmatpush1.msra.mxu0 %v280
    %360 = vmatprep.subr.mxu0 %v279
    %361 = vmatpush1.msra.mxu0 %v278
    %362 = vmatprep.subr.mxu0 %v277
    %363 = vmatpush1.msra.mxu0 %v276
    %364 = vmatprep.subr.mxu0 %v275
    %365 = vmatpush1.msra.mxu0 %v274
    %366 = vmatprep.subr.mxu0 %v273
    %367 = vmatpush1.msra.mxu0 %v272
    %368 = vmatprep.subr.mxu0 %v271
    %369 = vmatpush1.msra.mxu0 %v270
    %370 = vmatprep.subr.mxu0 %v269
    %371 = vmatpush1.msra.mxu0 %v268
    %372 = vmatprep.subr.mxu0 %v267
    %373 = vmatpush1.msra.mxu0 %v266
    %374 = vmatprep.subr.mxu0 %v329
    %375 = vmatpush2.msra.mxu0 %v328
    %376 = vmatprep.subr.mxu0 %v327
    %377 = vmatpush2.msra.mxu0 %v326
    %378 = vmatprep.subr.mxu0 %v325
    %379 = vmatpush2.msra.mxu0 %v324
    %380 = vmatprep.subr.mxu0 %v323
    %381 = vmatpush2.msra.mxu0 %v322
    %382 = vmatprep.subr.mxu0 %v321
    %383 = vmatpush2.msra.mxu0 %v320
    %384 = vmatprep.subr.mxu0 %v319
    %385 = vmatpush2.msra.mxu0 %v318
    %386 = vmatprep.subr.mxu0 %v317
    %387 = vmatpush2.msra.mxu0 %v316
    %388 = vmatprep.subr.mxu0 %v315
    %389 = vmatpush2.msra.mxu0 %v314
    %390 = vmatprep.subr.mxu0 %v313
    %391 = vmatpush2.msra.mxu0 %v312
    %392 = vmatprep.subr.mxu0 %v311
    %393 = vmatpush2.msra.mxu0 %v310
    %394 = vmatprep.subr.mxu0 %v309
    %395 = vmatpush2.msra.mxu0 %v308
    %396 = vmatprep.subr.mxu0 %v307
    %397 = vmatpush2.msra.mxu0 %v306
    %398 = vmatprep.subr.mxu0 %v305
    %399 = vmatpush2.msra.mxu0 %v304
    %400 = vmatprep.subr.mxu0 %v303
    %401 = vmatpush2.msra.mxu0 %v302
    %402 = vmatprep.subr.mxu0 %v301
    %403 = vmatpush2.msra.mxu0 %v300
    %404 = vmatprep.subr.mxu0 %v299
    %405 = vmatpush2.msra.mxu0 %v298
    %406 = vmatprep.mubr.f32.mxu0 %v106
    %407 = vmatmul.mubr.f32.gmra.mxu0 %v105
    %v408 = vpop.f32.mrf.mxu0
    %v409 = vadd.f32 %v335, %v408
    %v410 = vpop.f32.mrf.mxu0
    %v411 = vadd.f32 %v339, %v410
    %412 = vmatprep.mubr.f32.mxu0 %v108
    %413 = vmatmul.mubr.f32.gmra.mxu0 %v107
    %v414 = vpop.f32.mrf.mxu0
    %v415 = vadd.f32 %v335, %v414
    %v416 = vpop.f32.mrf.mxu0
    %v417 = vadd.f32 %v339, %v416
    %418 = vdwg.mxu0
    %419 = vst [vmem:[%s8] sm:$0xff] %v409
    %420 = vst [vmem:[%s8 + $0x8] sm:$0xff] %v411
    %421 = vst [vmem:[%s8 + $0x10] sm:$0xff] %v415
    %422 = vst [vmem:[%s8 + $0x18] sm:$0xff] %v417
    %v423 = vld [vmem:[#allocation6] sm:$0xff]
    %v424 = vld [vmem:[#allocation6 + $0x8] sm:$0xff]
    %v425 = vld [vmem:[#allocation6 + $0x10] sm:$0xff]
    %v426 = vld [vmem:[#allocation6 + $0x18] sm:$0xff]
    %v427 = vld [vmem:[#allocation6 + $0x20] sm:$0xff]
    %v428 = vld [vmem:[#allocation6 + $0x28] sm:$0xff]
    %v429 = vld [vmem:[#allocation6 + $0x30] sm:$0xff]
    %v430 = vld [vmem:[#allocation6 + $0x38] sm:$0xff]
    %v431 = vld [vmem:[#allocation6 + $0x40] sm:$0xff]
    %v432 = vld [vmem:[#allocation6 + $0x48] sm:$0xff]
    %v433 = vld [vmem:[#allocation6 + $0x50] sm:$0xff]
    %v434 = vld [vmem:[#allocation6 + $0x58] sm:$0xff]
    %v435 = vld [vmem:[#allocation6 + $0x60] sm:$0xff]
    %v436 = vld [vmem:[#allocation6 + $0x68] sm:$0xff]
    %v437 = vld [vmem:[#allocation6 + $0x70] sm:$0xff]
    %v438 = vld [vmem:[#allocation6 + $0x78] sm:$0xff]
    %v439 = vld [vmem:[#allocation6 + $0x80] sm:$0xff]
    %v440 = vld [vmem:[#allocation6 + $0x88] sm:$0xff]
    %v441 = vld [vmem:[#allocation6 + $0x90] sm:$0xff]
    %v442 = vld [vmem:[#allocation6 + $0x98] sm:$0xff]
    %v443 = vld [vmem:[#allocation6 + $0xa0] sm:$0xff]
    %v444 = vld [vmem:[#allocation6 + $0xa8] sm:$0xff]
    %v445 = vld [vmem:[#allocation6 + $0xb0] sm:$0xff]
    %v446 = vld [vmem:[#allocation6 + $0xb8] sm:$0xff]
    %v447 = vld [vmem:[#allocation6 + $0xc0] sm:$0xff]
    %v448 = vld [vmem:[#allocation6 + $0xc8] sm:$0xff]
    %v449 = vld [vmem:[#allocation6 + $0xd0] sm:$0xff]
    %v450 = vld [vmem:[#allocation6 + $0xd8] sm:$0xff]
    %v451 = vld [vmem:[#allocation6 + $0xe0] sm:$0xff]
    %v452 = vld [vmem:[#allocation6 + $0xe8] sm:$0xff]
    %v453 = vld [vmem:[#allocation6 + $0xf0] sm:$0xff]
    %v454 = vld [vmem:[#allocation6 + $0xf8] sm:$0xff]
    %v455 = vld [vmem:[#allocation6 + $0x100] sm:$0xff]
    %v456 = vld [vmem:[#allocation6 + $0x108] sm:$0xff]
    %v457 = vld [vmem:[#allocation6 + $0x110] sm:$0xff]
    %v458 = vld [vmem:[#allocation6 + $0x118] sm:$0xff]
    %v459 = vld [vmem:[#allocation6 + $0x120] sm:$0xff]
    %v460 = vld [vmem:[#allocation6 + $0x128] sm:$0xff]
    %v461 = vld [vmem:[#allocation6 + $0x130] sm:$0xff]
    %v462 = vld [vmem:[#allocation6 + $0x138] sm:$0xff]
    %v463 = vld [vmem:[#allocation6 + $0x140] sm:$0xff]
    %v464 = vld [vmem:[#allocation6 + $0x148] sm:$0xff]
    %v465 = vld [vmem:[#allocation6 + $0x150] sm:$0xff]
    %v466 = vld [vmem:[#allocation6 + $0x158] sm:$0xff]
    %v467 = vld [vmem:[#allocation6 + $0x160] sm:$0xff]
    %v468 = vld [vmem:[#allocation6 + $0x168] sm:$0xff]
    %v469 = vld [vmem:[#allocation6 + $0x170] sm:$0xff]
    %v470 = vld [vmem:[#allocation6 + $0x178] sm:$0xff]
    %v471 = vld [vmem:[#allocation6 + $0x180] sm:$0xff]
    %v472 = vld [vmem:[#allocation6 + $0x188] sm:$0xff]
    %v473 = vld [vmem:[#allocation6 + $0x190] sm:$0xff]
    %v474 = vld [vmem:[#allocation6 + $0x198] sm:$0xff]
    %v475 = vld [vmem:[#allocation6 + $0x1a0] sm:$0xff]
    %v476 = vld [vmem:[#allocation6 + $0x1a8] sm:$0xff]
    %v477 = vld [vmem:[#allocation6 + $0x1b0] sm:$0xff]
    %v478 = vld [vmem:[#allocation6 + $0x1b8] sm:$0xff]
    %v479 = vld [vmem:[#allocation6 + $0x1c0] sm:$0xff]
    %v480 = vld [vmem:[#allocation6 + $0x1c8] sm:$0xff]
    %v481 = vld [vmem:[#allocation6 + $0x1d0] sm:$0xff]
    %v482 = vld [vmem:[#allocation6 + $0x1d8] sm:$0xff]
    %v483 = vld [vmem:[#allocation6 + $0x1e0] sm:$0xff]
    %v484 = vld [vmem:[#allocation6 + $0x1e8] sm:$0xff]
    %v485 = vld [vmem:[#allocation6 + $0x1f0] sm:$0xff]
    %v486 = vld [vmem:[#allocation6 + $0x1f8] sm:$0xff]
    %v487 = vld [vmem:[#allocation10] sm:$0x3]
    %v489 = vlaneseq
    %v490 = vshrl.u32 %v489, 7
    %v491 = vsub.s32 0, %v490
    %v492 = vrot.slane %v487, %v491
    %v493 = vlaneseq
    %v494 = vshrl.u32 %v493, 7
    %v495 = vsub.s32 1, %v494
    %v496 = vrot.slane %v487, %v495
    %499 = vmatprep.subr.mxu0 %v454
    %500 = vmatpush1.msra.mxu0 %v453
    %501 = vmatprep.subr.mxu0 %v452
    %502 = vmatpush1.msra.mxu0 %v451
    %503 = vmatprep.subr.mxu0 %v450
    %504 = vmatpush1.msra.mxu0 %v449
    %505 = vmatprep.subr.mxu0 %v448
    %506 = vmatpush1.msra.mxu0 %v447
    %507 = vmatprep.subr.mxu0 %v446
    %508 = vmatpush1.msra.mxu0 %v445
    %509 = vmatprep.subr.mxu0 %v444
    %510 = vmatpush1.msra.mxu0 %v443
    %511 = vmatprep.subr.mxu0 %v442
    %512 = vmatpush1.msra.mxu0 %v441
    %513 = vmatprep.subr.mxu0 %v440
    %514 = vmatpush1.msra.mxu0 %v439
    %515 = vmatprep.subr.mxu0 %v438
    %516 = vmatpush1.msra.mxu0 %v437
    %517 = vmatprep.subr.mxu0 %v436
    %518 = vmatpush1.msra.mxu0 %v435
    %519 = vmatprep.subr.mxu0 %v434
    %520 = vmatpush1.msra.mxu0 %v433
    %521 = vmatprep.subr.mxu0 %v432
    %522 = vmatpush1.msra.mxu0 %v431
    %523 = vmatprep.subr.mxu0 %v430
    %524 = vmatpush1.msra.mxu0 %v429
    %525 = vmatprep.subr.mxu0 %v428
    %526 = vmatpush1.msra.mxu0 %v427
    %527 = vmatprep.subr.mxu0 %v426
    %528 = vmatpush1.msra.mxu0 %v425
    %529 = vmatprep.subr.mxu0 %v424
    %530 = vmatpush1.msra.mxu0 %v423
    %531 = vmatprep.subr.mxu0 %v486
    %532 = vmatpush2.msra.mxu0 %v485
    %533 = vmatprep.subr.mxu0 %v484
    %534 = vmatpush2.msra.mxu0 %v483
    %535 = vmatprep.subr.mxu0 %v482
    %536 = vmatpush2.msra.mxu0 %v481
    %537 = vmatprep.subr.mxu0 %v480
    %538 = vmatpush2.msra.mxu0 %v479
    %539 = vmatprep.subr.mxu0 %v478
    %540 = vmatpush2.msra.mxu0 %v477
    %541 = vmatprep.subr.mxu0 %v476
    %542 = vmatpush2.msra.mxu0 %v475
    %543 = vmatprep.subr.mxu0 %v474
    %544 = vmatpush2.msra.mxu0 %v473
    %545 = vmatprep.subr.mxu0 %v472
    %546 = vmatpush2.msra.mxu0 %v471
    %547 = vmatprep.subr.mxu0 %v470
    %548 = vmatpush2.msra.mxu0 %v469
    %549 = vmatprep.subr.mxu0 %v468
    %550 = vmatpush2.msra.mxu0 %v467
    %551 = vmatprep.subr.mxu0 %v466
    %552 = vmatpush2.msra.mxu0 %v465
    %553 = vmatprep.subr.mxu0 %v464
    %554 = vmatpush2.msra.mxu0 %v463
    %555 = vmatprep.subr.mxu0 %v462
    %556 = vmatpush2.msra.mxu0 %v461
    %557 = vmatprep.subr.mxu0 %v460
    %558 = vmatpush2.msra.mxu0 %v459
    %559 = vmatprep.subr.mxu0 %v458
    %560 = vmatpush2.msra.mxu0 %v457
    %561 = vmatprep.subr.mxu0 %v456
    %562 = vmatpush2.msra.mxu0 %v455
    %563 = vmatprep.mubr.f32.mxu0 %v106
    %564 = vmatmul.mubr.f32.gmra.mxu0 %v105
    %v565 = vpop.f32.mrf.mxu0
    %v566 = vadd.f32 %v492, %v565
    %v567 = vpop.f32.mrf.mxu0
    %v568 = vadd.f32 %v496, %v567
    %569 = vmatprep.mubr.f32.mxu0 %v108
    %570 = vmatmul.mubr.f32.gmra.mxu0 %v107
    %v571 = vpop.f32.mrf.mxu0
    %v572 = vadd.f32 %v492, %v571
    %v573 = vpop.f32.mrf.mxu0
    %v574 = vadd.f32 %v496, %v573
    %575 = vdwg.mxu0
    %576 = vst [vmem:[%s9] sm:$0xff] %v566
    %577 = vst [vmem:[%s9 + $0x8] sm:$0xff] %v568
    %578 = vst [vmem:[%s9 + $0x10] sm:$0xff] %v572
    %579 = vst [vmem:[%s9 + $0x18] sm:$0xff] %v574
    // Predicated region
    $region54: #{encoder_layer_forward.3} parent=1 // pred_check
      _
    $region55: #{encoder_layer_forward.3} parent=1 // pred_check_branch
      %581 = sbr.rel (0) target = $region57
    $region56: #{encoder_layer_forward.3} parent=1 // pred_region
      _
    $region57: #{encoder_layer_forward.3} parent=1 // pred_fallthru
      _
    // Predicated region
    $region58: #{encoder_layer_forward.3} parent=1 // pred_check
      _
    $region59: #{encoder_layer_forward.3} parent=1 // pred_check_branch
      %583 = sbr.rel (0) target = $region61
    $region60: #{encoder_layer_forward.3} parent=1 // pred_region
      _
    $region61: #{encoder_layer_forward.3} parent=1 // pred_fallthru
      _
    // Predicated region
    $region62: #{encoder_layer_forward.3} parent=1 // pred_check
      _
    $region63: #{encoder_layer_forward.3} parent=1 // pred_check_branch
      %585 = sbr.rel (0) target = $region65
    $region64: #{encoder_layer_forward.3} parent=1 // pred_region
      _
    $region65: #{encoder_layer_forward.3} parent=1 // pred_fallthru
      _
    // Predicated region
    $region66: #{encoder_layer_forward.3} parent=1 // pred_check
      _
    $region67: #{encoder_layer_forward.3} parent=1 // pred_check_branch
      %587 = sbr.rel (0) target = $region69
    $region68: #{encoder_layer_forward.3} parent=1 // pred_region
      _
    $region69: #{encoder_layer_forward.3} parent=1 // pred_fallthru
      _
    // Predicated region
    $region70: #{encoder_layer_forward.3} parent=1 // pred_check
      _
    $region71: #{encoder_layer_forward.3} parent=1 // pred_check_branch
      %589 = sbr.rel (0) target = $region73
    $region72: #{encoder_layer_forward.3} parent=1 // pred_region
      _
    $region73: #{encoder_layer_forward.3} parent=1 // pred_fallthru
      _
    // Predicated region
    $region74: #{encoder_layer_forward.3} parent=1 // pred_check
      _
    $region75: #{encoder_layer_forward.3} parent=1 // pred_check_branch
      %591 = sbr.rel (0) target = $region77
    $region76: #{encoder_layer_forward.3} parent=1 // pred_region
      _
    $region77: #{encoder_layer_forward.3} parent=1 // pred_fallthru
      _
    %592 = vsyncpa [#allocation3], 1
    %593 = vsyncpa [#allocation5], 1
    %594 = vsyncpa [#allocation8], 1
    %595 = vsyncpa [#allocation11], 1

// kernel: encoder_layer_forward.5
$region0: #{encoder_layer_forward.5}
  #allocation0 [shape = 'u32[]', space=smem, size = 0x4, offset = 0x4, fixed_abs, tag = 'smem constant byte address 0x4 - core index']
  #allocation1 [shape = 'u32[144,128]{1,0:T(1,128)}', space=vmem, size = 0x12000, scoped, tag = 'internal scratch']
  %s0 = inlined_call_operand.vmem [shape: f32[16,256], index: 0, kind: input, shape index: {}]
  %s1 = inlined_call_operand.vmem [shape: f32[16,256], index: 1, kind: input, shape index: {}]
  %s2 = inlined_call_operand.vmem [shape: f32[256,256], index: 2, kind: input, shape index: {}]
  %s3 = inlined_call_operand.vmem [shape: f32[1,256], index: 3, kind: input, shape index: {}]
  %s4 = inlined_call_operand.vmem [shape: f32[1,256], index: 4, kind: input, shape index: {}]
  %s5 = inlined_call_operand.vmem [shape: f32[1,256], index: 5, kind: input, shape index: {}]
  %s6 = inlined_call_operand.vmem [shape: f32[256,1024], index: 6, kind: input, shape index: {}]
  %s7 = inlined_call_operand.vmem [shape: f32[1,1024], index: 7, kind: input, shape index: {}]
  %s8 = inlined_call_operand.hbm [shape: f32[1024,256], index: 8, kind: input, shape index: {}]
  %s9 = inlined_call_operand.vmem [shape: f32[1,256], index: 9, kind: input, shape index: {}]
  %s10 = inlined_call_operand.vmem [shape: f32[1,256], index: 10, kind: input, shape index: {}]
  %s11 = inlined_call_operand.vmem [shape: f32[1,256], index: 11, kind: input, shape index: {}]
  %s12 = inlined_call_operand.hbm [shape: f32[16,256], index: 12, kind: output, shape index: {}]
  %s13 = sld [smem:[#allocation0]]
  $region62: #{encoder_layer_forward.5} parent=0
    _
  %s15 = ssub.s32 1, %s13
  %s16 = scalar_select 0, %s15, %s13
  $region1: #{encoder_layer_forward.5} parent=0
    #allocation2 [shape = 'u8[1048576]{0}', space=vmem, size = 0x100000, scoped, tag = 'input window, operand 8, single buffered']
    #allocation3 [shape = 's32[1]{0}', space=sflag, size = 0x4, scoped, tag = 'scoped memory for encoder_layer_forward.5']
    #allocation4 [shape = 's32[1]{0}', space=sflag, size = 0x4, scoped, tag = 'scoped memory for encoder_layer_forward.5']
    #allocation5 [shape = 'u8[16384]{0}', space=vmem, size = 0x4000, scoped, tag = 'output window, operand 0, single buffered']
    %17 = vsyncpa [#allocation3], 0
    %18 = vsyncpa [#allocation4], 0
    // Predicated region
    $region2: #{encoder_layer_forward.5} parent=1 // pred_check
      _
    $region3: #{encoder_layer_forward.5} parent=1 // pred_check_branch
      %20 = sbr.rel (0) target = $region5
    $region4: #{encoder_layer_forward.5} parent=1 // pred_region
      _
    $region5: #{encoder_layer_forward.5} parent=1 // pred_fallthru
      _
    // Predicated region
    $region6: #{encoder_layer_forward.5} parent=1 // pred_check
      _
    $region7: #{encoder_layer_forward.5} parent=1 // pred_check_branch
      %22 = sbr.rel (0) target = $region9
    $region8: #{encoder_layer_forward.5} parent=1 // pred_region
      _
    $region9: #{encoder_layer_forward.5} parent=1 // pred_fallthru
      _
    // Predicated region
    $region10: #{encoder_layer_forward.5} parent=1 // pred_check
      _
    $region11: #{encoder_layer_forward.5} parent=1 // pred_check_branch
      %24 = sbr.rel (0) target = $region13
    $region12: #{encoder_layer_forward.5} parent=1 // pred_region
      _
    $region13: #{encoder_layer_forward.5} parent=1 // pred_fallthru
      _
    // Predicated region
    $region14: #{encoder_layer_forward.5} parent=1 // pred_check
      _
    $region15: #{encoder_layer_forward.5} parent=1 // pred_check_branch
      %26 = sbr.rel (0) target = $region17
    $region16: #{encoder_layer_forward.5} parent=1 // pred_region
      _
    $region17: #{encoder_layer_forward.5} parent=1 // pred_fallthru
      _
    // Predicated region
    $region18: #{encoder_layer_forward.5} parent=1 // pred_check
      _
    $region19: #{encoder_layer_forward.5} parent=1 // pred_check_branch
      %28 = sbr.rel (0) target = $region21
    $region20: #{encoder_layer_forward.5} parent=1 // pred_region
      _
    $region21: #{encoder_layer_forward.5} parent=1 // pred_fallthru
      _
    // Predicated region
    $region22: #{encoder_layer_forward.5} parent=1 // pred_check
      _
    $region23: #{encoder_layer_forward.5} parent=1 // pred_check_branch
      %30 = sbr.rel (0) target = $region25
    $region24: #{encoder_layer_forward.5} parent=1 // pred_region
      _
    $region25: #{encoder_layer_forward.5} parent=1 // pred_fallthru
      _
    // Predicated region
    $region26: #{encoder_layer_forward.5} parent=1 // pred_check
      _
    $region27: #{encoder_layer_forward.5} parent=1 // pred_check_branch
      %32 = sbr.rel (0) target = $region29
    $region28: #{encoder_layer_forward.5} parent=1 // pred_region
      _
    $region29: #{encoder_layer_forward.5} parent=1 // pred_fallthru
      _
    // Predicated region
    $region30: #{encoder_layer_forward.5} parent=1 // pred_check
      _
    $region31: #{encoder_layer_forward.5} parent=1 // pred_check_branch
      %34 = sbr.rel (0) target = $region33
    $region32: #{encoder_layer_forward.5} parent=1 // pred_region
      _
    $region33: #{encoder_layer_forward.5} parent=1 // pred_fallthru
      _
    // Predicated region
    $region34: #{encoder_layer_forward.5} parent=1 // pred_check
      _
    $region35: #{encoder_layer_forward.5} parent=1 // pred_check_branch
      %36 = sbr.rel (0) target = $region37
    $region36: #{encoder_layer_forward.5} parent=1 // pred_region
      %s38 = ssub.s32 32768, 32768
      %39 = vsyncadd [#allocation3], %s38
      %s40 = sshll.u32 [#allocation2], 4
      %s41 = int_to_ptr.vmem [resolvable:$true] %s40
      %46 = dma.hbm_to_vmem [thread:$0]  %s8, 32768, %s41, [#allocation3], 256, 256, 16
    $region37: #{encoder_layer_forward.5} parent=1 // pred_fallthru
      _
    // Predicated region
    $region38: #{encoder_layer_forward.5} parent=1 // pred_check
      _
    $region39: #{encoder_layer_forward.5} parent=1 // pred_check_branch
      %48 = sbr.rel (0) target = $region41
    $region40: #{encoder_layer_forward.5} parent=1 // pred_region
      _
    $region41: #{encoder_layer_forward.5} parent=1 // pred_fallthru
      _
    // Predicated region
    $region42: #{encoder_layer_forward.5} parent=1 // pred_check
      _
    $region43: #{encoder_layer_forward.5} parent=1 // pred_check_branch
      %50 = sbr.rel (0) target = $region45
    $region44: #{encoder_layer_forward.5} parent=1 // pred_region
      _
    $region45: #{encoder_layer_forward.5} parent=1 // pred_fallthru
      _
    // Predicated region
    $region46: #{encoder_layer_forward.5} parent=1 // pred_check
      _
    $region47: #{encoder_layer_forward.5} parent=1 // pred_check_branch
      %52 = sbr.rel (0) target = $region49
    $region48: #{encoder_layer_forward.5} parent=1 // pred_region
      _
    $region49: #{encoder_layer_forward.5} parent=1 // pred_fallthru
      _
    // Predicated region
    $region50: #{encoder_layer_forward.5} parent=1 // pred_check
      _
    $region51: #{encoder_layer_forward.5} parent=1 // pred_check_branch
      %54 = sbr.rel (0) target = $region53
    $region52: #{encoder_layer_forward.5} parent=1 // pred_region
      %55 = dma.done [#allocation3], 32768
    $region53: #{encoder_layer_forward.5} parent=1 // pred_fallthru
      _
    %v56 = vld [vmem:[%s0] sm:$0xff]
    %v57 = vld [vmem:[%s0 + $0x8] sm:$0xff]
    %v58 = vld [vmem:[%s0 + $0x10] sm:$0xff]
    %v59 = vld [vmem:[%s0 + $0x18] sm:$0xff]
    %v60 = vld [vmem:[%s1] sm:$0xff]
    %v61 = vld [vmem:[%s1 + $0x8] sm:$0xff]
    %v62 = vld [vmem:[%s1 + $0x10] sm:$0xff]
    %v63 = vld [vmem:[%s1 + $0x18] sm:$0xff]
    %v64 = vld [vmem:[%s2] sm:$0xff]
    %v65 = vld [vmem:[%s2 + $0x8] sm:$0xff]
    %v66 = vld [vmem:[%s2 + $0x10] sm:$0xff]
    %v67 = vld [vmem:[%s2 + $0x18] sm:$0xff]
    %v68 = vld [vmem:[%s2 + $0x20] sm:$0xff]
    %v69 = vld [vmem:[%s2 + $0x28] sm:$0xff]
    %v70 = vld [vmem:[%s2 + $0x30] sm:$0xff]
    %v71 = vld [vmem:[%s2 + $0x38] sm:$0xff]
    %v72 = vld [vmem:[%s2 + $0x40] sm:$0xff]
    %v73 = vld [vmem:[%s2 + $0x48] sm:$0xff]
    %v74 = vld [vmem:[%s2 + $0x50] sm:$0xff]
    %v75 = vld [vmem:[%s2 + $0x58] sm:$0xff]
    %v76 = vld [vmem:[%s2 + $0x60] sm:$0xff]
    %v77 = vld [vmem:[%s2 + $0x68] sm:$0xff]
    %v78 = vld [vmem:[%s2 + $0x70] sm:$0xff]
    %v79 = vld [vmem:[%s2 + $0x78] sm:$0xff]
    %v80 = vld [vmem:[%s2 + $0x80] sm:$0xff]
    %v81 = vld [vmem:[%s2 + $0x88] sm:$0xff]
    %v82 = vld [vmem:[%s2 + $0x90] sm:$0xff]
    %v83 = vld [vmem:[%s2 + $0x98] sm:$0xff]
    %v84 = vld [vmem:[%s2 + $0xa0] sm:$0xff]
    %v85 = vld [vmem:[%s2 + $0xa8] sm:$0xff]
    %v86 = vld [vmem:[%s2 + $0xb0] sm:$0xff]
    %v87 = vld [vmem:[%s2 + $0xb8] sm:$0xff]
    %v88 = vld [vmem:[%s2 + $0xc0] sm:$0xff]
    %v89 = vld [vmem:[%s2 + $0xc8] sm:$0xff]
    %v90 = vld [vmem:[%s2 + $0xd0] sm:$0xff]
    %v91 = vld [vmem:[%s2 + $0xd8] sm:$0xff]
    %v92 = vld [vmem:[%s2 + $0xe0] sm:$0xff]
    %v93 = vld [vmem:[%s2 + $0xe8] sm:$0xff]
    %v94 = vld [vmem:[%s2 + $0xf0] sm:$0xff]
    %v95 = vld [vmem:[%s2 + $0xf8] sm:$0xff]
    %v96 = vld [vmem:[%s2 + $0x100] sm:$0xff]
    %v97 = vld [vmem:[%s2 + $0x108] sm:$0xff]
    %v98 = vld [vmem:[%s2 + $0x110] sm:$0xff]
    %v99 = vld [vmem:[%s2 + $0x118] sm:$0xff]
    %v100 = vld [vmem:[%s2 + $0x120] sm:$0xff]
    %v101 = vld [vmem:[%s2 + $0x128] sm:$0xff]
    %v102 = vld [vmem:[%s2 + $0x130] sm:$0xff]
    %v103 = vld [vmem:[%s2 + $0x138] sm:$0xff]
    %v104 = vld [vmem:[%s2 + $0x140] sm:$0xff]
    %v105 = vld [vmem:[%s2 + $0x148] sm:$0xff]
    %v106 = vld [vmem:[%s2 + $0x150] sm:$0xff]
    %v107 = vld [vmem:[%s2 + $0x158] sm:$0xff]
    %v108 = vld [vmem:[%s2 + $0x160] sm:$0xff]
    %v109 = vld [vmem:[%s2 + $0x168] sm:$0xff]
    %v110 = vld [vmem:[%s2 + $0x170] sm:$0xff]
    %v111 = vld [vmem:[%s2 + $0x178] sm:$0xff]
    %v112 = vld [vmem:[%s2 + $0x180] sm:$0xff]
    %v113 = vld [vmem:[%s2 + $0x188] sm:$0xff]
    %v114 = vld [vmem:[%s2 + $0x190] sm:$0xff]
    %v115 = vld [vmem:[%s2 + $0x198] sm:$0xff]
    %v116 = vld [vmem:[%s2 + $0x1a0] sm:$0xff]
    %v117 = vld [vmem:[%s2 + $0x1a8] sm:$0xff]
    %v118 = vld [vmem:[%s2 + $0x1b0] sm:$0xff]
    %v119 = vld [vmem:[%s2 + $0x1b8] sm:$0xff]
    %v120 = vld [vmem:[%s2 + $0x1c0] sm:$0xff]
    %v121 = vld [vmem:[%s2 + $0x1c8] sm:$0xff]
    %v122 = vld [vmem:[%s2 + $0x1d0] sm:$0xff]
    %v123 = vld [vmem:[%s2 + $0x1d8] sm:$0xff]
    %v124 = vld [vmem:[%s2 + $0x1e0] sm:$0xff]
    %v125 = vld [vmem:[%s2 + $0x1e8] sm:$0xff]
    %v126 = vld [vmem:[%s2 + $0x1f0] sm:$0xff]
    %v127 = vld [vmem:[%s2 + $0x1f8] sm:$0xff]
    %v128 = vld [vmem:[%s3] sm:$0x3]
    %v130 = vlaneseq
    %v131 = vshrl.u32 %v130, 7
    %v132 = vsub.s32 0, %v131
    %v133 = vrot.slane %v128, %v132
    %v134 = vlaneseq
    %v135 = vshrl.u32 %v134, 7
    %v136 = vsub.s32 1, %v135
    %v137 = vrot.slane %v128, %v136
    %140 = vmatprep.subr.mxu0 %v95
    %141 = vmatpush1.msra.mxu0 %v94
    %142 = vmatprep.subr.mxu0 %v93
    %143 = vmatpush1.msra.mxu0 %v92
    %144 = vmatprep.subr.mxu0 %v91
    %145 = vmatpush1.msra.mxu0 %v90
    %146 = vmatprep.subr.mxu0 %v89
    %147 = vmatpush1.msra.mxu0 %v88
    %148 = vmatprep.subr.mxu0 %v87
    %149 = vmatpush1.msra.mxu0 %v86
    %150 = vmatprep.subr.mxu0 %v85
    %151 = vmatpush1.msra.mxu0 %v84
    %152 = vmatprep.subr.mxu0 %v83
    %153 = vmatpush1.msra.mxu0 %v82
    %154 = vmatprep.subr.mxu0 %v81
    %155 = vmatpush1.msra.mxu0 %v80
    %156 = vmatprep.subr.mxu0 %v79
    %157 = vmatpush1.msra.mxu0 %v78
    %158 = vmatprep.subr.mxu0 %v77
    %159 = vmatpush1.msra.mxu0 %v76
    %160 = vmatprep.subr.mxu0 %v75
    %161 = vmatpush1.msra.mxu0 %v74
    %162 = vmatprep.subr.mxu0 %v73
    %163 = vmatpush1.msra.mxu0 %v72
    %164 = vmatprep.subr.mxu0 %v71
    %165 = vmatpush1.msra.mxu0 %v70
    %166 = vmatprep.subr.mxu0 %v69
    %167 = vmatpush1.msra.mxu0 %v68
    %168 = vmatprep.subr.mxu0 %v67
    %169 = vmatpush1.msra.mxu0 %v66
    %170 = vmatprep.subr.mxu0 %v65
    %171 = vmatpush1.msra.mxu0 %v64
    %172 = vmatprep.subr.mxu0 %v127
    %173 = vmatpush2.msra.mxu0 %v126
    %174 = vmatprep.subr.mxu0 %v125
    %175 = vmatpush2.msra.mxu0 %v124
    %176 = vmatprep.subr.mxu0 %v123
    %177 = vmatpush2.msra.mxu0 %v122
    %178 = vmatprep.subr.mxu0 %v121
    %179 = vmatpush2.msra.mxu0 %v120
    %180 = vmatprep.subr.mxu0 %v119
    %181 = vmatpush2.msra.mxu0 %v118
    %182 = vmatprep.subr.mxu0 %v117
    %183 = vmatpush2.msra.mxu0 %v116
    %184 = vmatprep.subr.mxu0 %v115
    %185 = vmatpush2.msra.mxu0 %v114
    %186 = vmatprep.subr.mxu0 %v113
    %187 = vmatpush2.msra.mxu0 %v112
    %188 = vmatprep.subr.mxu0 %v111
    %189 = vmatpush2.msra.mxu0 %v110
    %190 = vmatprep.subr.mxu0 %v109
    %191 = vmatpush2.msra.mxu0 %v108
    %192 = vmatprep.subr.mxu0 %v107
    %193 = vmatpush2.msra.mxu0 %v106
    %194 = vmatprep.subr.mxu0 %v105
    %195 = vmatpush2.msra.mxu0 %v104
    %196 = vmatprep.subr.mxu0 %v103
    %197 = vmatpush2.msra.mxu0 %v102
    %198 = vmatprep.subr.mxu0 %v101
    %199 = vmatpush2.msra.mxu0 %v100
    %200 = vmatprep.subr.mxu0 %v99
    %201 = vmatpush2.msra.mxu0 %v98
    %202 = vmatprep.subr.mxu0 %v97
    %203 = vmatpush2.msra.mxu0 %v96
    %204 = vmatprep.mubr.f32.mxu0 %v61
    %205 = vmatmul.mubr.f32.gmra.mxu0 %v60
    %v206 = vpop.f32.mrf.mxu0
    %v207 = vadd.f32 %v133, %v206
    %v208 = vpop.f32.mrf.mxu0
    %v209 = vadd.f32 %v137, %v208
    %210 = vmatprep.mubr.f32.mxu0 %v63
    %211 = vmatmul.mubr.f32.gmra.mxu0 %v62
    %v212 = vpop.f32.mrf.mxu0
    %v213 = vadd.f32 %v133, %v212
    %v214 = vpop.f32.mrf.mxu0
    %v215 = vadd.f32 %v137, %v214
    %216 = vdwg.mxu0
    %v217 = vadd.f32 %v56, %v207
    %v218 = vadd.f32 %v57, %v209
    %v219 = vadd.f32 %v58, %v213
    %v220 = vadd.f32 %v59, %v215
    %v221 = vld [vmem:[%s4] sm:$0x3]
    %v222 = vld [vmem:[%s5] sm:$0x3]
    %v223 = vadd.f32 %v217, %v218
    %224 = vadd.xlane.f32.xlu0 %v223
    %v225 = vpop.xlane.xlu0 %224
    %v226 = vadd.f32 %v219, %v220
    %227 = vadd.xlane.f32.xlu0 %v226
    %v228 = vpop.xlane.xlu0 %227
    %v229 = vrcp.pop 256.0
    %v230 = vmul.f32 %v225, %v229
    %v231 = vmul.f32 %v228, %v229
    %v232 = vsub.f32 %v217, %v230
    %v233 = vsub.f32 %v218, %v230
    %v234 = vsub.f32 %v219, %v231
    %v235 = vsub.f32 %v220, %v231
    %v236 = vmul.f32 %v232, %v232
    %v237 = vmul.f32 %v233, %v233
    %v238 = vmul.f32 %v234, %v234
    %v239 = vmul.f32 %v235, %v235
    %v240 = vadd.f32 %v236, %v237
    %241 = vadd.xlane.f32.xlu0 %v240
    %v242 = vpop.xlane.xlu0 %241
    %v243 = vadd.f32 %v238, %v239
    %244 = vadd.xlane.f32.xlu0 %v243
    %v245 = vpop.xlane.xlu0 %244
    %v246 = vmul.f32 %v242, %v229
    %v247 = vmul.f32 %v245, %v229
    %v248 = vadd.f32 %v246, 1e-05
    %v249 = vadd.f32 %v247, 1e-05
    %v250 = vrsqrt.pop %v248
    %v251 = vrsqrt.pop %v249
    %v252 = vmul.f32 %v232, %v250
    %v253 = vmul.f32 %v233, %v250
    %v254 = vmul.f32 %v234, %v251
    %v255 = vmul.f32 %v235, %v251
    %v257 = vlaneseq
    %v258 = vshrl.u32 %v257, 7
    %v259 = vsub.s32 0, %v258
    %v260 = vrot.slane %v221, %v259
    %v261 = vlaneseq
    %v262 = vshrl.u32 %v261, 7
    %v263 = vsub.s32 1, %v262
    %v264 = vrot.slane %v221, %v263
    %v267 = vmul.f32 %v252, %v260
    %v268 = vmul.f32 %v253, %v264
    %v269 = vmul.f32 %v254, %v260
    %v270 = vmul.f32 %v255, %v264
    %v272 = vlaneseq
    %v273 = vshrl.u32 %v272, 7
    %v274 = vsub.s32 0, %v273
    %v275 = vrot.slane %v222, %v274
    %v276 = vlaneseq
    %v277 = vshrl.u32 %v276, 7
    %v278 = vsub.s32 1, %v277
    %v279 = vrot.slane %v222, %v278
    %v282 = vadd.f32 %v267, %v275
    %v283 = vadd.f32 %v268, %v279
    %v284 = vadd.f32 %v269, %v275
    %v285 = vadd.f32 %v270, %v279
    %v286 = vld [vmem:[%s6] sm:$0xff]
    %v287 = vld [vmem:[%s6 + $0x8] sm:$0xff]
    %v288 = vld [vmem:[%s6 + $0x10] sm:$0xff]
    %v289 = vld [vmem:[%s6 + $0x18] sm:$0xff]
    %v290 = vld [vmem:[%s6 + $0x20] sm:$0xff]
    %v291 = vld [vmem:[%s6 + $0x28] sm:$0xff]
    %v292 = vld [vmem:[%s6 + $0x30] sm:$0xff]
    %v293 = vld [vmem:[%s6 + $0x38] sm:$0xff]
    %v294 = vld [vmem:[%s6 + $0x40] sm:$0xff]
    %v295 = vld [vmem:[%s6 + $0x48] sm:$0xff]
    %v296 = vld [vmem:[%s6 + $0x50] sm:$0xff]
    %v297 = vld [vmem:[%s6 + $0x58] sm:$0xff]
    %v298 = vld [vmem:[%s6 + $0x60] sm:$0xff]
    %v299 = vld [vmem:[%s6 + $0x68] sm:$0xff]
    %v300 = vld [vmem:[%s6 + $0x70] sm:$0xff]
    %v301 = vld [vmem:[%s6 + $0x78] sm:$0xff]
    %v302 = vld [vmem:[%s6 + $0x80] sm:$0xff]
    %v303 = vld [vmem:[%s6 + $0x88] sm:$0xff]
    %v304 = vld [vmem:[%s6 + $0x90] sm:$0xff]
    %v305 = vld [vmem:[%s6 + $0x98] sm:$0xff]
    %v306 = vld [vmem:[%s6 + $0xa0] sm:$0xff]
    %v307 = vld [vmem:[%s6 + $0xa8] sm:$0xff]
    %v308 = vld [vmem:[%s6 + $0xb0] sm:$0xff]
    %v309 = vld [vmem:[%s6 + $0xb8] sm:$0xff]
    %v310 = vld [vmem:[%s6 + $0xc0] sm:$0xff]
    %v311 = vld [vmem:[%s6 + $0xc8] sm:$0xff]
    %v312 = vld [vmem:[%s6 + $0xd0] sm:$0xff]
    %v313 = vld [vmem:[%s6 + $0xd8] sm:$0xff]
    %v314 = vld [vmem:[%s6 + $0xe0] sm:$0xff]
    %v315 = vld [vmem:[%s6 + $0xe8] sm:$0xff]
    %v316 = vld [vmem:[%s6 + $0xf0] sm:$0xff]
    %v317 = vld [vmem:[%s6 + $0xf8] sm:$0xff]
    %v318 = vld [vmem:[%s6 + $0x100] sm:$0xff]
    %v319 = vld [vmem:[%s6 + $0x108] sm:$0xff]
    %v320 = vld [vmem:[%s6 + $0x110] sm:$0xff]
    %v321 = vld [vmem:[%s6 + $0x118] sm:$0xff]
    %v322 = vld [vmem:[%s6 + $0x120] sm:$0xff]
    %v323 = vld [vmem:[%s6 + $0x128] sm:$0xff]
    %v324 = vld [vmem:[%s6 + $0x130] sm:$0xff]
    %v325 = vld [vmem:[%s6 + $0x138] sm:$0xff]
    %v326 = vld [vmem:[%s6 + $0x140] sm:$0xff]
    %v327 = vld [vmem:[%s6 + $0x148] sm:$0xff]
    %v328 = vld [vmem:[%s6 + $0x150] sm:$0xff]
    %v329 = vld [vmem:[%s6 + $0x158] sm:$0xff]
    %v330 = vld [vmem:[%s6 + $0x160] sm:$0xff]
    %v331 = vld [vmem:[%s6 + $0x168] sm:$0xff]
    %v332 = vld [vmem:[%s6 + $0x170] sm:$0xff]
    %v333 = vld [vmem:[%s6 + $0x178] sm:$0xff]
    %v334 = vld [vmem:[%s6 + $0x180] sm:$0xff]
    %v335 = vld [vmem:[%s6 + $0x188] sm:$0xff]
    %v336 = vld [vmem:[%s6 + $0x190] sm:$0xff]
    %v337 = vld [vmem:[%s6 + $0x198] sm:$0xff]
    %v338 = vld [vmem:[%s6 + $0x1a0] sm:$0xff]
    %v339 = vld [vmem:[%s6 + $0x1a8] sm:$0xff]
    %v340 = vld [vmem:[%s6 + $0x1b0] sm:$0xff]
    %v341 = vld [vmem:[%s6 + $0x1b8] sm:$0xff]
    %v342 = vld [vmem:[%s6 + $0x1c0] sm:$0xff]
    %v343 = vld [vmem:[%s6 + $0x1c8] sm:$0xff]
    %v344 = vld [vmem:[%s6 + $0x1d0] sm:$0xff]
    %v345 = vld [vmem:[%s6 + $0x1d8] sm:$0xff]
    %v346 = vld [vmem:[%s6 + $0x1e0] sm:$0xff]
    %v347 = vld [vmem:[%s6 + $0x1e8] sm:$0xff]
    %v348 = vld [vmem:[%s6 + $0x1f0] sm:$0xff]
    %v349 = vld [vmem:[%s6 + $0x1f8] sm:$0xff]
    %v350 = vld [vmem:[%s6 + $0x200] sm:$0xff]
    %v351 = vld [vmem:[%s6 + $0x208] sm:$0xff]
    %v352 = vld [vmem:[%s6 + $0x210] sm:$0xff]
    %v353 = vld [vmem:[%s6 + $0x218] sm:$0xff]
    %v354 = vld [vmem:[%s6 + $0x220] sm:$0xff]
    %v355 = vld [vmem:[%s6 + $0x228] sm:$0xff]
    %v356 = vld [vmem:[%s6 + $0x230] sm:$0xff]
    %v357 = vld [vmem:[%s6 + $0x238] sm:$0xff]
    %v358 = vld [vmem:[%s6 + $0x240] sm:$0xff]
    %v359 = vld [vmem:[%s6 + $0x248] sm:$0xff]
    %v360 = vld [vmem:[%s6 + $0x250] sm:$0xff]
    %v361 = vld [vmem:[%s6 + $0x258] sm:$0xff]
    %v362 = vld [vmem:[%s6 + $0x260] sm:$0xff]
    %v363 = vld [vmem:[%s6 + $0x268] sm:$0xff]
    %v364 = vld [vmem:[%s6 + $0x270] sm:$0xff]
    %v365 = vld [vmem:[%s6 + $0x278] sm:$0xff]
    %v366 = vld [vmem:[%s6 + $0x280] sm:$0xff]
    %v367 = vld [vmem:[%s6 + $0x288] sm:$0xff]
    %v368 = vld [vmem:[%s6 + $0x290] sm:$0xff]
    %v369 = vld [vmem:[%s6 + $0x298] sm:$0xff]
    %v370 = vld [vmem:[%s6 + $0x2a0] sm:$0xff]
    %v371 = vld [vmem:[%s6 + $0x2a8] sm:$0xff]
    %v372 = vld [vmem:[%s6 + $0x2b0] sm:$0xff]
    %v373 = vld [vmem:[%s6 + $0x2b8] sm:$0xff]
    %v374 = vld [vmem:[%s6 + $0x2c0] sm:$0xff]
    %v375 = vld [vmem:[%s6 + $0x2c8] sm:$0xff]
    %v376 = vld [vmem:[%s6 + $0x2d0] sm:$0xff]
    %v377 = vld [vmem:[%s6 + $0x2d8] sm:$0xff]
    %v378 = vld [vmem:[%s6 + $0x2e0] sm:$0xff]
    %v379 = vld [vmem:[%s6 + $0x2e8] sm:$0xff]
    %v380 = vld [vmem:[%s6 + $0x2f0] sm:$0xff]
    %v381 = vld [vmem:[%s6 + $0x2f8] sm:$0xff]
    %v382 = vld [vmem:[%s6 + $0x300] sm:$0xff]
    %v383 = vld [vmem:[%s6 + $0x308] sm:$0xff]
    %v384 = vld [vmem:[%s6 + $0x310] sm:$0xff]
    %v385 = vld [vmem:[%s6 + $0x318] sm:$0xff]
    %v386 = vld [vmem:[%s6 + $0x320] sm:$0xff]
    %v387 = vld [vmem:[%s6 + $0x328] sm:$0xff]
    %v388 = vld [vmem:[%s6 + $0x330] sm:$0xff]
    %v389 = vld [vmem:[%s6 + $0x338] sm:$0xff]
    %v390 = vld [vmem:[%s6 + $0x340] sm:$0xff]
    %v391 = vld [vmem:[%s6 + $0x348] sm:$0xff]
    %v392 = vld [vmem:[%s6 + $0x350] sm:$0xff]
    %v393 = vld [vmem:[%s6 + $0x358] sm:$0xff]
    %v394 = vld [vmem:[%s6 + $0x360] sm:$0xff]
    %v395 = vld [vmem:[%s6 + $0x368] sm:$0xff]
    %v396 = vld [vmem:[%s6 + $0x370] sm:$0xff]
    %v397 = vld [vmem:[%s6 + $0x378] sm:$0xff]
    %v398 = vld [vmem:[%s6 + $0x380] sm:$0xff]
    %v399 = vld [vmem:[%s6 + $0x388] sm:$0xff]
    %v400 = vld [vmem:[%s6 + $0x390] sm:$0xff]
    %v401 = vld [vmem:[%s6 + $0x398] sm:$0xff]
    %v402 = vld [vmem:[%s6 + $0x3a0] sm:$0xff]
    %v403 = vld [vmem:[%s6 + $0x3a8] sm:$0xff]
    %v404 = vld [vmem:[%s6 + $0x3b0] sm:$0xff]
    %v405 = vld [vmem:[%s6 + $0x3b8] sm:$0xff]
    %v406 = vld [vmem:[%s6 + $0x3c0] sm:$0xff]
    %v407 = vld [vmem:[%s6 + $0x3c8] sm:$0xff]
    %v408 = vld [vmem:[%s6 + $0x3d0] sm:$0xff]
    %v409 = vld [vmem:[%s6 + $0x3d8] sm:$0xff]
    %v410 = vld [vmem:[%s6 + $0x3e0] sm:$0xff]
    %v411 = vld [vmem:[%s6 + $0x3e8] sm:$0xff]
    %v412 = vld [vmem:[%s6 + $0x3f0] sm:$0xff]
    %v413 = vld [vmem:[%s6 + $0x3f8] sm:$0xff]
    %v414 = vld [vmem:[%s6 + $0x400] sm:$0xff]
    %v415 = vld [vmem:[%s6 + $0x408] sm:$0xff]
    %v416 = vld [vmem:[%s6 + $0x410] sm:$0xff]
    %v417 = vld [vmem:[%s6 + $0x418] sm:$0xff]
    %v418 = vld [vmem:[%s6 + $0x420] sm:$0xff]
    %v419 = vld [vmem:[%s6 + $0x428] sm:$0xff]
    %v420 = vld [vmem:[%s6 + $0x430] sm:$0xff]
    %v421 = vld [vmem:[%s6 + $0x438] sm:$0xff]
    %v422 = vld [vmem:[%s6 + $0x440] sm:$0xff]
    %v423 = vld [vmem:[%s6 + $0x448] sm:$0xff]
    %v424 = vld [vmem:[%s6 + $0x450] sm:$0xff]
    %v425 = vld [vmem:[%s6 + $0x458] sm:$0xff]
    %v426 = vld [vmem:[%s6 + $0x460] sm:$0xff]
    %v427 = vld [vmem:[%s6 + $0x468] sm:$0xff]
    %v428 = vld [vmem:[%s6 + $0x470] sm:$0xff]
    %v429 = vld [vmem:[%s6 + $0x478] sm:$0xff]
    %v430 = vld [vmem:[%s6 + $0x480] sm:$0xff]
    %v431 = vld [vmem:[%s6 + $0x488] sm:$0xff]
    %v432 = vld [vmem:[%s6 + $0x490] sm:$0xff]
    %v433 = vld [vmem:[%s6 + $0x498] sm:$0xff]
    %v434 = vld [vmem:[%s6 + $0x4a0] sm:$0xff]
    %v435 = vld [vmem:[%s6 + $0x4a8] sm:$0xff]
    %v436 = vld [vmem:[%s6 + $0x4b0] sm:$0xff]
    %v437 = vld [vmem:[%s6 + $0x4b8] sm:$0xff]
    %v438 = vld [vmem:[%s6 + $0x4c0] sm:$0xff]
    %v439 = vld [vmem:[%s6 + $0x4c8] sm:$0xff]
    %v440 = vld [vmem:[%s6 + $0x4d0] sm:$0xff]
    %v441 = vld [vmem:[%s6 + $0x4d8] sm:$0xff]
    %v442 = vld [vmem:[%s6 + $0x4e0] sm:$0xff]
    %v443 = vld [vmem:[%s6 + $0x4e8] sm:$0xff]
    %v444 = vld [vmem:[%s6 + $0x4f0] sm:$0xff]
    %v445 = vld [vmem:[%s6 + $0x4f8] sm:$0xff]
    %v446 = vld [vmem:[%s6 + $0x500] sm:$0xff]
    %v447 = vld [vmem:[%s6 + $0x508] sm:$0xff]
    %v448 = vld [vmem:[%s6 + $0x510] sm:$0xff]
    %v449 = vld [vmem:[%s6 + $0x518] sm:$0xff]
    %v450 = vld [vmem:[%s6 + $0x520] sm:$0xff]
    %v451 = vld [vmem:[%s6 + $0x528] sm:$0xff]
    %v452 = vld [vmem:[%s6 + $0x530] sm:$0xff]
    %v453 = vld [vmem:[%s6 + $0x538] sm:$0xff]
    %v454 = vld [vmem:[%s6 + $0x540] sm:$0xff]
    %v455 = vld [vmem:[%s6 + $0x548] sm:$0xff]
    %v456 = vld [vmem:[%s6 + $0x550] sm:$0xff]
    %v457 = vld [vmem:[%s6 + $0x558] sm:$0xff]
    %v458 = vld [vmem:[%s6 + $0x560] sm:$0xff]
    %v459 = vld [vmem:[%s6 + $0x568] sm:$0xff]
    %v460 = vld [vmem:[%s6 + $0x570] sm:$0xff]
    %v461 = vld [vmem:[%s6 + $0x578] sm:$0xff]
    %v462 = vld [vmem:[%s6 + $0x580] sm:$0xff]
    %v463 = vld [vmem:[%s6 + $0x588] sm:$0xff]
    %v464 = vld [vmem:[%s6 + $0x590] sm:$0xff]
    %v465 = vld [vmem:[%s6 + $0x598] sm:$0xff]
    %v466 = vld [vmem:[%s6 + $0x5a0] sm:$0xff]
    %v467 = vld [vmem:[%s6 + $0x5a8] sm:$0xff]
    %v468 = vld [vmem:[%s6 + $0x5b0] sm:$0xff]
    %v469 = vld [vmem:[%s6 + $0x5b8] sm:$0xff]
    %v470 = vld [vmem:[%s6 + $0x5c0] sm:$0xff]
    %v471 = vld [vmem:[%s6 + $0x5c8] sm:$0xff]
    %v472 = vld [vmem:[%s6 + $0x5d0] sm:$0xff]
    %v473 = vld [vmem:[%s6 + $0x5d8] sm:$0xff]
    %v474 = vld [vmem:[%s6 + $0x5e0] sm:$0xff]
    %v475 = vld [vmem:[%s6 + $0x5e8] sm:$0xff]
    %v476 = vld [vmem:[%s6 + $0x5f0] sm:$0xff]
    %v477 = vld [vmem:[%s6 + $0x5f8] sm:$0xff]
    %v478 = vld [vmem:[%s6 + $0x600] sm:$0xff]
    %v479 = vld [vmem:[%s6 + $0x608] sm:$0xff]
    %v480 = vld [vmem:[%s6 + $0x610] sm:$0xff]
    %v481 = vld [vmem:[%s6 + $0x618] sm:$0xff]
    %v482 = vld [vmem:[%s6 + $0x620] sm:$0xff]
    %v483 = vld [vmem:[%s6 + $0x628] sm:$0xff]
    %v484 = vld [vmem:[%s6 + $0x630] sm:$0xff]
    %v485 = vld [vmem:[%s6 + $0x638] sm:$0xff]
    %v486 = vld [vmem:[%s6 + $0x640] sm:$0xff]
    %v487 = vld [vmem:[%s6 + $0x648] sm:$0xff]
    %v488 = vld [vmem:[%s6 + $0x650] sm:$0xff]
    %v489 = vld [vmem:[%s6 + $0x658] sm:$0xff]
    %v490 = vld [vmem:[%s6 + $0x660] sm:$0xff]
    %v491 = vld [vmem:[%s6 + $0x668] sm:$0xff]
    %v492 = vld [vmem:[%s6 + $0x670] sm:$0xff]
    %v493 = vld [vmem:[%s6 + $0x678] sm:$0xff]
    %v494 = vld [vmem:[%s6 + $0x680] sm:$0xff]
    %v495 = vld [vmem:[%s6 + $0x688] sm:$0xff]
    %v496 = vld [vmem:[%s6 + $0x690] sm:$0xff]
    %v497 = vld [vmem:[%s6 + $0x698] sm:$0xff]
    %v498 = vld [vmem:[%s6 + $0x6a0] sm:$0xff]
    %v499 = vld [vmem:[%s6 + $0x6a8] sm:$0xff]
    %v500 = vld [vmem:[%s6 + $0x6b0] sm:$0xff]
    %v501 = vld [vmem:[%s6 + $0x6b8] sm:$0xff]
    %v502 = vld [vmem:[%s6 + $0x6c0] sm:$0xff]
    %v503 = vld [vmem:[%s6 + $0x6c8] sm:$0xff]
    %v504 = vld [vmem:[%s6 + $0x6d0] sm:$0xff]
    %v505 = vld [vmem:[%s6 + $0x6d8] sm:$0xff]
    %v506 = vld [vmem:[%s6 + $0x6e0] sm:$0xff]
    %v507 = vld [vmem:[%s6 + $0x6e8] sm:$0xff]
    %v508 = vld [vmem:[%s6 + $0x6f0] sm:$0xff]
    %v509 = vld [vmem:[%s6 + $0x6f8] sm:$0xff]
    %v510 = vld [vmem:[%s6 + $0x700] sm:$0xff]
    %v511 = vld [vmem:[%s6 + $0x708] sm:$0xff]
    %v512 = vld [vmem:[%s6 + $0x710] sm:$0xff]
    %v513 = vld [vmem:[%s6 + $0x718] sm:$0xff]
    %v514 = vld [vmem:[%s6 + $0x720] sm:$0xff]
    %v515 = vld [vmem:[%s6 + $0x728] sm:$0xff]
    %v516 = vld [vmem:[%s6 + $0x730] sm:$0xff]
    %v517 = vld [vmem:[%s6 + $0x738] sm:$0xff]
    %v518 = vld [vmem:[%s6 + $0x740] sm:$0xff]
    %v519 = vld [vmem:[%s6 + $0x748] sm:$0xff]
    %v520 = vld [vmem:[%s6 + $0x750] sm:$0xff]
    %v521 = vld [vmem:[%s6 + $0x758] sm:$0xff]
    %v522 = vld [vmem:[%s6 + $0x760] sm:$0xff]
    %v523 = vld [vmem:[%s6 + $0x768] sm:$0xff]
    %v524 = vld [vmem:[%s6 + $0x770] sm:$0xff]
    %v525 = vld [vmem:[%s6 + $0x778] sm:$0xff]
    %v526 = vld [vmem:[%s6 + $0x780] sm:$0xff]
    %v527 = vld [vmem:[%s6 + $0x788] sm:$0xff]
    %v528 = vld [vmem:[%s6 + $0x790] sm:$0xff]
    %v529 = vld [vmem:[%s6 + $0x798] sm:$0xff]
    %v530 = vld [vmem:[%s6 + $0x7a0] sm:$0xff]
    %v531 = vld [vmem:[%s6 + $0x7a8] sm:$0xff]
    %v532 = vld [vmem:[%s6 + $0x7b0] sm:$0xff]
    %v533 = vld [vmem:[%s6 + $0x7b8] sm:$0xff]
    %v534 = vld [vmem:[%s6 + $0x7c0] sm:$0xff]
    %v535 = vld [vmem:[%s6 + $0x7c8] sm:$0xff]
    %v536 = vld [vmem:[%s6 + $0x7d0] sm:$0xff]
    %v537 = vld [vmem:[%s6 + $0x7d8] sm:$0xff]
    %v538 = vld [vmem:[%s6 + $0x7e0] sm:$0xff]
    %v539 = vld [vmem:[%s6 + $0x7e8] sm:$0xff]
    %v540 = vld [vmem:[%s6 + $0x7f0] sm:$0xff]
    %v541 = vld [vmem:[%s6 + $0x7f8] sm:$0xff]
    %v542 = vld [vmem:[%s7] sm:$0xff]
    %v544 = vlaneseq
    %v545 = vshrl.u32 %v544, 7
    %v546 = vsub.s32 0, %v545
    %v547 = vrot.slane %v542, %v546
    %v548 = vlaneseq
    %v549 = vshrl.u32 %v548, 7
    %v550 = vsub.s32 1, %v549
    %v551 = vrot.slane %v542, %v550
    %v552 = vlaneseq
    %v553 = vshrl.u32 %v552, 7
    %v554 = vsub.s32 2, %v553
    %v555 = vrot.slane %v542, %v554
    %v556 = vlaneseq
    %v557 = vshrl.u32 %v556, 7
    %v558 = vsub.s32 3, %v557
    %v559 = vrot.slane %v542, %v558
    %v560 = vlaneseq
    %v561 = vshrl.u32 %v560, 7
    %v562 = vsub.s32 4, %v561
    %v563 = vrot.slane %v542, %v562
    %v564 = vlaneseq
    %v565 = vshrl.u32 %v564, 7
    %v566 = vsub.s32 5, %v565
    %v567 = vrot.slane %v542, %v566
    %v568 = vlaneseq
    %v569 = vshrl.u32 %v568, 7
    %v570 = vsub.s32 6, %v569
    %v571 = vrot.slane %v542, %v570
    %v572 = vlaneseq
    %v573 = vshrl.u32 %v572, 7
    %v574 = vsub.s32 7, %v573
    %v575 = vrot.slane %v542, %v574
    %584 = vmatprep.subr.mxu0 %v407
    %585 = vmatpush1.msra.mxu0 %v406
    %586 = vmatprep.subr.mxu0 %v399
    %587 = vmatpush1.msra.mxu0 %v398
    %588 = vmatprep.subr.mxu0 %v391
    %589 = vmatpush1.msra.mxu0 %v390
    %590 = vmatprep.subr.mxu0 %v383
    %591 = vmatpush1.msra.mxu0 %v382
    %592 = vmatprep.subr.mxu0 %v375
    %593 = vmatpush1.msra.mxu0 %v374
    %594 = vmatprep.subr.mxu0 %v367
    %595 = vmatpush1.msra.mxu0 %v366
    %596 = vmatprep.subr.mxu0 %v359
    %597 = vmatpush1.msra.mxu0 %v358
    %598 = vmatprep.subr.mxu0 %v351
    %599 = vmatpush1.msra.mxu0 %v350
    %600 = vmatprep.subr.mxu0 %v343
    %601 = vmatpush1.msra.mxu0 %v342
    %602 = vmatprep.subr.mxu0 %v335
    %603 = vmatpush1.msra.mxu0 %v334
    %604 = vmatprep.subr.mxu0 %v327
    %605 = vmatpush1.msra.mxu0 %v326
    %606 = vmatprep.subr.mxu0 %v319
    %607 = vmatpush1.msra.mxu0 %v318
    %608 = vmatprep.subr.mxu0 %v311
    %609 = vmatpush1.msra.mxu0 %v310
    %610 = vmatprep.subr.mxu0 %v303
    %611 = vmatpush1.msra.mxu0 %v302
    %612 = vmatprep.subr.mxu0 %v295
    %613 = vmatpush1.msra.mxu0 %v294
    %614 = vmatprep.subr.mxu0 %v287
    %615 = vmatpush1.msra.mxu0 %v286
    %616 = vmatprep.subr.mxu0 %v535
    %617 = vmatpush2.msra.mxu0 %v534
    %618 = vmatprep.subr.mxu0 %v527
    %619 = vmatpush2.msra.mxu0 %v526
    %620 = vmatprep.subr.mxu0 %v519
    %621 = vmatpush2.msra.mxu0 %v518
    %622 = vmatprep.subr.mxu0 %v511
    %623 = vmatpush2.msra.mxu0 %v510
    %624 = vmatprep.subr.mxu0 %v503
    %625 = vmatpush2.msra.mxu0 %v502
    %626 = vmatprep.subr.mxu0 %v495
    %627 = vmatpush2.msra.mxu0 %v494
    %628 = vmatprep.subr.mxu0 %v487
    %629 = vmatpush2.msra.mxu0 %v486
    %630 = vmatprep.subr.mxu0 %v479
    %631 = vmatpush2.msra.mxu0 %v478
    %632 = vmatprep.subr.mxu0 %v471
    %633 = vmatpush2.msra.mxu0 %v470
    %634 = vmatprep.subr.mxu0 %v463
    %635 = vmatpush2.msra.mxu0 %v462
    %636 = vmatprep.subr.mxu0 %v455
    %637 = vmatpush2.msra.mxu0 %v454
    %638 = vmatprep.subr.mxu0 %v447
    %639 = vmatpush2.msra.mxu0 %v446
    %640 = vmatprep.subr.mxu0 %v439
    %641 = vmatpush2.msra.mxu0 %v438
    %642 = vmatprep.subr.mxu0 %v431
    %643 = vmatpush2.msra.mxu0 %v430
    %644 = vmatprep.subr.mxu0 %v423
    %645 = vmatpush2.msra.mxu0 %v422
    %646 = vmatprep.subr.mxu0 %v415
    %647 = vmatpush2.msra.mxu0 %v414
    %648 = vmatprep.mubr.f32.mxu0 %v283
    %649 = vmatmul.mubr.f32.gmra.mxu0 %v282
    %v650 = vpop.f32.mrf.mxu0
    %v651 = vadd.f32 %v547, %v650
    %v652 = vpop.f32.mrf.mxu0
    %v653 = vadd.f32 %v551, %v652
    %654 = vmatprep.mubr.f32.mxu0 %v285
    %655 = vmatmul.mubr.f32.gmra.mxu0 %v284
    %v656 = vpop.f32.mrf.mxu0
    %v657 = vadd.f32 %v547, %v656
    %v658 = vpop.f32.mrf.mxu0
    %v659 = vadd.f32 %v551, %v658
    %660 = vdwg.mxu0
    %661 = vmatprep.subr.mxu0 %v409
    %662 = vmatpush1.msra.mxu0 %v408
    %663 = vmatprep.subr.mxu0 %v401
    %664 = vmatpush1.msra.mxu0 %v400
    %665 = vmatprep.subr.mxu0 %v393
    %666 = vmatpush1.msra.mxu0 %v392
    %667 = vmatprep.subr.mxu0 %v385
    %668 = vmatpush1.msra.mxu0 %v384
    %669 = vmatprep.subr.mxu0 %v377
    %670 = vmatpush1.msra.mxu0 %v376
    %671 = vmatprep.subr.mxu0 %v369
    %672 = vmatpush1.msra.mxu0 %v368
    %673 = vmatprep.subr.mxu0 %v361
    %674 = vmatpush1.msra.mxu0 %v360
    %675 = vmatprep.subr.mxu0 %v353
    %676 = vmatpush1.msra.mxu0 %v352
    %677 = vmatprep.subr.mxu0 %v345
    %678 = vmatpush1.msra.mxu0 %v344
    %679 = vmatprep.subr.mxu0 %v337
    %680 = vmatpush1.msra.mxu0 %v336
    %681 = vmatprep.subr.mxu0 %v329
    %682 = vmatpush1.msra.mxu0 %v328
    %683 = vmatprep.subr.mxu0 %v321
    %684 = vmatpush1.msra.mxu0 %v320
    %685 = vmatprep.subr.mxu0 %v313
    %686 = vmatpush1.msra.mxu0 %v312
    %687 = vmatprep.subr.mxu0 %v305
    %688 = vmatpush1.msra.mxu0 %v304
    %689 = vmatprep.subr.mxu0 %v297
    %690 = vmatpush1.msra.mxu0 %v296
    %691 = vmatprep.subr.mxu0 %v289
    %692 = vmatpush1.msra.mxu0 %v288
    %693 = vmatprep.subr.mxu0 %v537
    %694 = vmatpush2.msra.mxu0 %v536
    %695 = vmatprep.subr.mxu0 %v529
    %696 = vmatpush2.msra.mxu0 %v528
    %697 = vmatprep.subr.mxu0 %v521
    %698 = vmatpush2.msra.mxu0 %v520
    %699 = vmatprep.subr.mxu0 %v513
    %700 = vmatpush2.msra.mxu0 %v512
    %701 = vmatprep.subr.mxu0 %v505
    %702 = vmatpush2.msra.mxu0 %v504
    %703 = vmatprep.subr.mxu0 %v497
    %704 = vmatpush2.msra.mxu0 %v496
    %705 = vmatprep.subr.mxu0 %v489
    %706 = vmatpush2.msra.mxu0 %v488
    %707 = vmatprep.subr.mxu0 %v481
    %708 = vmatpush2.msra.mxu0 %v480
    %709 = vmatprep.subr.mxu0 %v473
    %710 = vmatpush2.msra.mxu0 %v472
    %711 = vmatprep.subr.mxu0 %v465
    %712 = vmatpush2.msra.mxu0 %v464
    %713 = vmatprep.subr.mxu0 %v457
    %714 = vmatpush2.msra.mxu0 %v456
    %715 = vmatprep.subr.mxu0 %v449
    %716 = vmatpush2.msra.mxu0 %v448
    %717 = vmatprep.subr.mxu0 %v441
    %718 = vmatpush2.msra.mxu0 %v440
    %719 = vmatprep.subr.mxu0 %v433
    %720 = vmatpush2.msra.mxu0 %v432
    %721 = vmatprep.subr.mxu0 %v425
    %722 = vmatpush2.msra.mxu0 %v424
    %723 = vmatprep.subr.mxu0 %v417
    %724 = vmatpush2.msra.mxu0 %v416
    %725 = vmatprep.mubr.f32.mxu0 %v283
    %726 = vmatmul.mubr.f32.gmra.mxu0 %v282
    %v727 = vpop.f32.mrf.mxu0
    %v728 = vadd.f32 %v555, %v727
    %v729 = vpop.f32.mrf.mxu0
    %v730 = vadd.f32 %v559, %v729
    %731 = vmatprep.mubr.f32.mxu0 %v285
    %732 = vmatmul.mubr.f32.gmra.mxu0 %v284
    %v733 = vpop.f32.mrf.mxu0
    %v734 = vadd.f32 %v555, %v733
    %v735 = vpop.f32.mrf.mxu0
    %v736 = vadd.f32 %v559, %v735
    %737 = vdwg.mxu0
    %738 = vmatprep.subr.mxu0 %v411
    %739 = vmatpush1.msra.mxu0 %v410
    %740 = vmatprep.subr.mxu0 %v403
    %741 = vmatpush1.msra.mxu0 %v402
    %742 = vmatprep.subr.mxu0 %v395
    %743 = vmatpush1.msra.mxu0 %v394
    %744 = vmatprep.subr.mxu0 %v387
    %745 = vmatpush1.msra.mxu0 %v386
    %746 = vmatprep.subr.mxu0 %v379
    %747 = vmatpush1.msra.mxu0 %v378
    %748 = vmatprep.subr.mxu0 %v371
    %749 = vmatpush1.msra.mxu0 %v370
    %750 = vmatprep.subr.mxu0 %v363
    %751 = vmatpush1.msra.mxu0 %v362
    %752 = vmatprep.subr.mxu0 %v355
    %753 = vmatpush1.msra.mxu0 %v354
    %754 = vmatprep.subr.mxu0 %v347
    %755 = vmatpush1.msra.mxu0 %v346
    %756 = vmatprep.subr.mxu0 %v339
    %757 = vmatpush1.msra.mxu0 %v338
    %758 = vmatprep.subr.mxu0 %v331
    %759 = vmatpush1.msra.mxu0 %v330
    %760 = vmatprep.subr.mxu0 %v323
    %761 = vmatpush1.msra.mxu0 %v322
    %762 = vmatprep.subr.mxu0 %v315
    %763 = vmatpush1.msra.mxu0 %v314
    %764 = vmatprep.subr.mxu0 %v307
    %765 = vmatpush1.msra.mxu0 %v306
    %766 = vmatprep.subr.mxu0 %v299
    %767 = vmatpush1.msra.mxu0 %v298
    %768 = vmatprep.subr.mxu0 %v291
    %769 = vmatpush1.msra.mxu0 %v290
    %770 = vmatprep.subr.mxu0 %v539
    %771 = vmatpush2.msra.mxu0 %v538
    %772 = vmatprep.subr.mxu0 %v531
    %773 = vmatpush2.msra.mxu0 %v530
    %774 = vmatprep.subr.mxu0 %v523
    %775 = vmatpush2.msra.mxu0 %v522
    %776 = vmatprep.subr.mxu0 %v515
    %777 = vmatpush2.msra.mxu0 %v514
    %778 = vmatprep.subr.mxu0 %v507
    %779 = vmatpush2.msra.mxu0 %v506
    %780 = vmatprep.subr.mxu0 %v499
    %781 = vmatpush2.msra.mxu0 %v498
    %782 = vmatprep.subr.mxu0 %v491
    %783 = vmatpush2.msra.mxu0 %v490
    %784 = vmatprep.subr.mxu0 %v483
    %785 = vmatpush2.msra.mxu0 %v482
    %786 = vmatprep.subr.mxu0 %v475
    %787 = vmatpush2.msra.mxu0 %v474
    %788 = vmatprep.subr.mxu0 %v467
    %789 = vmatpush2.msra.mxu0 %v466
    %790 = vmatprep.subr.mxu0 %v459
    %791 = vmatpush2.msra.mxu0 %v458
    %792 = vmatprep.subr.mxu0 %v451
    %793 = vmatpush2.msra.mxu0 %v450
    %794 = vmatprep.subr.mxu0 %v443
    %795 = vmatpush2.msra.mxu0 %v442
    %796 = vmatprep.subr.mxu0 %v435
    %797 = vmatpush2.msra.mxu0 %v434
    %798 = vmatprep.subr.mxu0 %v427
    %799 = vmatpush2.msra.mxu0 %v426
    %800 = vmatprep.subr.mxu0 %v419
    %801 = vmatpush2.msra.mxu0 %v418
    %802 = vmatprep.mubr.f32.mxu0 %v283
    %803 = vmatmul.mubr.f32.gmra.mxu0 %v282
    %v804 = vpop.f32.mrf.mxu0
    %v805 = vadd.f32 %v563, %v804
    %v806 = vpop.f32.mrf.mxu0
    %v807 = vadd.f32 %v567, %v806
    %808 = vmatprep.mubr.f32.mxu0 %v285
    %809 = vmatmul.mubr.f32.gmra.mxu0 %v284
    %v810 = vpop.f32.mrf.mxu0
    %v811 = vadd.f32 %v563, %v810
    %v812 = vpop.f32.mrf.mxu0
    %v813 = vadd.f32 %v567, %v812
    %814 = vdwg.mxu0
    %815 = vmatprep.subr.mxu0 %v413
    %816 = vmatpush1.msra.mxu0 %v412
    %817 = vmatprep.subr.mxu0 %v405
    %818 = vmatpush1.msra.mxu0 %v404
    %819 = vmatprep.subr.mxu0 %v397
    %820 = vmatpush1.msra.mxu0 %v396
    %821 = vmatprep.subr.mxu0 %v389
    %822 = vmatpush1.msra.mxu0 %v388
    %823 = vmatprep.subr.mxu0 %v381
    %824 = vmatpush1.msra.mxu0 %v380
    %825 = vmatprep.subr.mxu0 %v373
    %826 = vmatpush1.msra.mxu0 %v372
    %827 = vmatprep.subr.mxu0 %v365
    %828 = vmatpush1.msra.mxu0 %v364
    %829 = vmatprep.subr.mxu0 %v357
    %830 = vmatpush1.msra.mxu0 %v356
    %831 = vmatprep.subr.mxu0 %v349
    %832 = vmatpush1.msra.mxu0 %v348
    %833 = vmatprep.subr.mxu0 %v341
    %834 = vmatpush1.msra.mxu0 %v340
    %835 = vmatprep.subr.mxu0 %v333
    %836 = vmatpush1.msra.mxu0 %v332
    %837 = vmatprep.subr.mxu0 %v325
    %838 = vmatpush1.msra.mxu0 %v324
    %839 = vmatprep.subr.mxu0 %v317
    %840 = vmatpush1.msra.mxu0 %v316
    %841 = vmatprep.subr.mxu0 %v309
    %842 = vmatpush1.msra.mxu0 %v308
    %843 = vmatprep.subr.mxu0 %v301
    %844 = vmatpush1.msra.mxu0 %v300
    %845 = vmatprep.subr.mxu0 %v293
    %846 = vmatpush1.msra.mxu0 %v292
    %847 = vmatprep.subr.mxu0 %v541
    %848 = vmatpush2.msra.mxu0 %v540
    %849 = vmatprep.subr.mxu0 %v533
    %850 = vmatpush2.msra.mxu0 %v532
    %851 = vmatprep.subr.mxu0 %v525
    %852 = vmatpush2.msra.mxu0 %v524
    %853 = vmatprep.subr.mxu0 %v517
    %854 = vmatpush2.msra.mxu0 %v516
    %855 = vmatprep.subr.mxu0 %v509
    %856 = vmatpush2.msra.mxu0 %v508
    %857 = vmatprep.subr.mxu0 %v501
    %858 = vmatpush2.msra.mxu0 %v500
    %859 = vmatprep.subr.mxu0 %v493
    %860 = vmatpush2.msra.mxu0 %v492
    %861 = vmatprep.subr.mxu0 %v485
    %862 = vmatpush2.msra.mxu0 %v484
    %863 = vmatprep.subr.mxu0 %v477
    %864 = vmatpush2.msra.mxu0 %v476
    %865 = vmatprep.subr.mxu0 %v469
    %866 = vmatpush2.msra.mxu0 %v468
    %867 = vmatprep.subr.mxu0 %v461
    %868 = vmatpush2.msra.mxu0 %v460
    %869 = vmatprep.subr.mxu0 %v453
    %870 = vmatpush2.msra.mxu0 %v452
    %871 = vmatprep.subr.mxu0 %v445
    %872 = vmatpush2.msra.mxu0 %v444
    %873 = vmatprep.subr.mxu0 %v437
    %874 = vmatpush2.msra.mxu0 %v436
    %875 = vmatprep.subr.mxu0 %v429
    %876 = vmatpush2.msra.mxu0 %v428
    %877 = vmatprep.subr.mxu0 %v421
    %878 = vmatpush2.msra.mxu0 %v420
    %879 = vmatprep.mubr.f32.mxu0 %v283
    %880 = vmatmul.mubr.f32.gmra.mxu0 %v282
    %v881 = vpop.f32.mrf.mxu0
    %v882 = vadd.f32 %v571, %v881
    %v883 = vpop.f32.mrf.mxu0
    %v884 = vadd.f32 %v575, %v883
    %885 = vmatprep.mubr.f32.mxu0 %v285
    %886 = vmatmul.mubr.f32.gmra.mxu0 %v284
    %v887 = vpop.f32.mrf.mxu0
    %v888 = vadd.f32 %v571, %v887
    %v889 = vpop.f32.mrf.mxu0
    %v890 = vadd.f32 %v575, %v889
    %891 = vdwg.mxu0
    %v892 = vmax.f32 %v651, 0.0
    %v893 = vmax.f32 %v653, 0.0
    %v894 = vmax.f32 %v728, 0.0
    %v895 = vmax.f32 %v730, 0.0
    %v896 = vmax.f32 %v805, 0.0
    %v897 = vmax.f32 %v807, 0.0
    %v898 = vmax.f32 %v882, 0.0
    %v899 = vmax.f32 %v884, 0.0
    %v900 = vmax.f32 %v657, 0.0
    %v901 = vmax.f32 %v659, 0.0
    %v902 = vmax.f32 %v734, 0.0
    %v903 = vmax.f32 %v736, 0.0
    %v904 = vmax.f32 %v811, 0.0
    %v905 = vmax.f32 %v813, 0.0
    %v906 = vmax.f32 %v888, 0.0
    %v907 = vmax.f32 %v890, 0.0
    %v908 = vld [vmem:[#allocation2] sm:$0xff]
    %v909 = vld [vmem:[#allocation2 + $0x8] sm:$0xff]
    %v910 = vld [vmem:[#allocation2 + $0x10] sm:$0xff]
    %v911 = vld [vmem:[#allocation2 + $0x18] sm:$0xff]
    %v912 = vld [vmem:[#allocation2 + $0x20] sm:$0xff]
    %v913 = vld [vmem:[#allocation2 + $0x28] sm:$0xff]
    %v914 = vld [vmem:[#allocation2 + $0x30] sm:$0xff]
    %v915 = vld [vmem:[#allocation2 + $0x38] sm:$0xff]
    %v916 = vld [vmem:[#allocation2 + $0x40] sm:$0xff]
    %v917 = vld [vmem:[#allocation2 + $0x48] sm:$0xff]
    %v918 = vld [vmem:[#allocation2 + $0x50] sm:$0xff]
    %v919 = vld [vmem:[#allocation2 + $0x58] sm:$0xff]
    %v920 = vld [vmem:[#allocation2 + $0x60] sm:$0xff]
    %v921 = vld [vmem:[#allocation2 + $0x68] sm:$0xff]
    %v922 = vld [vmem:[#allocation2 + $0x70] sm:$0xff]
    %v923 = vld [vmem:[#allocation2 + $0x78] sm:$0xff]
    %v924 = vld [vmem:[#allocation2 + $0x80] sm:$0xff]
    %v925 = vld [vmem:[#allocation2 + $0x88] sm:$0xff]
    %v926 = vld [vmem:[#allocation2 + $0x90] sm:$0xff]
    %v927 = vld [vmem:[#allocation2 + $0x98] sm:$0xff]
    %v928 = vld [vmem:[#allocation2 + $0xa0] sm:$0xff]
    %v929 = vld [vmem:[#allocation2 + $0xa8] sm:$0xff]
    %v930 = vld [vmem:[#allocation2 + $0xb0] sm:$0xff]
    %v931 = vld [vmem:[#allocation2 + $0xb8] sm:$0xff]
    %v932 = vld [vmem:[#allocation2 + $0xc0] sm:$0xff]
    %v933 = vld [vmem:[#allocation2 + $0xc8] sm:$0xff]
    %v934 = vld [vmem:[#allocation2 + $0xd0] sm:$0xff]
    %v935 = vld [vmem:[#allocation2 + $0xd8] sm:$0xff]
    %v936 = vld [vmem:[#allocation2 + $0xe0] sm:$0xff]
    %v937 = vld [vmem:[#allocation2 + $0xe8] sm:$0xff]
    %v938 = vld [vmem:[#allocation2 + $0xf0] sm:$0xff]
    %v939 = vld [vmem:[#allocation2 + $0xf8] sm:$0xff]
    %v940 = vld [vmem:[#allocation2 + $0x100] sm:$0xff]
    %v941 = vld [vmem:[#allocation2 + $0x108] sm:$0xff]
    %v942 = vld [vmem:[#allocation2 + $0x110] sm:$0xff]
    %v943 = vld [vmem:[#allocation2 + $0x118] sm:$0xff]
    %v944 = vld [vmem:[#allocation2 + $0x120] sm:$0xff]
    %v945 = vld [vmem:[#allocation2 + $0x128] sm:$0xff]
    %v946 = vld [vmem:[#allocation2 + $0x130] sm:$0xff]
    %v947 = vld [vmem:[#allocation2 + $0x138] sm:$0xff]
    %v948 = vld [vmem:[#allocation2 + $0x140] sm:$0xff]
    %v949 = vld [vmem:[#allocation2 + $0x148] sm:$0xff]
    %v950 = vld [vmem:[#allocation2 + $0x150] sm:$0xff]
    %v951 = vld [vmem:[#allocation2 + $0x158] sm:$0xff]
    %v952 = vld [vmem:[#allocation2 + $0x160] sm:$0xff]
    %v953 = vld [vmem:[#allocation2 + $0x168] sm:$0xff]
    %v954 = vld [vmem:[#allocation2 + $0x170] sm:$0xff]
    %v955 = vld [vmem:[#allocation2 + $0x178] sm:$0xff]
    %v956 = vld [vmem:[#allocation2 + $0x180] sm:$0xff]
    %v957 = vld [vmem:[#allocation2 + $0x188] sm:$0xff]
    %v958 = vld [vmem:[#allocation2 + $0x190] sm:$0xff]
    %v959 = vld [vmem:[#allocation2 + $0x198] sm:$0xff]
    %v960 = vld [vmem:[#allocation2 + $0x1a0] sm:$0xff]
    %v961 = vld [vmem:[#allocation2 + $0x1a8] sm:$0xff]
    %v962 = vld [vmem:[#allocation2 + $0x1b0] sm:$0xff]
    %v963 = vld [vmem:[#allocation2 + $0x1b8] sm:$0xff]
    %v964 = vld [vmem:[#allocation2 + $0x1c0] sm:$0xff]
    %v965 = vld [vmem:[#allocation2 + $0x1c8] sm:$0xff]
    %v966 = vld [vmem:[#allocation2 + $0x1d0] sm:$0xff]
    %v967 = vld [vmem:[#allocation2 + $0x1d8] sm:$0xff]
    %v968 = vld [vmem:[#allocation2 + $0x1e0] sm:$0xff]
    %v969 = vld [vmem:[#allocation2 + $0x1e8] sm:$0xff]
    %v970 = vld [vmem:[#allocation2 + $0x1f0] sm:$0xff]
    %v971 = vld [vmem:[#allocation2 + $0x1f8] sm:$0xff]
    %v972 = vld [vmem:[#allocation2 + $0x200] sm:$0xff]
    %v973 = vld [vmem:[#allocation2 + $0x208] sm:$0xff]
    %v974 = vld [vmem:[#allocation2 + $0x210] sm:$0xff]
    %v975 = vld [vmem:[#allocation2 + $0x218] sm:$0xff]
    %v976 = vld [vmem:[#allocation2 + $0x220] sm:$0xff]
    %v977 = vld [vmem:[#allocation2 + $0x228] sm:$0xff]
    %v978 = vld [vmem:[#allocation2 + $0x230] sm:$0xff]
    %v979 = vld [vmem:[#allocation2 + $0x238] sm:$0xff]
    %v980 = vld [vmem:[#allocation2 + $0x240] sm:$0xff]
    %v981 = vld [vmem:[#allocation2 + $0x248] sm:$0xff]
    %v982 = vld [vmem:[#allocation2 + $0x250] sm:$0xff]
    %v983 = vld [vmem:[#allocation2 + $0x258] sm:$0xff]
    %v984 = vld [vmem:[#allocation2 + $0x260] sm:$0xff]
    %v985 = vld [vmem:[#allocation2 + $0x268] sm:$0xff]
    %v986 = vld [vmem:[#allocation2 + $0x270] sm:$0xff]
    %v987 = vld [vmem:[#allocation2 + $0x278] sm:$0xff]
    %v988 = vld [vmem:[#allocation2 + $0x280] sm:$0xff]
    %v989 = vld [vmem:[#allocation2 + $0x288] sm:$0xff]
    %v990 = vld [vmem:[#allocation2 + $0x290] sm:$0xff]
    %v991 = vld [vmem:[#allocation2 + $0x298] sm:$0xff]
    %v992 = vld [vmem:[#allocation2 + $0x2a0] sm:$0xff]
    %v993 = vld [vmem:[#allocation2 + $0x2a8] sm:$0xff]
    %v994 = vld [vmem:[#allocation2 + $0x2b0] sm:$0xff]
    %v995 = vld [vmem:[#allocation2 + $0x2b8] sm:$0xff]
    %v996 = vld [vmem:[#allocation2 + $0x2c0] sm:$0xff]
    %v997 = vld [vmem:[#allocation2 + $0x2c8] sm:$0xff]
    %v998 = vld [vmem:[#allocation2 + $0x2d0] sm:$0xff]
    %v999 = vld [vmem:[#allocation2 + $0x2d8] sm:$0xff]
    %v1000 = vld [vmem:[#allocation2 + $0x2e0] sm:$0xff]
    %v1001 = vld [vmem:[#allocation2 + $0x2e8] sm:$0xff]
    %v1002 = vld [vmem:[#allocation2 + $0x2f0] sm:$0xff]
    %v1003 = vld [vmem:[#allocation2 + $0x2f8] sm:$0xff]
    %v1004 = vld [vmem:[#allocation2 + $0x300] sm:$0xff]
    %v1005 = vld [vmem:[#allocation2 + $0x308] sm:$0xff]
    %v1006 = vld [vmem:[#allocation2 + $0x310] sm:$0xff]
    %v1007 = vld [vmem:[#allocation2 + $0x318] sm:$0xff]
    %v1008 = vld [vmem:[#allocation2 + $0x320] sm:$0xff]
    %v1009 = vld [vmem:[#allocation2 + $0x328] sm:$0xff]
    %v1010 = vld [vmem:[#allocation2 + $0x330] sm:$0xff]
    %v1011 = vld [vmem:[#allocation2 + $0x338] sm:$0xff]
    %v1012 = vld [vmem:[#allocation2 + $0x340] sm:$0xff]
    %v1013 = vld [vmem:[#allocation2 + $0x348] sm:$0xff]
    %v1014 = vld [vmem:[#allocation2 + $0x350] sm:$0xff]
    %v1015 = vld [vmem:[#allocation2 + $0x358] sm:$0xff]
    %v1016 = vld [vmem:[#allocation2 + $0x360] sm:$0xff]
    %v1017 = vld [vmem:[#allocation2 + $0x368] sm:$0xff]
    %v1018 = vld [vmem:[#allocation2 + $0x370] sm:$0xff]
    %v1019 = vld [vmem:[#allocation2 + $0x378] sm:$0xff]
    %v1020 = vld [vmem:[#allocation2 + $0x380] sm:$0xff]
    %v1021 = vld [vmem:[#allocation2 + $0x388] sm:$0xff]
    %v1022 = vld [vmem:[#allocation2 + $0x390] sm:$0xff]
    %v1023 = vld [vmem:[#allocation2 + $0x398] sm:$0xff]
    %v1024 = vld [vmem:[#allocation2 + $0x3a0] sm:$0xff]
    %v1025 = vld [vmem:[#allocation2 + $0x3a8] sm:$0xff]
    %v1026 = vld [vmem:[#allocation2 + $0x3b0] sm:$0xff]
    %v1027 = vld [vmem:[#allocation2 + $0x3b8] sm:$0xff]
    %v1028 = vld [vmem:[#allocation2 + $0x3c0] sm:$0xff]
    %v1029 = vld [vmem:[#allocation2 + $0x3c8] sm:$0xff]
    %v1030 = vld [vmem:[#allocation2 + $0x3d0] sm:$0xff]
    %v1031 = vld [vmem:[#allocation2 + $0x3d8] sm:$0xff]
    %v1032 = vld [vmem:[#allocation2 + $0x3e0] sm:$0xff]
    %v1033 = vld [vmem:[#allocation2 + $0x3e8] sm:$0xff]
    %v1034 = vld [vmem:[#allocation2 + $0x3f0] sm:$0xff]
    %v1035 = vld [vmem:[#allocation2 + $0x3f8] sm:$0xff]
    %v1036 = vld [vmem:[#allocation2 + $0x400] sm:$0xff]
    %v1037 = vld [vmem:[#allocation2 + $0x408] sm:$0xff]
    %v1038 = vld [vmem:[#allocation2 + $0x410] sm:$0xff]
    %v1039 = vld [vmem:[#allocation2 + $0x418] sm:$0xff]
    %v1040 = vld [vmem:[#allocation2 + $0x420] sm:$0xff]
    %v1041 = vld [vmem:[#allocation2 + $0x428] sm:$0xff]
    %v1042 = vld [vmem:[#allocation2 + $0x430] sm:$0xff]
    %v1043 = vld [vmem:[#allocation2 + $0x438] sm:$0xff]
    %v1044 = vld [vmem:[#allocation2 + $0x440] sm:$0xff]
    %v1045 = vld [vmem:[#allocation2 + $0x448] sm:$0xff]
    %v1046 = vld [vmem:[#allocation2 + $0x450] sm:$0xff]
    %v1047 = vld [vmem:[#allocation2 + $0x458] sm:$0xff]
    %v1048 = vld [vmem:[#allocation2 + $0x460] sm:$0xff]
    %v1049 = vld [vmem:[#allocation2 + $0x468] sm:$0xff]
    %v1050 = vld [vmem:[#allocation2 + $0x470] sm:$0xff]
    %v1051 = vld [vmem:[#allocation2 + $0x478] sm:$0xff]
    %v1052 = vld [vmem:[#allocation2 + $0x480] sm:$0xff]
    %v1053 = vld [vmem:[#allocation2 + $0x488] sm:$0xff]
    %v1054 = vld [vmem:[#allocation2 + $0x490] sm:$0xff]
    %v1055 = vld [vmem:[#allocation2 + $0x498] sm:$0xff]
    %v1056 = vld [vmem:[#allocation2 + $0x4a0] sm:$0xff]
    %v1057 = vld [vmem:[#allocation2 + $0x4a8] sm:$0xff]
    %v1058 = vld [vmem:[#allocation2 + $0x4b0] sm:$0xff]
    %v1059 = vld [vmem:[#allocation2 + $0x4b8] sm:$0xff]
    %v1060 = vld [vmem:[#allocation2 + $0x4c0] sm:$0xff]
    %v1061 = vld [vmem:[#allocation2 + $0x4c8] sm:$0xff]
    %v1062 = vld [vmem:[#allocation2 + $0x4d0] sm:$0xff]
    %v1063 = vld [vmem:[#allocation2 + $0x4d8] sm:$0xff]
    %v1064 = vld [vmem:[#allocation2 + $0x4e0] sm:$0xff]
    %v1065 = vld [vmem:[#allocation2 + $0x4e8] sm:$0xff]
    %v1066 = vld [vmem:[#allocation2 + $0x4f0] sm:$0xff]
    %v1067 = vld [vmem:[#allocation2 + $0x4f8] sm:$0xff]
    %v1068 = vld [vmem:[#allocation2 + $0x500] sm:$0xff]
    %v1069 = vld [vmem:[#allocation2 + $0x508] sm:$0xff]
    %v1070 = vld [vmem:[#allocation2 + $0x510] sm:$0xff]
    %v1071 = vld [vmem:[#allocation2 + $0x518] sm:$0xff]
    %v1072 = vld [vmem:[#allocation2 + $0x520] sm:$0xff]
    %v1073 = vld [vmem:[#allocation2 + $0x528] sm:$0xff]
    %v1074 = vld [vmem:[#allocation2 + $0x530] sm:$0xff]
    %v1075 = vld [vmem:[#allocation2 + $0x538] sm:$0xff]
    %v1076 = vld [vmem:[#allocation2 + $0x540] sm:$0xff]
    %v1077 = vld [vmem:[#allocation2 + $0x548] sm:$0xff]
    %v1078 = vld [vmem:[#allocation2 + $0x550] sm:$0xff]
    %v1079 = vld [vmem:[#allocation2 + $0x558] sm:$0xff]
    %v1080 = vld [vmem:[#allocation2 + $0x560] sm:$0xff]
    %v1081 = vld [vmem:[#allocation2 + $0x568] sm:$0xff]
    %v1082 = vld [vmem:[#allocation2 + $0x570] sm:$0xff]
    %v1083 = vld [vmem:[#allocation2 + $0x578] sm:$0xff]
    %v1084 = vld [vmem:[#allocation2 + $0x580] sm:$0xff]
    %v1085 = vld [vmem:[#allocation2 + $0x588] sm:$0xff]
    %v1086 = vld [vmem:[#allocation2 + $0x590] sm:$0xff]
    %v1087 = vld [vmem:[#allocation2 + $0x598] sm:$0xff]
    %v1088 = vld [vmem:[#allocation2 + $0x5a0] sm:$0xff]
    %v1089 = vld [vmem:[#allocation2 + $0x5a8] sm:$0xff]
    %v1090 = vld [vmem:[#allocation2 + $0x5b0] sm:$0xff]
    %v1091 = vld [vmem:[#allocation2 + $0x5b8] sm:$0xff]
    %v1092 = vld [vmem:[#allocation2 + $0x5c0] sm:$0xff]
    %v1093 = vld [vmem:[#allocation2 + $0x5c8] sm:$0xff]
    %v1094 = vld [vmem:[#allocation2 + $0x5d0] sm:$0xff]
    %v1095 = vld [vmem:[#allocation2 + $0x5d8] sm:$0xff]
    %v1096 = vld [vmem:[#allocation2 + $0x5e0] sm:$0xff]
    %v1097 = vld [vmem:[#allocation2 + $0x5e8] sm:$0xff]
    %v1098 = vld [vmem:[#allocation2 + $0x5f0] sm:$0xff]
    %v1099 = vld [vmem:[#allocation2 + $0x5f8] sm:$0xff]
    %v1100 = vld [vmem:[#allocation2 + $0x600] sm:$0xff]
    %v1101 = vld [vmem:[#allocation2 + $0x608] sm:$0xff]
    %v1102 = vld [vmem:[#allocation2 + $0x610] sm:$0xff]
    %v1103 = vld [vmem:[#allocation2 + $0x618] sm:$0xff]
    %v1104 = vld [vmem:[#allocation2 + $0x620] sm:$0xff]
    %v1105 = vld [vmem:[#allocation2 + $0x628] sm:$0xff]
    %v1106 = vld [vmem:[#allocation2 + $0x630] sm:$0xff]
    %v1107 = vld [vmem:[#allocation2 + $0x638] sm:$0xff]
    %v1108 = vld [vmem:[#allocation2 + $0x640] sm:$0xff]
    %v1109 = vld [vmem:[#allocation2 + $0x648] sm:$0xff]
    %v1110 = vld [vmem:[#allocation2 + $0x650] sm:$0xff]
    %v1111 = vld [vmem:[#allocation2 + $0x658] sm:$0xff]
    %v1112 = vld [vmem:[#allocation2 + $0x660] sm:$0xff]
    %v1113 = vld [vmem:[#allocation2 + $0x668] sm:$0xff]
    %v1114 = vld [vmem:[#allocation2 + $0x670] sm:$0xff]
    %v1115 = vld [vmem:[#allocation2 + $0x678] sm:$0xff]
    %v1116 = vld [vmem:[#allocation2 + $0x680] sm:$0xff]
    %v1117 = vld [vmem:[#allocation2 + $0x688] sm:$0xff]
    %v1118 = vld [vmem:[#allocation2 + $0x690] sm:$0xff]
    %v1119 = vld [vmem:[#allocation2 + $0x698] sm:$0xff]
    %v1120 = vld [vmem:[#allocation2 + $0x6a0] sm:$0xff]
    %v1121 = vld [vmem:[#allocation2 + $0x6a8] sm:$0xff]
    %v1122 = vld [vmem:[#allocation2 + $0x6b0] sm:$0xff]
    %v1123 = vld [vmem:[#allocation2 + $0x6b8] sm:$0xff]
    %v1124 = vld [vmem:[#allocation2 + $0x6c0] sm:$0xff]
    %v1125 = vld [vmem:[#allocation2 + $0x6c8] sm:$0xff]
    %v1126 = vld [vmem:[#allocation2 + $0x6d0] sm:$0xff]
    %v1127 = vld [vmem:[#allocation2 + $0x6d8] sm:$0xff]
    %v1128 = vld [vmem:[#allocation2 + $0x6e0] sm:$0xff]
    %v1129 = vld [vmem:[#allocation2 + $0x6e8] sm:$0xff]
    %v1130 = vld [vmem:[#allocation2 + $0x6f0] sm:$0xff]
    %v1131 = vld [vmem:[#allocation2 + $0x6f8] sm:$0xff]
    %v1132 = vld [vmem:[#allocation2 + $0x700] sm:$0xff]
    %v1133 = vld [vmem:[#allocation2 + $0x708] sm:$0xff]
    %v1134 = vld [vmem:[#allocation2 + $0x710] sm:$0xff]
    %v1135 = vld [vmem:[#allocation2 + $0x718] sm:$0xff]
    %v1136 = vld [vmem:[#allocation2 + $0x720] sm:$0xff]
    %v1137 = vld [vmem:[#allocation2 + $0x728] sm:$0xff]
    %v1138 = vld [vmem:[#allocation2 + $0x730] sm:$0xff]
    %v1139 = vld [vmem:[#allocation2 + $0x738] sm:$0xff]
    %v1140 = vld [vmem:[#allocation2 + $0x740] sm:$0xff]
    %v1141 = vld [vmem:[#allocation2 + $0x748] sm:$0xff]
    %v1142 = vld [vmem:[#allocation2 + $0x750] sm:$0xff]
    %v1143 = vld [vmem:[#allocation2 + $0x758] sm:$0xff]
    %v1144 = vld [vmem:[#allocation2 + $0x760] sm:$0xff]
    %v1145 = vld [vmem:[#allocation2 + $0x768] sm:$0xff]
    %v1146 = vld [vmem:[#allocation2 + $0x770] sm:$0xff]
    %v1147 = vld [vmem:[#allocation2 + $0x778] sm:$0xff]
    %v1148 = vld [vmem:[#allocation2 + $0x780] sm:$0xff]
    %v1149 = vld [vmem:[#allocation2 + $0x788] sm:$0xff]
    %v1150 = vld [vmem:[#allocation2 + $0x790] sm:$0xff]
    %v1151 = vld [vmem:[#allocation2 + $0x798] sm:$0xff]
    %v1152 = vld [vmem:[#allocation2 + $0x7a0] sm:$0xff]
    %v1153 = vld [vmem:[#allocation2 + $0x7a8] sm:$0xff]
    %v1154 = vld [vmem:[#allocation2 + $0x7b0] sm:$0xff]
    %v1155 = vld [vmem:[#allocation2 + $0x7b8] sm:$0xff]
    %v1156 = vld [vmem:[#allocation2 + $0x7c0] sm:$0xff]
    %v1157 = vld [vmem:[#allocation2 + $0x7c8] sm:$0xff]
    %v1158 = vld [vmem:[#allocation2 + $0x7d0] sm:$0xff]
    %v1159 = vld [vmem:[#allocation2 + $0x7d8] sm:$0xff]
    %v1160 = vld [vmem:[#allocation2 + $0x7e0] sm:$0xff]
    %v1161 = vld [vmem:[#allocation2 + $0x7e8] sm:$0xff]
    %v1162 = vld [vmem:[#allocation2 + $0x7f0] sm:$0xff]
    %v1163 = vld [vmem:[#allocation2 + $0x7f8] sm:$0xff]
    %v1164 = vld [vmem:[%s9] sm:$0x3]
    %v1166 = vlaneseq
    %v1167 = vshrl.u32 %v1166, 7
    %v1168 = vsub.s32 0, %v1167
    %v1169 = vrot.slane %v1164, %v1168
    %v1170 = vlaneseq
    %v1171 = vshrl.u32 %v1170, 7
    %v1172 = vsub.s32 1, %v1171
    %v1173 = vrot.slane %v1164, %v1172
    %1176 = vmatprep.subr.mxu0 %v939
    %1177 = vmatpush1.msra.mxu0 %v938
    %1178 = vmatprep.subr.mxu0 %v937
    %1179 = vmatpush1.msra.mxu0 %v936
    %1180 = vmatprep.subr.mxu0 %v935
    %1181 = vmatpush1.msra.mxu0 %v934
    %1182 = vmatprep.subr.mxu0 %v933
    %1183 = vmatpush1.msra.mxu0 %v932
    %1184 = vmatprep.subr.mxu0 %v931
    %1185 = vmatpush1.msra.mxu0 %v930
    %1186 = vmatprep.subr.mxu0 %v929
    %1187 = vmatpush1.msra.mxu0 %v928
    %1188 = vmatprep.subr.mxu0 %v927
    %1189 = vmatpush1.msra.mxu0 %v926
    %1190 = vmatprep.subr.mxu0 %v925
    %1191 = vmatpush1.msra.mxu0 %v924
    %1192 = vmatprep.subr.mxu0 %v923
    %1193 = vmatpush1.msra.mxu0 %v922
    %1194 = vmatprep.subr.mxu0 %v921
    %1195 = vmatpush1.msra.mxu0 %v920
    %1196 = vmatprep.subr.mxu0 %v919
    %1197 = vmatpush1.msra.mxu0 %v918
    %1198 = vmatprep.subr.mxu0 %v917
    %1199 = vmatpush1.msra.mxu0 %v916
    %1200 = vmatprep.subr.mxu0 %v915
    %1201 = vmatpush1.msra.mxu0 %v914
    %1202 = vmatprep.subr.mxu0 %v913
    %1203 = vmatpush1.msra.mxu0 %v912
    %1204 = vmatprep.subr.mxu0 %v911
    %1205 = vmatpush1.msra.mxu0 %v910
    %1206 = vmatprep.subr.mxu0 %v909
    %1207 = vmatpush1.msra.mxu0 %v908
    %1208 = vmatprep.subr.mxu0 %v971
    %1209 = vmatpush2.msra.mxu0 %v970
    %1210 = vmatprep.subr.mxu0 %v969
    %1211 = vmatpush2.msra.mxu0 %v968
    %1212 = vmatprep.subr.mxu0 %v967
    %1213 = vmatpush2.msra.mxu0 %v966
    %1214 = vmatprep.subr.mxu0 %v965
    %1215 = vmatpush2.msra.mxu0 %v964
    %1216 = vmatprep.subr.mxu0 %v963
    %1217 = vmatpush2.msra.mxu0 %v962
    %1218 = vmatprep.subr.mxu0 %v961
    %1219 = vmatpush2.msra.mxu0 %v960
    %1220 = vmatprep.subr.mxu0 %v959
    %1221 = vmatpush2.msra.mxu0 %v958
    %1222 = vmatprep.subr.mxu0 %v957
    %1223 = vmatpush2.msra.mxu0 %v956
    %1224 = vmatprep.subr.mxu0 %v955
    %1225 = vmatpush2.msra.mxu0 %v954
    %1226 = vmatprep.subr.mxu0 %v953
    %1227 = vmatpush2.msra.mxu0 %v952
    %1228 = vmatprep.subr.mxu0 %v951
    %1229 = vmatpush2.msra.mxu0 %v950
    %1230 = vmatprep.subr.mxu0 %v949
    %1231 = vmatpush2.msra.mxu0 %v948
    %1232 = vmatprep.subr.mxu0 %v947
    %1233 = vmatpush2.msra.mxu0 %v946
    %1234 = vmatprep.subr.mxu0 %v945
    %1235 = vmatpush2.msra.mxu0 %v944
    %1236 = vmatprep.subr.mxu0 %v943
    %1237 = vmatpush2.msra.mxu0 %v942
    %1238 = vmatprep.subr.mxu0 %v941
    %1239 = vmatpush2.msra.mxu0 %v940
    %1240 = vmatprep.mubr.f32.mxu0 %v893
    %1241 = vmatmul.mubr.f32.gmra.mxu0 %v892
    %v1242 = vpop.f32.mrf.mxu0
    %v1243 = vadd.f32 %v1169, %v1242
    %v1244 = vpop.f32.mrf.mxu0
    %v1245 = vadd.f32 %v1173, %v1244
    %1246 = vmatprep.mubr.f32.mxu0 %v901
    %1247 = vmatmul.mubr.f32.gmra.mxu0 %v900
    %v1248 = vpop.f32.mrf.mxu0
    %v1249 = vadd.f32 %v1169, %v1248
    %v1250 = vpop.f32.mrf.mxu0
    %v1251 = vadd.f32 %v1173, %v1250
    %1252 = vdwg.mxu0
    %1253 = vmatprep.subr.mxu0 %v1003
    %1254 = vmatpush1.msra.mxu0 %v1002
    %1255 = vmatprep.subr.mxu0 %v1001
    %1256 = vmatpush1.msra.mxu0 %v1000
    %1257 = vmatprep.subr.mxu0 %v999
    %1258 = vmatpush1.msra.mxu0 %v998
    %1259 = vmatprep.subr.mxu0 %v997
    %1260 = vmatpush1.msra.mxu0 %v996
    %1261 = vmatprep.subr.mxu0 %v995
    %1262 = vmatpush1.msra.mxu0 %v994
    %1263 = vmatprep.subr.mxu0 %v993
    %1264 = vmatpush1.msra.mxu0 %v992
    %1265 = vmatprep.subr.mxu0 %v991
    %1266 = vmatpush1.msra.mxu0 %v990
    %1267 = vmatprep.subr.mxu0 %v989
    %1268 = vmatpush1.msra.mxu0 %v988
    %1269 = vmatprep.subr.mxu0 %v987
    %1270 = vmatpush1.msra.mxu0 %v986
    %1271 = vmatprep.subr.mxu0 %v985
    %1272 = vmatpush1.msra.mxu0 %v984
    %1273 = vmatprep.subr.mxu0 %v983
    %1274 = vmatpush1.msra.mxu0 %v982
    %1275 = vmatprep.subr.mxu0 %v981
    %1276 = vmatpush1.msra.mxu0 %v980
    %1277 = vmatprep.subr.mxu0 %v979
    %1278 = vmatpush1.msra.mxu0 %v978
    %1279 = vmatprep.subr.mxu0 %v977
    %1280 = vmatpush1.msra.mxu0 %v976
    %1281 = vmatprep.subr.mxu0 %v975
    %1282 = vmatpush1.msra.mxu0 %v974
    %1283 = vmatprep.subr.mxu0 %v973
    %1284 = vmatpush1.msra.mxu0 %v972
    %1285 = vmatprep.subr.mxu0 %v1035
    %1286 = vmatpush2.msra.mxu0 %v1034
    %1287 = vmatprep.subr.mxu0 %v1033
    %1288 = vmatpush2.msra.mxu0 %v1032
    %1289 = vmatprep.subr.mxu0 %v1031
    %1290 = vmatpush2.msra.mxu0 %v1030
    %1291 = vmatprep.subr.mxu0 %v1029
    %1292 = vmatpush2.msra.mxu0 %v1028
    %1293 = vmatprep.subr.mxu0 %v1027
    %1294 = vmatpush2.msra.mxu0 %v1026
    %1295 = vmatprep.subr.mxu0 %v1025
    %1296 = vmatpush2.msra.mxu0 %v1024
    %1297 = vmatprep.subr.mxu0 %v1023
    %1298 = vmatpush2.msra.mxu0 %v1022
    %1299 = vmatprep.subr.mxu0 %v1021
    %1300 = vmatpush2.msra.mxu0 %v1020
    %1301 = vmatprep.subr.mxu0 %v1019
    %1302 = vmatpush2.msra.mxu0 %v1018
    %1303 = vmatprep.subr.mxu0 %v1017
    %1304 = vmatpush2.msra.mxu0 %v1016
    %1305 = vmatprep.subr.mxu0 %v1015
    %1306 = vmatpush2.msra.mxu0 %v1014
    %1307 = vmatprep.subr.mxu0 %v1013
    %1308 = vmatpush2.msra.mxu0 %v1012
    %1309 = vmatprep.subr.mxu0 %v1011
    %1310 = vmatpush2.msra.mxu0 %v1010
    %1311 = vmatprep.subr.mxu0 %v1009
    %1312 = vmatpush2.msra.mxu0 %v1008
    %1313 = vmatprep.subr.mxu0 %v1007
    %1314 = vmatpush2.msra.mxu0 %v1006
    %1315 = vmatprep.subr.mxu0 %v1005
    %1316 = vmatpush2.msra.mxu0 %v1004
    %1317 = vmatprep.mubr.f32.mxu0 %v895
    %1318 = vmatmul.mubr.f32.gmra.mxu0 %v894
    %v1319 = vpop.f32.mrf.mxu0
    %v1320 = vadd.f32 %v1243, %v1319
    %v1321 = vpop.f32.mrf.mxu0
    %v1322 = vadd.f32 %v1245, %v1321
    %1323 = vmatprep.mubr.f32.mxu0 %v903
    %1324 = vmatmul.mubr.f32.gmra.mxu0 %v902
    %v1325 = vpop.f32.mrf.mxu0
    %v1326 = vadd.f32 %v1249, %v1325
    %v1327 = vpop.f32.mrf.mxu0
    %v1328 = vadd.f32 %v1251, %v1327
    %1329 = vdwg.mxu0
    %1330 = vmatprep.subr.mxu0 %v1067
    %1331 = vmatpush1.msra.mxu0 %v1066
    %1332 = vmatprep.subr.mxu0 %v1065
    %1333 = vmatpush1.msra.mxu0 %v1064
    %1334 = vmatprep.subr.mxu0 %v1063
    %1335 = vmatpush1.msra.mxu0 %v1062
    %1336 = vmatprep.subr.mxu0 %v1061
    %1337 = vmatpush1.msra.mxu0 %v1060
    %1338 = vmatprep.subr.mxu0 %v1059
    %1339 = vmatpush1.msra.mxu0 %v1058
    %1340 = vmatprep.subr.mxu0 %v1057
    %1341 = vmatpush1.msra.mxu0 %v1056
    %1342 = vmatprep.subr.mxu0 %v1055
    %1343 = vmatpush1.msra.mxu0 %v1054
    %1344 = vmatprep.subr.mxu0 %v1053
    %1345 = vmatpush1.msra.mxu0 %v1052
    %1346 = vmatprep.subr.mxu0 %v1051
    %1347 = vmatpush1.msra.mxu0 %v1050
    %1348 = vmatprep.subr.mxu0 %v1049
    %1349 = vmatpush1.msra.mxu0 %v1048
    %1350 = vmatprep.subr.mxu0 %v1047
    %1351 = vmatpush1.msra.mxu0 %v1046
    %1352 = vmatprep.subr.mxu0 %v1045
    %1353 = vmatpush1.msra.mxu0 %v1044
    %1354 = vmatprep.subr.mxu0 %v1043
    %1355 = vmatpush1.msra.mxu0 %v1042
    %1356 = vmatprep.subr.mxu0 %v1041
    %1357 = vmatpush1.msra.mxu0 %v1040
    %1358 = vmatprep.subr.mxu0 %v1039
    %1359 = vmatpush1.msra.mxu0 %v1038
    %1360 = vmatprep.subr.mxu0 %v1037
    %1361 = vmatpush1.msra.mxu0 %v1036
    %1362 = vmatprep.subr.mxu0 %v1099
    %1363 = vmatpush2.msra.mxu0 %v1098
    %1364 = vmatprep.subr.mxu0 %v1097
    %1365 = vmatpush2.msra.mxu0 %v1096
    %1366 = vmatprep.subr.mxu0 %v1095
    %1367 = vmatpush2.msra.mxu0 %v1094
    %1368 = vmatprep.subr.mxu0 %v1093
    %1369 = vmatpush2.msra.mxu0 %v1092
    %1370 = vmatprep.subr.mxu0 %v1091
    %1371 = vmatpush2.msra.mxu0 %v1090
    %1372 = vmatprep.subr.mxu0 %v1089
    %1373 = vmatpush2.msra.mxu0 %v1088
    %1374 = vmatprep.subr.mxu0 %v1087
    %1375 = vmatpush2.msra.mxu0 %v1086
    %1376 = vmatprep.subr.mxu0 %v1085
    %1377 = vmatpush2.msra.mxu0 %v1084
    %1378 = vmatprep.subr.mxu0 %v1083
    %1379 = vmatpush2.msra.mxu0 %v1082
    %1380 = vmatprep.subr.mxu0 %v1081
    %1381 = vmatpush2.msra.mxu0 %v1080
    %1382 = vmatprep.subr.mxu0 %v1079
    %1383 = vmatpush2.msra.mxu0 %v1078
    %1384 = vmatprep.subr.mxu0 %v1077
    %1385 = vmatpush2.msra.mxu0 %v1076
    %1386 = vmatprep.subr.mxu0 %v1075
    %1387 = vmatpush2.msra.mxu0 %v1074
    %1388 = vmatprep.subr.mxu0 %v1073
    %1389 = vmatpush2.msra.mxu0 %v1072
    %1390 = vmatprep.subr.mxu0 %v1071
    %1391 = vmatpush2.msra.mxu0 %v1070
    %1392 = vmatprep.subr.mxu0 %v1069
    %1393 = vmatpush2.msra.mxu0 %v1068
    %1394 = vmatprep.mubr.f32.mxu0 %v897
    %1395 = vmatmul.mubr.f32.gmra.mxu0 %v896
    %v1396 = vpop.f32.mrf.mxu0
    %v1397 = vadd.f32 %v1320, %v1396
    %v1398 = vpop.f32.mrf.mxu0
    %v1399 = vadd.f32 %v1322, %v1398
    %1400 = vmatprep.mubr.f32.mxu0 %v905
    %1401 = vmatmul.mubr.f32.gmra.mxu0 %v904
    %v1402 = vpop.f32.mrf.mxu0
    %v1403 = vadd.f32 %v1326, %v1402
    %v1404 = vpop.f32.mrf.mxu0
    %v1405 = vadd.f32 %v1328, %v1404
    %1406 = vdwg.mxu0
    %1407 = vmatprep.subr.mxu0 %v1131
    %1408 = vmatpush1.msra.mxu0 %v1130
    %1409 = vmatprep.subr.mxu0 %v1129
    %1410 = vmatpush1.msra.mxu0 %v1128
    %1411 = vmatprep.subr.mxu0 %v1127
    %1412 = vmatpush1.msra.mxu0 %v1126
    %1413 = vmatprep.subr.mxu0 %v1125
    %1414 = vmatpush1.msra.mxu0 %v1124
    %1415 = vmatprep.subr.mxu0 %v1123
    %1416 = vmatpush1.msra.mxu0 %v1122
    %1417 = vmatprep.subr.mxu0 %v1121
    %1418 = vmatpush1.msra.mxu0 %v1120
    %1419 = vmatprep.subr.mxu0 %v1119
    %1420 = vmatpush1.msra.mxu0 %v1118
    %1421 = vmatprep.subr.mxu0 %v1117
    %1422 = vmatpush1.msra.mxu0 %v1116
    %1423 = vmatprep.subr.mxu0 %v1115
    %1424 = vmatpush1.msra.mxu0 %v1114
    %1425 = vmatprep.subr.mxu0 %v1113
    %1426 = vmatpush1.msra.mxu0 %v1112
    %1427 = vmatprep.subr.mxu0 %v1111
    %1428 = vmatpush1.msra.mxu0 %v1110
    %1429 = vmatprep.subr.mxu0 %v1109
    %1430 = vmatpush1.msra.mxu0 %v1108
    %1431 = vmatprep.subr.mxu0 %v1107
    %1432 = vmatpush1.msra.mxu0 %v1106
    %1433 = vmatprep.subr.mxu0 %v1105
    %1434 = vmatpush1.msra.mxu0 %v1104
    %1435 = vmatprep.subr.mxu0 %v1103
    %1436 = vmatpush1.msra.mxu0 %v1102
    %1437 = vmatprep.subr.mxu0 %v1101
    %1438 = vmatpush1.msra.mxu0 %v1100
    %1439 = vmatprep.subr.mxu0 %v1163
    %1440 = vmatpush2.msra.mxu0 %v1162
    %1441 = vmatprep.subr.mxu0 %v1161
    %1442 = vmatpush2.msra.mxu0 %v1160
    %1443 = vmatprep.subr.mxu0 %v1159
    %1444 = vmatpush2.msra.mxu0 %v1158
    %1445 = vmatprep.subr.mxu0 %v1157
    %1446 = vmatpush2.msra.mxu0 %v1156
    %1447 = vmatprep.subr.mxu0 %v1155
    %1448 = vmatpush2.msra.mxu0 %v1154
    %1449 = vmatprep.subr.mxu0 %v1153
    %1450 = vmatpush2.msra.mxu0 %v1152
    %1451 = vmatprep.subr.mxu0 %v1151
    %1452 = vmatpush2.msra.mxu0 %v1150
    %1453 = vmatprep.subr.mxu0 %v1149
    %1454 = vmatpush2.msra.mxu0 %v1148
    %1455 = vmatprep.subr.mxu0 %v1147
    %1456 = vmatpush2.msra.mxu0 %v1146
    %1457 = vmatprep.subr.mxu0 %v1145
    %1458 = vmatpush2.msra.mxu0 %v1144
    %1459 = vmatprep.subr.mxu0 %v1143
    %1460 = vmatpush2.msra.mxu0 %v1142
    %1461 = vmatprep.subr.mxu0 %v1141
    %1462 = vmatpush2.msra.mxu0 %v1140
    %1463 = vmatprep.subr.mxu0 %v1139
    %1464 = vmatpush2.msra.mxu0 %v1138
    %1465 = vmatprep.subr.mxu0 %v1137
    %1466 = vmatpush2.msra.mxu0 %v1136
    %1467 = vmatprep.subr.mxu0 %v1135
    %1468 = vmatpush2.msra.mxu0 %v1134
    %1469 = vmatprep.subr.mxu0 %v1133
    %1470 = vmatpush2.msra.mxu0 %v1132
    %1471 = vmatprep.mubr.f32.mxu0 %v899
    %1472 = vmatmul.mubr.f32.gmra.mxu0 %v898
    %v1473 = vpop.f32.mrf.mxu0
    %v1474 = vadd.f32 %v1397, %v1473
    %v1475 = vpop.f32.mrf.mxu0
    %v1476 = vadd.f32 %v1399, %v1475
    %1477 = vmatprep.mubr.f32.mxu0 %v907
    %1478 = vmatmul.mubr.f32.gmra.mxu0 %v906
    %v1479 = vpop.f32.mrf.mxu0
    %v1480 = vadd.f32 %v1403, %v1479
    %v1481 = vpop.f32.mrf.mxu0
    %v1482 = vadd.f32 %v1405, %v1481
    %1483 = vdwg.mxu0
    %v1484 = vadd.f32 %v282, %v1474
    %v1485 = vadd.f32 %v283, %v1476
    %v1486 = vadd.f32 %v284, %v1480
    %v1487 = vadd.f32 %v285, %v1482
    %v1488 = vld [vmem:[%s10] sm:$0x3]
    %v1489 = vld [vmem:[%s11] sm:$0x3]
    %v1490 = vadd.f32 %v1484, %v1485
    %1491 = vadd.xlane.f32.xlu0 %v1490
    %v1492 = vpop.xlane.xlu0 %1491
    %v1493 = vadd.f32 %v1486, %v1487
    %1494 = vadd.xlane.f32.xlu0 %v1493
    %v1495 = vpop.xlane.xlu0 %1494
    %v1496 = vmul.f32 %v1492, %v229
    %v1497 = vmul.f32 %v1495, %v229
    %v1498 = vsub.f32 %v1484, %v1496
    %v1499 = vsub.f32 %v1485, %v1496
    %v1500 = vsub.f32 %v1486, %v1497
    %v1501 = vsub.f32 %v1487, %v1497
    %v1502 = vmul.f32 %v1498, %v1498
    %v1503 = vmul.f32 %v1499, %v1499
    %v1504 = vmul.f32 %v1500, %v1500
    %v1505 = vmul.f32 %v1501, %v1501
    %v1506 = vadd.f32 %v1502, %v1503
    %1507 = vadd.xlane.f32.xlu0 %v1506
    %v1508 = vpop.xlane.xlu0 %1507
    %v1509 = vadd.f32 %v1504, %v1505
    %1510 = vadd.xlane.f32.xlu0 %v1509
    %v1511 = vpop.xlane.xlu0 %1510
    %v1512 = vmul.f32 %v1508, %v229
    %v1513 = vmul.f32 %v1511, %v229
    %v1514 = vadd.f32 %v1512, 1e-05
    %v1515 = vadd.f32 %v1513, 1e-05
    %v1516 = vrsqrt.pop %v1514
    %v1517 = vrsqrt.pop %v1515
    %v1518 = vmul.f32 %v1498, %v1516
    %v1519 = vmul.f32 %v1499, %v1516
    %v1520 = vmul.f32 %v1500, %v1517
    %v1521 = vmul.f32 %v1501, %v1517
    %v1523 = vlaneseq
    %v1524 = vshrl.u32 %v1523, 7
    %v1525 = vsub.s32 0, %v1524
    %v1526 = vrot.slane %v1488, %v1525
    %v1527 = vlaneseq
    %v1528 = vshrl.u32 %v1527, 7
    %v1529 = vsub.s32 1, %v1528
    %v1530 = vrot.slane %v1488, %v1529
    %v1533 = vmul.f32 %v1518, %v1526
    %v1534 = vmul.f32 %v1519, %v1530
    %v1535 = vmul.f32 %v1520, %v1526
    %v1536 = vmul.f32 %v1521, %v1530
    %v1538 = vlaneseq
    %v1539 = vshrl.u32 %v1538, 7
    %v1540 = vsub.s32 0, %v1539
    %v1541 = vrot.slane %v1489, %v1540
    %v1542 = vlaneseq
    %v1543 = vshrl.u32 %v1542, 7
    %v1544 = vsub.s32 1, %v1543
    %v1545 = vrot.slane %v1489, %v1544
    %v1548 = vadd.f32 %v1533, %v1541
    %v1549 = vadd.f32 %v1534, %v1545
    %v1550 = vadd.f32 %v1535, %v1541
    %v1551 = vadd.f32 %v1536, %v1545
    %1552 = vst [vmem:[#allocation5] sm:$0xff] %v1548
    %1553 = vst [vmem:[#allocation5 + $0x8] sm:$0xff] %v1549
    %1554 = vst [vmem:[#allocation5 + $0x10] sm:$0xff] %v1550
    %1555 = vst [vmem:[#allocation5 + $0x18] sm:$0xff] %v1551
    // Predicated region
    $region54: #{encoder_layer_forward.5} parent=1 // pred_check
      _
    $region55: #{encoder_layer_forward.5} parent=1 // pred_check_branch
      %1557 = sbr.rel (0) target = $region57
    $region56: #{encoder_layer_forward.5} parent=1 // pred_region
      %s1559 = ssub.s32 512, 512
      %1560 = vsyncadd [#allocation4], %s1559
      %s1561 = sshll.u32 [#allocation5], 4
      %s1562 = int_to_ptr.vmem [resolvable:$true] %s1561
      %1567 = dma.vmem_to_hbm [thread:$0]  %s1562, 512, %s12, [#allocation4], 256, 256, 16
    $region57: #{encoder_layer_forward.5} parent=1 // pred_fallthru
      _
    // Predicated region
    $region58: #{encoder_layer_forward.5} parent=1 // pred_check
      _
    $region59: #{encoder_layer_forward.5} parent=1 // pred_check_branch
      %1569 = sbr.rel (0) target = $region61
    $region60: #{encoder_layer_forward.5} parent=1 // pred_region
      %1570 = dma.done [#allocation4], 512
    $region61: #{encoder_layer_forward.5} parent=1 // pred_fallthru
      _
    %1571 = vsyncpa [#allocation3], 1
    %1572 = vsyncpa [#allocation4], 1

</llo_original>
